<compile_context>
chip_gen: v5e
topology: v5e:2x2
jax: 0.10.0
libtpu: 0.0.40
codegen_flags: <defaults>
</compile_context>

<pallas_src>
import functools

import jax
import jax.numpy as jnp
from jax.experimental import pallas as pl
from jax.experimental.pallas import tpu as pltpu

# ---- static module hyper-parameters ----
DIM = 32
NUM_HEADS = 4
HEAD_DIM = DIM // NUM_HEADS
HIDDEN_DIM_MULTIPLIER = 2
HIDDEN_DIM = DIM * HIDDEN_DIM_MULTIPLIER          # FFN hidden
FFN_IN_DIM = 2 * DIM                              # input_dim_multiplier = 2
N_NODES = 32
B_GRAPHS = 16                                     # total graphs in the example batch
GRAPHS_PER_STEP = 8                               # graphs stacked per grid step (256 rows)
NEG_SLOPE = 0.2
LN_EPS = 1e-5
MASK_VAL = -1e9                                   # additive non-edge mask
FUSED_PAD = 128                                   # lane-dense fused first-matmul width


def _res_gat_sep_kernel(n_graphs, n_nodes,
                        x_ref, adjm_ref,
                        wfirst_ref, w1b_ref, w2_ref, vec_ref,
                        eh_ref, es_ref, gr_ref, gb_ref, dselr_ref, hmask_ref,
                        out_ref):
    f32 = jnp.float32
    n = n_nodes
    h = NUM_HEADS
    d = DIM
    hid = HIDDEN_DIM

    x = x_ref[...]                                   # (R, D), R = n_graphs * n
    vec = vec_ref[...]                               # (8, 128) packed LN/bias slab
    ln_g = vec[0:1, 0:d]
    ln_b = vec[1:2, 0:d]
    b_first = vec[2:3, :]                            # (1, 128) fused first-layer bias
    b2 = vec[3:4, 0:d]

    # ---------------- LayerNorm (ResidualModuleWrapper.normalization) ----------------
    mu = jnp.mean(x, axis=1, keepdims=True)
    xc = x - mu
    var = jnp.mean(xc * xc, axis=1, keepdims=True)
    x_norm = xc * jax.lax.rsqrt(var + LN_EPS) * ln_g + ln_b

    # ------- fused first matmul: [x1 | x1@w1a + b1 | su + bu | sv] in one MXU pass -----
    big = jnp.dot(x_norm, wfirst_ref[...], preferred_element_type=f32) + b_first
    x1 = big[:, 0:d]                                 # input_linear output
    h1x = big[:, d:d + hid]                          # x1 @ w1[:D] + b1 (FFN first half)
    su = big[:, d + hid:d + hid + h]                 # (R, H) src attention scores
    sv = big[:, d + hid + h:d + hid + 2 * h]         # (R, H) dst attention scores

    # ------- stacked edge scores: graphs on sublanes, heads on lanes s[r, h*N+u] -------
    eh = eh_ref[...]                                              # (H, H*N)
    dselr = dselr_ref[...]                                        # (R, H*N)
    sv_b = jnp.dot(sv, eh, preferred_element_type=f32)            # sv[r, l//N]
    su_w = jnp.dot(su, eh, preferred_element_type=f32)            # su[r, l//N]
    # su_bcast[b*N+v, h*N+u] = su[b*N+u, h] via two tiny selector matmuls (MXU slot)
    sflat = jnp.dot(gr_ref[...], su_w * dselr, preferred_element_type=f32)   # (Bb, H*N)
    su_b = jnp.dot(gb_ref[...], sflat, preferred_element_type=f32)           # (R, H*N)

    s = sv_b + su_b                                               # DGL u_add_v
    s = jnp.where(s >= 0.0, s, NEG_SLOPE * s)                     # LeakyReLU(0.2)
    s = s + adjm_ref[...]                                         # additive -1e9 edge mask
    s_max = jnp.max(s, axis=1, keepdims=True)                     # softmax-invariant shift
    e = jnp.exp(s - s_max)                                        # non-edges underflow to 0
    denom = jnp.maximum(jnp.dot(e, es_ref[...], preferred_element_type=f32), 1e-30)
    r_b = jnp.dot(pl.reciprocal(denom, approx=True), eh, preferred_element_type=f32)
    p = e * r_b                                                   # edge_softmax, all heads

    # ------- per-graph message matmuls (block-diagonal source structure) ---------------
    dsel_t = dselr[0:h * n, 0:n]                                  # (H*N, N) row-tile selector
    hmask = hmask_ref[...]                                        # (H*N, D) head/channel mask
    msgs = []
    for b in range(n_graphs):
        r0 = b * n
        x1_b = x1[r0:r0 + n, :]                                   # (N, D)
        xstack = jnp.dot(dsel_t, x1_b, preferred_element_type=f32) * hmask    # (H*N, D)
        msgs.append(jnp.dot(p[r0:r0 + n, :], xstack, preferred_element_type=f32))
    message = jnp.concatenate(msgs, axis=0)                       # (R, D)

    # ------- feed-forward (concat -> split-weight accumulation) + residual -------------
    h1 = h1x + jnp.dot(message, w1b_ref[...], preferred_element_type=f32)
    h1 = jax.nn.gelu(h1, approximate=True)                        # tanh GELU -> EUP
    ffn = jnp.dot(h1, w2_ref[...], preferred_element_type=f32) + b2
    out_ref[...] = x + ffn


def residual_gat_sep_forward(x, adj, params, graphs_per_step=GRAPHS_PER_STEP):
    """x: (B, N, D), adj: (B, N, N) dense adjacency with adj[b, dst, src]."""
    b_total, n, d = x.shape
    h = NUM_HEADS
    hid = HIDDEN_DIM
    f32 = jnp.float32
    assert b_total % graphs_per_step == 0
    bb = graphs_per_step
    steps = b_total // bb
    rows = bb * n
    wide = h * n

    # ---- host-side weight folding (removes dependent MXU round trips) ----
    w_in, b_in = params["w_in"], params["b_in"]
    wu, bu, wv = params["wu"], params["bu"], params["wv"]
    w1, b1 = params["w1"], params["b1"]
    w2, b2 = params["w2"], params["b2"]
    w1a, w1b = w1[:d], w1[d:]

    w_suv = jnp.concatenate([w_in @ wu, w_in @ wv], axis=1)               # (D, 2H)
    b_suv = jnp.concatenate([b_in @ wu + bu, b_in @ wv], axis=1)          # (1, 2H)
    w1a_f = w_in @ w1a                                                    # (D, HID)
    b1_f = b_in @ w1a + b1                                                # (1, HID)

    pad = FUSED_PAD - (d + hid + 2 * h)
    w_first = jnp.concatenate([w_in, w1a_f, w_suv,
                               jnp.zeros((d, pad), f32)], axis=1)         # (D, 128)
    b_first = jnp.concatenate([b_in, b1_f, b_suv,
                               jnp.zeros((1, pad), f32)], axis=1)         # (1, 128)

    def row128(v):
        return jnp.concatenate([v, jnp.zeros((1, FUSED_PAD - v.shape[1]), f32)], axis=1)
    vec_slab = jnp.concatenate(
        [row128(params["ln_g"]), row128(params["ln_b"]), b_first, row128(b2),
         jnp.zeros((4, FUSED_PAD), f32)], axis=0)                         # (8, 128)

    # ---- iota-built selector constants (hoisted out of the kernel body) ----
    lane = jnp.arange(wide)
    eh = (jnp.arange(h)[:, None] == lane[None, :] // n).astype(f32)       # (H, H*N)
    es = eh.T                                                             # (H*N, H)
    gr = (jnp.arange(bb)[:, None] == jnp.arange(rows)[None, :] // n).astype(f32)  # (Bb, R)
    gb = gr.T                                                             # (R, Bb)
    dselr = ((jnp.arange(rows)[:, None] % n) == (lane[None, :] % n)).astype(f32)  # (R, H*N)
    hmask = ((lane[:, None] // n) == (jnp.arange(d)[None, :] % h)).astype(f32)    # (H*N, D)

    # ---- data: stack graphs along rows; pre-tile the additive edge mask per head ----
    x_steps = x.reshape(steps, rows, d)
    adj_add = jnp.where(adj > 0.0, 0.0, MASK_VAL).astype(f32)             # (B, N, N)
    adjm_steps = jnp.tile(adj_add, (1, 1, h)).reshape(steps, rows, wide)  # (S, R, H*N)

    kernel = functools.partial(_res_gat_sep_kernel, bb, n)

    def const2d(a):
        return pl.BlockSpec(a.shape, lambda i: (0, 0))

    out = pl.pallas_call(
        kernel,
        out_shape=jax.ShapeDtypeStruct((steps, rows, d), f32),
        grid=(steps,),
        in_specs=[pl.BlockSpec((None, rows, d), lambda i: (i, 0, 0)),
                  pl.BlockSpec((None, rows, wide), lambda i: (i, 0, 0)),
                  const2d(w_first), const2d(w1b), const2d(w2), const2d(vec_slab),
                  const2d(eh), const2d(es), const2d(gr), const2d(gb),
                  const2d(dselr), const2d(hmask)],
        out_specs=pl.BlockSpec((None, rows, d), lambda i: (i, 0, 0)),
        compiler_params=pltpu.CompilerParams(dimension_semantics=("parallel",)),
    )(x_steps, adjm_steps, w_first, w1b, w2, vec_slab, eh, es, gr, gb, dselr, hmask)
    return out.reshape(b_total, n, d)


# ------------------------ pure-JAX reference (unchanged math) ------------------------
def residual_gat_sep_reference(x, adj, params):
    def one(xb, ab):
        n, d = xb.shape
        mu = jnp.mean(xb, axis=1, keepdims=True)
        var = jnp.mean((xb - mu) ** 2, axis=1, keepdims=True)
        xn = (xb - mu) / jnp.sqrt(var + LN_EPS) * params["ln_g"] + params["ln_b"]
        x1 = xn @ params["w_in"] + params["b_in"]
        su = x1 @ params["wu"] + params["bu"]
        sv = x1 @ params["wv"]
        x3 = x1.reshape(n, HEAD_DIM, NUM_HEADS)
        edge_mask = ab > 0.0
        msg3 = jnp.zeros((n, HEAD_DIM, NUM_HEADS), jnp.float32)
        for hh in range(NUM_HEADS):
            s = sv[:, hh][:, None] + su[:, hh][None, :]
            s = jnp.where(s >= 0.0, s, NEG_SLOPE * s)
            s = jnp.where(edge_mask, s, -1e30)
            s = s - jnp.max(s, axis=1, keepdims=True)
            e = jnp.where(edge_mask, jnp.exp(s), 0.0)
            p = e / jnp.sum(e, axis=1, keepdims=True)
            msg3 = msg3.at[:, :, hh].set(p @ x3[:, :, hh])
        message = msg3.reshape(n, d)
        cat = jnp.concatenate([x1, message], axis=1)
        h1 = jax.nn.gelu(cat @ params["w1"] + params["b1"], approximate=False)
        ffn = h1 @ params["w2"] + params["b2"]
        return xb + ffn

    return jnp.stack([one(x[i], adj[i]) for i in range(x.shape[0])])


# ------------------------ deterministic setup ------------------------
def make_params(key):
    ks = jax.random.split(key, 16)
    s = 0.1
    return {
        "ln_g": 1.0 + s * jax.random.normal(ks[9], (1, DIM), jnp.float32),
        "ln_b": s * jax.random.normal(ks[10], (1, DIM), jnp.float32),
        "w_in": s * jax.random.normal(ks[0], (DIM, DIM), jnp.float32),
        "b_in": s * jax.random.normal(ks[1], (1, DIM), jnp.float32),
        "wu":   s * jax.random.normal(ks[2], (DIM, NUM_HEADS), jnp.float32),
        "bu":   s * jax.random.normal(ks[3], (1, NUM_HEADS), jnp.float32),
        "wv":   s * jax.random.normal(ks[4], (DIM, NUM_HEADS), jnp.float32),
        "w1":   s * jax.random.normal(ks[5], (FFN_IN_DIM, HIDDEN_DIM), jnp.float32),
        "b1":   s * jax.random.normal(ks[6], (1, HIDDEN_DIM), jnp.float32),
        "w2":   s * jax.random.normal(ks[7], (HIDDEN_DIM, DIM), jnp.float32),
        "b2":   s * jax.random.normal(ks[8], (1, DIM), jnp.float32),
    }


if __name__ == "__main__":
    key = jax.random.PRNGKey(0)
    k_x, k_adj, k_p = jax.random.split(key, 3)

    x = jax.random.normal(k_x, (B_GRAPHS, N_NODES, DIM), jnp.float32)
    adj = jax.random.bernoulli(k_adj, 0.3, (B_GRAPHS, N_NODES, N_NODES)).astype(jnp.float32)
    adj = jnp.maximum(adj, jnp.eye(N_NODES, dtype=jnp.float32)[None])   # self-loops
    params = make_params(k_p)

    out = jax.block_until_ready(residual_gat_sep_forward(x, adj, params))
    ref = residual_gat_sep_reference(x, adj, params)

    assert out.shape == (B_GRAPHS, N_NODES, DIM)
    assert jnp.allclose(out, ref, rtol=2e-2, atol=2e-2), "mismatch vs reference"

    print("KERNEL_OK")
</pallas_src>

<mosaic_0001>
module attributes {stable_mosaic.version = 11 : i64} {
  func.func @_res_gat_sep_kernel(%arg0: i32, %arg1: memref<1x256x32xf32, #tpu.memory_space<vmem>>, %arg2: memref<1x256x128xf32, #tpu.memory_space<vmem>>, %arg3: memref<32x128xf32, #tpu.memory_space<vmem>>, %arg4: memref<32x64xf32, #tpu.memory_space<vmem>>, %arg5: memref<64x32xf32, #tpu.memory_space<vmem>>, %arg6: memref<8x128xf32, #tpu.memory_space<vmem>>, %arg7: memref<4x128xf32, #tpu.memory_space<vmem>>, %arg8: memref<128x4xf32, #tpu.memory_space<vmem>>, %arg9: memref<8x256xf32, #tpu.memory_space<vmem>>, %arg10: memref<256x8xf32, #tpu.memory_space<vmem>>, %arg11: memref<256x128xf32, #tpu.memory_space<vmem>>, %arg12: memref<128x32xf32, #tpu.memory_space<vmem>>, %arg13: memref<1x256x32xf32, #tpu.memory_space<vmem>>) attributes {dimension_semantics = [#tpu.dimension_semantics<parallel>], iteration_bounds = array<i64: 2>, scalar_prefetch = 0 : i64, scratch_operands = 0 : i64, tpu.core_type = #tpu.core_type<tc>, window_params = [{transform_indices = @transform_0, window_bounds = array<i64: 1, 256, 32>}, {transform_indices = @transform_1, window_bounds = array<i64: 1, 256, 128>}, {pipeline_mode = #tpu.pipeline_mode<synchronous>, transform_indices = @transform_2, window_bounds = array<i64: 32, 128>}, {pipeline_mode = #tpu.pipeline_mode<synchronous>, transform_indices = @transform_3, window_bounds = array<i64: 32, 64>}, {pipeline_mode = #tpu.pipeline_mode<synchronous>, transform_indices = @transform_4, window_bounds = array<i64: 64, 32>}, {pipeline_mode = #tpu.pipeline_mode<synchronous>, transform_indices = @transform_5, window_bounds = array<i64: 8, 128>}, {pipeline_mode = #tpu.pipeline_mode<synchronous>, transform_indices = @transform_6, window_bounds = array<i64: 4, 128>}, {pipeline_mode = #tpu.pipeline_mode<synchronous>, transform_indices = @transform_7, window_bounds = array<i64: 128, 4>}, {pipeline_mode = #tpu.pipeline_mode<synchronous>, transform_indices = @transform_8, window_bounds = array<i64: 8, 256>}, {pipeline_mode = #tpu.pipeline_mode<synchronous>, transform_indices = @transform_9, window_bounds = array<i64: 256, 8>}, {pipeline_mode = #tpu.pipeline_mode<synchronous>, transform_indices = @transform_10, window_bounds = array<i64: 256, 128>}, {pipeline_mode = #tpu.pipeline_mode<synchronous>, transform_indices = @transform_11, window_bounds = array<i64: 128, 32>}, {transform_indices = @transform_12, window_bounds = array<i64: 1, 256, 32>}]} {
    %c0 = arith.constant 0 : index
    %c0_0 = arith.constant 0 : index
    %c0_1 = arith.constant 0 : index
    %0 = vector.load %arg1[%c0, %c0_0, %c0_1] : memref<1x256x32xf32, #tpu.memory_space<vmem>>, vector<1x256x32xf32>
    %1 = vector.shape_cast %0 : vector<1x256x32xf32> to vector<256x32xf32>
    %c0_2 = arith.constant 0 : index
    %c0_3 = arith.constant 0 : index
    %2 = vector.load %arg6[%c0_2, %c0_3] : memref<8x128xf32, #tpu.memory_space<vmem>>, vector<8x128xf32>
    %3 = vector.extract_strided_slice %2 {offsets = [0, 0], sizes = [1, 32], strides = [1, 1]} : vector<8x128xf32> to vector<1x32xf32>
    %4 = vector.extract_strided_slice %2 {offsets = [1, 0], sizes = [1, 32], strides = [1, 1]} : vector<8x128xf32> to vector<1x32xf32>
    %5 = vector.extract_strided_slice %2 {offsets = [2, 0], sizes = [1, 128], strides = [1, 1]} : vector<8x128xf32> to vector<1x128xf32>
    %6 = vector.extract_strided_slice %2 {offsets = [3, 0], sizes = [1, 32], strides = [1, 1]} : vector<8x128xf32> to vector<1x32xf32>
    %cst = arith.constant dense<0.000000e+00> : vector<256xf32>
    %7 = vector.multi_reduction <add>, %1, %cst [1] : vector<256x32xf32> to vector<256xf32>
    %8 = vector.shape_cast %7 : vector<256xf32> to vector<256x1xf32>
    %cst_4 = arith.constant 3.200000e+01 : f32
    %9 = vector.broadcast %cst_4 : f32 to vector<256x1xf32>
    %10 = arith.divf %8, %9 : vector<256x1xf32>
    %11 = vector.broadcast %10 : vector<256x1xf32> to vector<256x32xf32>
    %12 = arith.subf %1, %11 : vector<256x32xf32>
    %13 = arith.mulf %12, %12 : vector<256x32xf32>
    %cst_5 = arith.constant dense<0.000000e+00> : vector<256xf32>
    %14 = vector.multi_reduction <add>, %13, %cst_5 [1] : vector<256x32xf32> to vector<256xf32>
    %15 = vector.shape_cast %14 : vector<256xf32> to vector<256x1xf32>
    %cst_6 = arith.constant 3.200000e+01 : f32
    %16 = vector.broadcast %cst_6 : f32 to vector<256x1xf32>
    %17 = arith.divf %15, %16 : vector<256x1xf32>
    %cst_7 = arith.constant 9.99999974E-6 : f32
    %18 = vector.broadcast %cst_7 : f32 to vector<256x1xf32>
    %19 = arith.addf %17, %18 : vector<256x1xf32>
    %20 = math.rsqrt %19 : vector<256x1xf32>
    %21 = vector.broadcast %20 : vector<256x1xf32> to vector<256x32xf32>
    %22 = arith.mulf %12, %21 : vector<256x32xf32>
    %23 = vector.broadcast %3 : vector<1x32xf32> to vector<256x32xf32>
    %24 = arith.mulf %22, %23 : vector<256x32xf32>
    %25 = vector.broadcast %4 : vector<1x32xf32> to vector<256x32xf32>
    %26 = arith.addf %24, %25 : vector<256x32xf32>
    %c0_8 = arith.constant 0 : index
    %c0_9 = arith.constant 0 : index
    %27 = vector.load %arg3[%c0_8, %c0_9] : memref<32x128xf32, #tpu.memory_space<vmem>>, vector<32x128xf32>
    %cst_10 = arith.constant dense<0.000000e+00> : vector<256x128xf32>
    %28 = tpu.matmul %26, %27, %cst_10 {dimension_numbers = #tpu.dot_dimension_numbers<[1], [0], [0], [1], [0, 0, 1, 1], [], []>} : vector<256x32xf32>, vector<32x128xf32>, vector<256x128xf32> -> vector<256x128xf32>
    %29 = vector.broadcast %5 : vector<1x128xf32> to vector<256x128xf32>
    %30 = arith.addf %28, %29 : vector<256x128xf32>
    %31 = vector.extract_strided_slice %30 {offsets = [0, 0], sizes = [256, 32], strides = [1, 1]} : vector<256x128xf32> to vector<256x32xf32>
    %32 = vector.extract_strided_slice %30 {offsets = [0, 32], sizes = [256, 64], strides = [1, 1]} : vector<256x128xf32> to vector<256x64xf32>
    %33 = vector.extract_strided_slice %30 {offsets = [0, 96], sizes = [256, 4], strides = [1, 1]} : vector<256x128xf32> to vector<256x4xf32>
    %34 = vector.extract_strided_slice %30 {offsets = [0, 100], sizes = [256, 4], strides = [1, 1]} : vector<256x128xf32> to vector<256x4xf32>
    %c0_11 = arith.constant 0 : index
    %c0_12 = arith.constant 0 : index
    %35 = vector.load %arg7[%c0_11, %c0_12] : memref<4x128xf32, #tpu.memory_space<vmem>>, vector<4x128xf32>
    %c0_13 = arith.constant 0 : index
    %c0_14 = arith.constant 0 : index
    %36 = vector.load %arg11[%c0_13, %c0_14] : memref<256x128xf32, #tpu.memory_space<vmem>>, vector<256x128xf32>
    %cst_15 = arith.constant dense<0.000000e+00> : vector<256x128xf32>
    %37 = tpu.matmul %34, %35, %cst_15 {dimension_numbers = #tpu.dot_dimension_numbers<[1], [0], [0], [1], [0, 0, 1, 1], [], []>} : vector<256x4xf32>, vector<4x128xf32>, vector<256x128xf32> -> vector<256x128xf32>
    %cst_16 = arith.constant dense<0.000000e+00> : vector<256x128xf32>
    %38 = tpu.matmul %33, %35, %cst_16 {dimension_numbers = #tpu.dot_dimension_numbers<[1], [0], [0], [1], [0, 0, 1, 1], [], []>} : vector<256x4xf32>, vector<4x128xf32>, vector<256x128xf32> -> vector<256x128xf32>
    %c0_17 = arith.constant 0 : index
    %c0_18 = arith.constant 0 : index
    %39 = vector.load %arg9[%c0_17, %c0_18] : memref<8x256xf32, #tpu.memory_space<vmem>>, vector<8x256xf32>
    %40 = arith.mulf %38, %36 : vector<256x128xf32>
    %cst_19 = arith.constant dense<0.000000e+00> : vector<8x128xf32>
    %41 = tpu.matmul %39, %40, %cst_19 {dimension_numbers = #tpu.dot_dimension_numbers<[1], [0], [0], [1], [0, 0, 1, 1], [], []>} : vector<8x256xf32>, vector<256x128xf32>, vector<8x128xf32> -> vector<8x128xf32>
    %c0_20 = arith.constant 0 : index
    %c0_21 = arith.constant 0 : index
    %42 = vector.load %arg10[%c0_20, %c0_21] : memref<256x8xf32, #tpu.memory_space<vmem>>, vector<256x8xf32>
    %cst_22 = arith.constant dense<0.000000e+00> : vector<256x128xf32>
    %43 = tpu.matmul %42, %41, %cst_22 {dimension_numbers = #tpu.dot_dimension_numbers<[1], [0], [0], [1], [0, 0, 1, 1], [], []>} : vector<256x8xf32>, vector<8x128xf32>, vector<256x128xf32> -> vector<256x128xf32>
    %44 = arith.addf %37, %43 : vector<256x128xf32>
    %cst_23 = arith.constant 0.000000e+00 : f32
    %45 = vector.broadcast %cst_23 : f32 to vector<256x128xf32>
    %46 = arith.cmpf oge, %44, %45 : vector<256x128xf32>
    %cst_24 = arith.constant 2.000000e-01 : f32
    %47 = vector.broadcast %cst_24 : f32 to vector<256x128xf32>
    %48 = arith.mulf %47, %44 : vector<256x128xf32>
    %49 = arith.select %46, %44, %48 : vector<256x128xi1>, vector<256x128xf32>
    %c0_25 = arith.constant 0 : index
    %c0_26 = arith.constant 0 : index
    %c0_27 = arith.constant 0 : index
    %50 = vector.load %arg2[%c0_25, %c0_26, %c0_27] : memref<1x256x128xf32, #tpu.memory_space<vmem>>, vector<1x256x128xf32>
    %51 = vector.shape_cast %50 : vector<1x256x128xf32> to vector<256x128xf32>
    %52 = arith.addf %49, %51 : vector<256x128xf32>
    %cst_28 = arith.constant dense<0xFF800000> : vector<256xf32>
    %53 = vector.multi_reduction <maximumf>, %52, %cst_28 [1] : vector<256x128xf32> to vector<256xf32>
    %54 = vector.shape_cast %53 : vector<256xf32> to vector<256x1xf32>
    %55 = vector.broadcast %54 : vector<256x1xf32> to vector<256x128xf32>
    %56 = arith.subf %52, %55 : vector<256x128xf32>
    %57 = math.exp %56 : vector<256x128xf32>
    %c0_29 = arith.constant 0 : index
    %c0_30 = arith.constant 0 : index
    %58 = vector.load %arg8[%c0_29, %c0_30] : memref<128x4xf32, #tpu.memory_space<vmem>>, vector<128x4xf32>
    %cst_31 = arith.constant dense<0.000000e+00> : vector<256x4xf32>
    %59 = tpu.matmul %57, %58, %cst_31 {dimension_numbers = #tpu.dot_dimension_numbers<[1], [0], [0], [1], [0, 0, 1, 1], [], []>} : vector<256x128xf32>, vector<128x4xf32>, vector<256x4xf32> -> vector<256x4xf32>
    %cst_32 = arith.constant 1.000000e-30 : f32
    %60 = vector.broadcast %cst_32 : f32 to vector<256x4xf32>
    %61 = arith.maximumf %59, %60 : vector<256x4xf32>
    %62 = tpu.reciprocal %61 {approx = true} : vector<256x4xf32> -> vector<256x4xf32>
    %cst_33 = arith.constant dense<0.000000e+00> : vector<256x128xf32>
    %63 = tpu.matmul %62, %35, %cst_33 {dimension_numbers = #tpu.dot_dimension_numbers<[1], [0], [0], [1], [0, 0, 1, 1], [], []>} : vector<256x4xf32>, vector<4x128xf32>, vector<256x128xf32> -> vector<256x128xf32>
    %64 = arith.mulf %57, %63 : vector<256x128xf32>
    %65 = vector.extract_strided_slice %36 {offsets = [0, 0], sizes = [128, 32], strides = [1, 1]} : vector<256x128xf32> to vector<128x32xf32>
    %c0_34 = arith.constant 0 : index
    %c0_35 = arith.constant 0 : index
    %66 = vector.load %arg12[%c0_34, %c0_35] : memref<128x32xf32, #tpu.memory_space<vmem>>, vector<128x32xf32>
    %67 = vector.extract_strided_slice %31 {offsets = [0, 0], sizes = [32, 32], strides = [1, 1]} : vector<256x32xf32> to vector<32x32xf32>
    %cst_36 = arith.constant dense<0.000000e+00> : vector<128x32xf32>
    %68 = tpu.matmul %65, %67, %cst_36 {dimension_numbers = #tpu.dot_dimension_numbers<[1], [0], [0], [1], [0, 0, 1, 1], [], []>} : vector<128x32xf32>, vector<32x32xf32>, vector<128x32xf32> -> vector<128x32xf32>
    %69 = arith.mulf %68, %66 : vector<128x32xf32>
    %70 = vector.extract_strided_slice %64 {offsets = [0, 0], sizes = [32, 128], strides = [1, 1]} : vector<256x128xf32> to vector<32x128xf32>
    %cst_37 = arith.constant dense<0.000000e+00> : vector<32x32xf32>
    %71 = tpu.matmul %70, %69, %cst_37 {dimension_numbers = #tpu.dot_dimension_numbers<[1], [0], [0], [1], [0, 0, 1, 1], [], []>} : vector<32x128xf32>, vector<128x32xf32>, vector<32x32xf32> -> vector<32x32xf32>
    %72 = vector.extract_strided_slice %31 {offsets = [32, 0], sizes = [32, 32], strides = [1, 1]} : vector<256x32xf32> to vector<32x32xf32>
    %cst_38 = arith.constant dense<0.000000e+00> : vector<128x32xf32>
    %73 = tpu.matmul %65, %72, %cst_38 {dimension_numbers = #tpu.dot_dimension_numbers<[1], [0], [0], [1], [0, 0, 1, 1], [], []>} : vector<128x32xf32>, vector<32x32xf32>, vector<128x32xf32> -> vector<128x32xf32>
    %74 = arith.mulf %73, %66 : vector<128x32xf32>
    %75 = vector.extract_strided_slice %64 {offsets = [32, 0], sizes = [32, 128], strides = [1, 1]} : vector<256x128xf32> to vector<32x128xf32>
    %cst_39 = arith.constant dense<0.000000e+00> : vector<32x32xf32>
    %76 = tpu.matmul %75, %74, %cst_39 {dimension_numbers = #tpu.dot_dimension_numbers<[1], [0], [0], [1], [0, 0, 1, 1], [], []>} : vector<32x128xf32>, vector<128x32xf32>, vector<32x32xf32> -> vector<32x32xf32>
    %77 = vector.extract_strided_slice %31 {offsets = [64, 0], sizes = [32, 32], strides = [1, 1]} : vector<256x32xf32> to vector<32x32xf32>
    %cst_40 = arith.constant dense<0.000000e+00> : vector<128x32xf32>
    %78 = tpu.matmul %65, %77, %cst_40 {dimension_numbers = #tpu.dot_dimension_numbers<[1], [0], [0], [1], [0, 0, 1, 1], [], []>} : vector<128x32xf32>, vector<32x32xf32>, vector<128x32xf32> -> vector<128x32xf32>
    %79 = arith.mulf %78, %66 : vector<128x32xf32>
    %80 = vector.extract_strided_slice %64 {offsets = [64, 0], sizes = [32, 128], strides = [1, 1]} : vector<256x128xf32> to vector<32x128xf32>
    %cst_41 = arith.constant dense<0.000000e+00> : vector<32x32xf32>
    %81 = tpu.matmul %80, %79, %cst_41 {dimension_numbers = #tpu.dot_dimension_numbers<[1], [0], [0], [1], [0, 0, 1, 1], [], []>} : vector<32x128xf32>, vector<128x32xf32>, vector<32x32xf32> -> vector<32x32xf32>
    %82 = vector.extract_strided_slice %31 {offsets = [96, 0], sizes = [32, 32], strides = [1, 1]} : vector<256x32xf32> to vector<32x32xf32>
    %cst_42 = arith.constant dense<0.000000e+00> : vector<128x32xf32>
    %83 = tpu.matmul %65, %82, %cst_42 {dimension_numbers = #tpu.dot_dimension_numbers<[1], [0], [0], [1], [0, 0, 1, 1], [], []>} : vector<128x32xf32>, vector<32x32xf32>, vector<128x32xf32> -> vector<128x32xf32>
    %84 = arith.mulf %83, %66 : vector<128x32xf32>
    %85 = vector.extract_strided_slice %64 {offsets = [96, 0], sizes = [32, 128], strides = [1, 1]} : vector<256x128xf32> to vector<32x128xf32>
    %cst_43 = arith.constant dense<0.000000e+00> : vector<32x32xf32>
    %86 = tpu.matmul %85, %84, %cst_43 {dimension_numbers = #tpu.dot_dimension_numbers<[1], [0], [0], [1], [0, 0, 1, 1], [], []>} : vector<32x128xf32>, vector<128x32xf32>, vector<32x32xf32> -> vector<32x32xf32>
    %87 = vector.extract_strided_slice %31 {offsets = [128, 0], sizes = [32, 32], strides = [1, 1]} : vector<256x32xf32> to vector<32x32xf32>
    %cst_44 = arith.constant dense<0.000000e+00> : vector<128x32xf32>
    %88 = tpu.matmul %65, %87, %cst_44 {dimension_numbers = #tpu.dot_dimension_numbers<[1], [0], [0], [1], [0, 0, 1, 1], [], []>} : vector<128x32xf32>, vector<32x32xf32>, vector<128x32xf32> -> vector<128x32xf32>
    %89 = arith.mulf %88, %66 : vector<128x32xf32>
    %90 = vector.extract_strided_slice %64 {offsets = [128, 0], sizes = [32, 128], strides = [1, 1]} : vector<256x128xf32> to vector<32x128xf32>
    %cst_45 = arith.constant dense<0.000000e+00> : vector<32x32xf32>
    %91 = tpu.matmul %90, %89, %cst_45 {dimension_numbers = #tpu.dot_dimension_numbers<[1], [0], [0], [1], [0, 0, 1, 1], [], []>} : vector<32x128xf32>, vector<128x32xf32>, vector<32x32xf32> -> vector<32x32xf32>
    %92 = vector.extract_strided_slice %31 {offsets = [160, 0], sizes = [32, 32], strides = [1, 1]} : vector<256x32xf32> to vector<32x32xf32>
    %cst_46 = arith.constant dense<0.000000e+00> : vector<128x32xf32>
    %93 = tpu.matmul %65, %92, %cst_46 {dimension_numbers = #tpu.dot_dimension_numbers<[1], [0], [0], [1], [0, 0, 1, 1], [], []>} : vector<128x32xf32>, vector<32x32xf32>, vector<128x32xf32> -> vector<128x32xf32>
    %94 = arith.mulf %93, %66 : vector<128x32xf32>
    %95 = vector.extract_strided_slice %64 {offsets = [160, 0], sizes = [32, 128], strides = [1, 1]} : vector<256x128xf32> to vector<32x128xf32>
    %cst_47 = arith.constant dense<0.000000e+00> : vector<32x32xf32>
    %96 = tpu.matmul %95, %94, %cst_47 {dimension_numbers = #tpu.dot_dimension_numbers<[1], [0], [0], [1], [0, 0, 1, 1], [], []>} : vector<32x128xf32>, vector<128x32xf32>, vector<32x32xf32> -> vector<32x32xf32>
    %97 = vector.extract_strided_slice %31 {offsets = [192, 0], sizes = [32, 32], strides = [1, 1]} : vector<256x32xf32> to vector<32x32xf32>
    %cst_48 = arith.constant dense<0.000000e+00> : vector<128x32xf32>
    %98 = tpu.matmul %65, %97, %cst_48 {dimension_numbers = #tpu.dot_dimension_numbers<[1], [0], [0], [1], [0, 0, 1, 1], [], []>} : vector<128x32xf32>, vector<32x32xf32>, vector<128x32xf32> -> vector<128x32xf32>
    %99 = arith.mulf %98, %66 : vector<128x32xf32>
    %100 = vector.extract_strided_slice %64 {offsets = [192, 0], sizes = [32, 128], strides = [1, 1]} : vector<256x128xf32> to vector<32x128xf32>
    %cst_49 = arith.constant dense<0.000000e+00> : vector<32x32xf32>
    %101 = tpu.matmul %100, %99, %cst_49 {dimension_numbers = #tpu.dot_dimension_numbers<[1], [0], [0], [1], [0, 0, 1, 1], [], []>} : vector<32x128xf32>, vector<128x32xf32>, vector<32x32xf32> -> vector<32x32xf32>
    %102 = vector.extract_strided_slice %31 {offsets = [224, 0], sizes = [32, 32], strides = [1, 1]} : vector<256x32xf32> to vector<32x32xf32>
    %cst_50 = arith.constant dense<0.000000e+00> : vector<128x32xf32>
    %103 = tpu.matmul %65, %102, %cst_50 {dimension_numbers = #tpu.dot_dimension_numbers<[1], [0], [0], [1], [0, 0, 1, 1], [], []>} : vector<128x32xf32>, vector<32x32xf32>, vector<128x32xf32> -> vector<128x32xf32>
    %104 = arith.mulf %103, %66 : vector<128x32xf32>
    %105 = vector.extract_strided_slice %64 {offsets = [224, 0], sizes = [32, 128], strides = [1, 1]} : vector<256x128xf32> to vector<32x128xf32>
    %cst_51 = arith.constant dense<0.000000e+00> : vector<32x32xf32>
    %106 = tpu.matmul %105, %104, %cst_51 {dimension_numbers = #tpu.dot_dimension_numbers<[1], [0], [0], [1], [0, 0, 1, 1], [], []>} : vector<32x128xf32>, vector<128x32xf32>, vector<32x32xf32> -> vector<32x32xf32>
    %107 = tpu.concatenate %71, %76, %81, %86, %91, %96, %101, %106 in 0 : vector<32x32xf32>, vector<32x32xf32>, vector<32x32xf32>, vector<32x32xf32>, vector<32x32xf32>, vector<32x32xf32>, vector<32x32xf32>, vector<32x32xf32> -> vector<256x32xf32>
    %c0_52 = arith.constant 0 : index
    %c0_53 = arith.constant 0 : index
    %108 = vector.load %arg4[%c0_52, %c0_53] : memref<32x64xf32, #tpu.memory_space<vmem>>, vector<32x64xf32>
    %cst_54 = arith.constant dense<0.000000e+00> : vector<256x64xf32>
    %109 = tpu.matmul %107, %108, %cst_54 {dimension_numbers = #tpu.dot_dimension_numbers<[1], [0], [0], [1], [0, 0, 1, 1], [], []>} : vector<256x32xf32>, vector<32x64xf32>, vector<256x64xf32> -> vector<256x64xf32>
    %110 = arith.addf %32, %109 : vector<256x64xf32>
    %111 = arith.mulf %110, %110 : vector<256x64xf32>
    %112 = arith.mulf %110, %111 : vector<256x64xf32>
    %cst_55 = arith.constant 4.471500e-02 : f32
    %113 = vector.broadcast %cst_55 : f32 to vector<256x64xf32>
    %114 = arith.mulf %113, %112 : vector<256x64xf32>
    %115 = arith.addf %110, %114 : vector<256x64xf32>
    %cst_56 = arith.constant 0.797884583 : f32
    %116 = vector.broadcast %cst_56 : f32 to vector<256x64xf32>
    %117 = arith.mulf %116, %115 : vector<256x64xf32>
    %118 = math.tanh %117 : vector<256x64xf32>
    %cst_57 = arith.constant 1.000000e+00 : f32
    %119 = vector.broadcast %cst_57 : f32 to vector<256x64xf32>
    %120 = arith.addf %119, %118 : vector<256x64xf32>
    %cst_58 = arith.constant 5.000000e-01 : f32
    %121 = vector.broadcast %cst_58 : f32 to vector<256x64xf32>
    %122 = arith.mulf %121, %120 : vector<256x64xf32>
    %123 = arith.mulf %110, %122 : vector<256x64xf32>
    %c0_59 = arith.constant 0 : index
    %c0_60 = arith.constant 0 : index
    %124 = vector.load %arg5[%c0_59, %c0_60] : memref<64x32xf32, #tpu.memory_space<vmem>>, vector<64x32xf32>
    %cst_61 = arith.constant dense<0.000000e+00> : vector<256x32xf32>
    %125 = tpu.matmul %123, %124, %cst_61 {dimension_numbers = #tpu.dot_dimension_numbers<[1], [0], [0], [1], [0, 0, 1, 1], [], []>} : vector<256x64xf32>, vector<64x32xf32>, vector<256x32xf32> -> vector<256x32xf32>
    %126 = vector.broadcast %6 : vector<1x32xf32> to vector<256x32xf32>
    %127 = arith.addf %125, %126 : vector<256x32xf32>
    %128 = arith.addf %1, %127 : vector<256x32xf32>
    %c0_62 = arith.constant 0 : index
    %c0_63 = arith.constant 0 : index
    %c0_64 = arith.constant 0 : index
    %129 = vector.load %arg13[%c0_62, %c0_63, %c0_64] : memref<1x256x32xf32, #tpu.memory_space<vmem>>, vector<1x256x32xf32>
    %130 = vector.shape_cast %129 : vector<1x256x32xf32> to vector<256x32xf32>
    %131 = vector.shape_cast %128 : vector<256x32xf32> to vector<1x256x32xf32>
    tpu.vector_store %arg13[%c0_62, %c0_63, %c0_64], %131 {strides = array<i32>} : memref<1x256x32xf32, #tpu.memory_space<vmem>>, vector<1x256x32xf32>,
    return
  }
  func.func @transform_0(%arg0: i32) -> (i32, i32, i32) {
    %c0_i32 = arith.constant 0 : i32
    %c0_i32_0 = arith.constant 0 : i32
    %c0_i32_1 = arith.constant 0 : i32
    return %arg0, %c0_i32, %c0_i32_0 : i32, i32, i32
  }
  func.func @transform_1(%arg0: i32) -> (i32, i32, i32) {
    %c0_i32 = arith.constant 0 : i32
    %c0_i32_0 = arith.constant 0 : i32
    %c0_i32_1 = arith.constant 0 : i32
    return %arg0, %c0_i32, %c0_i32_0 : i32, i32, i32
  }
  func.func @transform_2(%arg0: i32) -> (i32, i32) {
    %c0_i32 = arith.constant 0 : i32
    %c0_i32_0 = arith.constant 0 : i32
    %c0_i32_1 = arith.constant 0 : i32
    return %c0_i32, %c0_i32_0 : i32, i32
  }
  func.func @transform_3(%arg0: i32) -> (i32, i32) {
    %c0_i32 = arith.constant 0 : i32
    %c0_i32_0 = arith.constant 0 : i32
    %c0_i32_1 = arith.constant 0 : i32
    return %c0_i32, %c0_i32_0 : i32, i32
  }
  func.func @transform_4(%arg0: i32) -> (i32, i32) {
    %c0_i32 = arith.constant 0 : i32
    %c0_i32_0 = arith.constant 0 : i32
    %c0_i32_1 = arith.constant 0 : i32
    return %c0_i32, %c0_i32_0 : i32, i32
  }
  func.func @transform_5(%arg0: i32) -> (i32, i32) {
    %c0_i32 = arith.constant 0 : i32
    %c0_i32_0 = arith.constant 0 : i32
    %c0_i32_1 = arith.constant 0 : i32
    return %c0_i32, %c0_i32_0 : i32, i32
  }
  func.func @transform_6(%arg0: i32) -> (i32, i32) {
    %c0_i32 = arith.constant 0 : i32
    %c0_i32_0 = arith.constant 0 : i32
    %c0_i32_1 = arith.constant 0 : i32
    return %c0_i32, %c0_i32_0 : i32, i32
  }
  func.func @transform_7(%arg0: i32) -> (i32, i32) {
    %c0_i32 = arith.constant 0 : i32
    %c0_i32_0 = arith.constant 0 : i32
    %c0_i32_1 = arith.constant 0 : i32
    return %c0_i32, %c0_i32_0 : i32, i32
  }
  func.func @transform_8(%arg0: i32) -> (i32, i32) {
    %c0_i32 = arith.constant 0 : i32
    %c0_i32_0 = arith.constant 0 : i32
    %c0_i32_1 = arith.constant 0 : i32
    return %c0_i32, %c0_i32_0 : i32, i32
  }
  func.func @transform_9(%arg0: i32) -> (i32, i32) {
    %c0_i32 = arith.constant 0 : i32
    %c0_i32_0 = arith.constant 0 : i32
    %c0_i32_1 = arith.constant 0 : i32
    return %c0_i32, %c0_i32_0 : i32, i32
  }
  func.func @transform_10(%arg0: i32) -> (i32, i32) {
    %c0_i32 = arith.constant 0 : i32
    %c0_i32_0 = arith.constant 0 : i32
    %c0_i32_1 = arith.constant 0 : i32
    return %c0_i32, %c0_i32_0 : i32, i32
  }
  func.func @transform_11(%arg0: i32) -> (i32, i32) {
    %c0_i32 = arith.constant 0 : i32
    %c0_i32_0 = arith.constant 0 : i32
    %c0_i32_1 = arith.constant 0 : i32
    return %c0_i32, %c0_i32_0 : i32, i32
  }
  func.func @transform_12(%arg0: i32) -> (i32, i32, i32) {
    %c0_i32 = arith.constant 0 : i32
    %c0_i32_0 = arith.constant 0 : i32
    %c0_i32_1 = arith.constant 0 : i32
    return %arg0, %c0_i32, %c0_i32_0 : i32, i32, i32
  }
}

</mosaic_0001>

<llo_original>
// kernel: tpu_custom_call.1
$region0: #{tpu_custom_call.1}
  #allocation0 [shape = 'u32[]', space=smem, size = 0x4, offset = 0x4, fixed_abs, tag = 'smem constant byte address 0x4 - core index']
  #allocation1 [shape = 'u32[72,128]{1,0:T(1,128)}', space=vmem, size = 0x9000, scoped, tag = 'internal scratch']
  %s0 = inlined_call_operand.vmem [shape: f32[2,256,32], index: 0, kind: input, shape index: {}]
  %s1 = inlined_call_operand.vmem [shape: f32[2,256,128], index: 1, kind: input, shape index: {}]
  %s2 = inlined_call_operand.vmem [shape: f32[32,128], index: 2, kind: input, shape index: {}]
  %s3 = inlined_call_operand.vmem [shape: f32[32,64], index: 3, kind: input, shape index: {}]
  %s4 = inlined_call_operand.vmem [shape: f32[64,32], index: 4, kind: input, shape index: {}]
  %s5 = inlined_call_operand.vmem [shape: f32[8,128], index: 5, kind: input, shape index: {}]
  %s6 = inlined_call_operand.vmem [shape: f32[4,128], index: 6, kind: input, shape index: {}]
  %s7 = inlined_call_operand.vmem [shape: f32[128,4], index: 7, kind: input, shape index: {}]
  %s8 = inlined_call_operand.vmem [shape: f32[8,256], index: 8, kind: input, shape index: {}]
  %s9 = inlined_call_operand.vmem [shape: f32[256,8], index: 9, kind: input, shape index: {}]
  %s10 = inlined_call_operand.vmem [shape: f32[256,128], index: 10, kind: input, shape index: {}]
  %s11 = inlined_call_operand.vmem [shape: f32[128,32], index: 11, kind: input, shape index: {}]
  %s12 = inlined_call_operand.vmem [shape: f32[2,256,32], index: 12, kind: output, shape index: {}]
  %s13 = sld [smem:[#allocation0]]
  $region81: #{tpu_custom_call.1} parent=0
    _
  %s15 = ssub.s32 1, %s13
  %s16 = scalar_select 0, %s15, %s13
  loop: start=0, step=1, limit=4
  $region2: #{tpu_custom_call.1} parent=0 // loop_pre_header
    _
  $region3: #{tpu_custom_call.1} parent=0 // loop_header
    %s18 = sphi 0, %s22
    %p19 = scmp.ge.s32.totalorder %s18, 4
    %s28 = sphi 0, %s30
    %s31 = sphi 0, %s28
    %s32 = sphi 0, %s31
    %s48 = sphi 0, %s32
    %s54 = sphi 0, %s56
    %s57 = sphi 0, %s54
    %s58 = sphi 0, %s57
    %s74 = sphi 0, %s58
    %s78 = sphi 0, %s78
    %s80 = sphi 0, %s78
    %s81 = sphi 0, %s80
    %s95 = sphi 0, %s81
    %s99 = sphi 0, %s99
    %s101 = sphi 0, %s99
    %s102 = sphi 0, %s101
    %s116 = sphi 0, %s102
    %s120 = sphi 0, %s120
    %s122 = sphi 0, %s120
    %s123 = sphi 0, %s122
    %s137 = sphi 0, %s123
    %s141 = sphi 0, %s141
    %s143 = sphi 0, %s141
    %s144 = sphi 0, %s143
    %s158 = sphi 0, %s144
    %s162 = sphi 0, %s162
    %s164 = sphi 0, %s162
    %s165 = sphi 0, %s164
    %s179 = sphi 0, %s165
    %s183 = sphi 0, %s183
    %s185 = sphi 0, %s183
    %s186 = sphi 0, %s185
    %s200 = sphi 0, %s186
    %s204 = sphi 0, %s204
    %s206 = sphi 0, %s204
    %s207 = sphi 0, %s206
    %s221 = sphi 0, %s207
    %s225 = sphi 0, %s225
    %s227 = sphi 0, %s225
    %s228 = sphi 0, %s227
    %s242 = sphi 0, %s228
    %s246 = sphi 0, %s246
    %s248 = sphi 0, %s246
    %s249 = sphi 0, %s248
    %s263 = sphi 0, %s249
    %s267 = sphi 0, %s267
    %s269 = sphi 0, %s267
    %s270 = sphi 0, %s269
    %s284 = sphi 0, %s270
    %s290 = sphi 0, %s292
    %s293 = sphi 0, %s290
    %s294 = sphi 0, %s293
    %s310 = sphi 0, %s294
  $region4: #{tpu_custom_call.1} parent=0 // loop_header_branch
    %21 = sbr.rel (%p19) target = $region8
  $region5: #{tpu_custom_call.1} parent=0 // loop_body
    %s23 = ssub.s32 %s18, 1
    %s24 = ssub.s32 %s18, 2
    %s25 = sadd.s32 %s18, 1
    %s26 = ssub.s32 %s18, %s25
    %p27 = scmp.eq.s32.totalorder %s26, 0
    %s29 = sadd.s32 %s28, 1
    %s30 = scalar_select %p27, %s28, %s29
    %p33 = pneg %p27
    %p34 = scmp.eq.s32.totalorder %s18, 1
    %p35 = por %p33, %p34
    %p36 = scmp.ne.s32.totalorder %s28, %s31
    %p37 = scmp.eq.s32.totalorder %s18, 0
    %p38 = por %p36, %p37
    %p39 = scmp.ne.s32.totalorder %s28, %s31
    %p40 = scmp.eq.s32.totalorder %s23, 1
    %p41 = por %p39, %p40
    %p42 = scmp.ne.s32.totalorder %s31, %s32
    %p43 = scmp.eq.s32.totalorder %s23, 0
    %p44 = por %p42, %p43
    %p45 = scmp.ne.s32.totalorder %s31, %s32
    %p46 = scmp.eq.s32.totalorder %s24, 1
    %p47 = por %p45, %p46
    %p49 = scmp.ne.s32.totalorder %s32, %s48
    %p50 = scmp.eq.s32.totalorder %s24, 0
    %p51 = por %p49, %p50
    %s52 = ssub.s32 %s18, %s25
    %p53 = scmp.eq.s32.totalorder %s52, 0
    %s55 = sadd.s32 %s54, 1
    %s56 = scalar_select %p53, %s54, %s55
    %p59 = pneg %p53
    %p60 = scmp.eq.s32.totalorder %s18, 1
    %p61 = por %p59, %p60
    %p62 = scmp.ne.s32.totalorder %s54, %s57
    %p63 = scmp.eq.s32.totalorder %s18, 0
    %p64 = por %p62, %p63
    %p65 = scmp.ne.s32.totalorder %s54, %s57
    %p66 = scmp.eq.s32.totalorder %s23, 1
    %p67 = por %p65, %p66
    %p68 = scmp.ne.s32.totalorder %s57, %s58
    %p69 = scmp.eq.s32.totalorder %s23, 0
    %p70 = por %p68, %p69
    %p71 = scmp.ne.s32.totalorder %s57, %s58
    %p72 = scmp.eq.s32.totalorder %s24, 1
    %p73 = por %p71, %p72
    %p75 = scmp.ne.s32.totalorder %s58, %s74
    %p76 = scmp.eq.s32.totalorder %s24, 0
    %p77 = por %p75, %p76
    %s79 = sadd.s32 %s78, 1
    %p82 = scmp.eq.s32.totalorder %s18, 1
    %p83 = scmp.ne.s32.totalorder %s78, %s80
    %p84 = scmp.eq.s32.totalorder %s18, 0
    %p85 = por %p83, %p84
    %p86 = scmp.ne.s32.totalorder %s78, %s80
    %p87 = scmp.eq.s32.totalorder %s23, 1
    %p88 = por %p86, %p87
    %p89 = scmp.ne.s32.totalorder %s80, %s81
    %p90 = scmp.eq.s32.totalorder %s23, 0
    %p91 = por %p89, %p90
    %p92 = scmp.ne.s32.totalorder %s80, %s81
    %p93 = scmp.eq.s32.totalorder %s24, 1
    %p94 = por %p92, %p93
    %p96 = scmp.ne.s32.totalorder %s81, %s95
    %p97 = scmp.eq.s32.totalorder %s24, 0
    %p98 = por %p96, %p97
    %s100 = sadd.s32 %s99, 1
    %p103 = scmp.eq.s32.totalorder %s18, 1
    %p104 = scmp.ne.s32.totalorder %s99, %s101
    %p105 = scmp.eq.s32.totalorder %s18, 0
    %p106 = por %p104, %p105
    %p107 = scmp.ne.s32.totalorder %s99, %s101
    %p108 = scmp.eq.s32.totalorder %s23, 1
    %p109 = por %p107, %p108
    %p110 = scmp.ne.s32.totalorder %s101, %s102
    %p111 = scmp.eq.s32.totalorder %s23, 0
    %p112 = por %p110, %p111
    %p113 = scmp.ne.s32.totalorder %s101, %s102
    %p114 = scmp.eq.s32.totalorder %s24, 1
    %p115 = por %p113, %p114
    %p117 = scmp.ne.s32.totalorder %s102, %s116
    %p118 = scmp.eq.s32.totalorder %s24, 0
    %p119 = por %p117, %p118
    %s121 = sadd.s32 %s120, 1
    %p124 = scmp.eq.s32.totalorder %s18, 1
    %p125 = scmp.ne.s32.totalorder %s120, %s122
    %p126 = scmp.eq.s32.totalorder %s18, 0
    %p127 = por %p125, %p126
    %p128 = scmp.ne.s32.totalorder %s120, %s122
    %p129 = scmp.eq.s32.totalorder %s23, 1
    %p130 = por %p128, %p129
    %p131 = scmp.ne.s32.totalorder %s122, %s123
    %p132 = scmp.eq.s32.totalorder %s23, 0
    %p133 = por %p131, %p132
    %p134 = scmp.ne.s32.totalorder %s122, %s123
    %p135 = scmp.eq.s32.totalorder %s24, 1
    %p136 = por %p134, %p135
    %p138 = scmp.ne.s32.totalorder %s123, %s137
    %p139 = scmp.eq.s32.totalorder %s24, 0
    %p140 = por %p138, %p139
    %s142 = sadd.s32 %s141, 1
    %p145 = scmp.eq.s32.totalorder %s18, 1
    %p146 = scmp.ne.s32.totalorder %s141, %s143
    %p147 = scmp.eq.s32.totalorder %s18, 0
    %p148 = por %p146, %p147
    %p149 = scmp.ne.s32.totalorder %s141, %s143
    %p150 = scmp.eq.s32.totalorder %s23, 1
    %p151 = por %p149, %p150
    %p152 = scmp.ne.s32.totalorder %s143, %s144
    %p153 = scmp.eq.s32.totalorder %s23, 0
    %p154 = por %p152, %p153
    %p155 = scmp.ne.s32.totalorder %s143, %s144
    %p156 = scmp.eq.s32.totalorder %s24, 1
    %p157 = por %p155, %p156
    %p159 = scmp.ne.s32.totalorder %s144, %s158
    %p160 = scmp.eq.s32.totalorder %s24, 0
    %p161 = por %p159, %p160
    %s163 = sadd.s32 %s162, 1
    %p166 = scmp.eq.s32.totalorder %s18, 1
    %p167 = scmp.ne.s32.totalorder %s162, %s164
    %p168 = scmp.eq.s32.totalorder %s18, 0
    %p169 = por %p167, %p168
    %p170 = scmp.ne.s32.totalorder %s162, %s164
    %p171 = scmp.eq.s32.totalorder %s23, 1
    %p172 = por %p170, %p171
    %p173 = scmp.ne.s32.totalorder %s164, %s165
    %p174 = scmp.eq.s32.totalorder %s23, 0
    %p175 = por %p173, %p174
    %p176 = scmp.ne.s32.totalorder %s164, %s165
    %p177 = scmp.eq.s32.totalorder %s24, 1
    %p178 = por %p176, %p177
    %p180 = scmp.ne.s32.totalorder %s165, %s179
    %p181 = scmp.eq.s32.totalorder %s24, 0
    %p182 = por %p180, %p181
    %s184 = sadd.s32 %s183, 1
    %p187 = scmp.eq.s32.totalorder %s18, 1
    %p188 = scmp.ne.s32.totalorder %s183, %s185
    %p189 = scmp.eq.s32.totalorder %s18, 0
    %p190 = por %p188, %p189
    %p191 = scmp.ne.s32.totalorder %s183, %s185
    %p192 = scmp.eq.s32.totalorder %s23, 1
    %p193 = por %p191, %p192
    %p194 = scmp.ne.s32.totalorder %s185, %s186
    %p195 = scmp.eq.s32.totalorder %s23, 0
    %p196 = por %p194, %p195
    %p197 = scmp.ne.s32.totalorder %s185, %s186
    %p198 = scmp.eq.s32.totalorder %s24, 1
    %p199 = por %p197, %p198
    %p201 = scmp.ne.s32.totalorder %s186, %s200
    %p202 = scmp.eq.s32.totalorder %s24, 0
    %p203 = por %p201, %p202
    %s205 = sadd.s32 %s204, 1
    %p208 = scmp.eq.s32.totalorder %s18, 1
    %p209 = scmp.ne.s32.totalorder %s204, %s206
    %p210 = scmp.eq.s32.totalorder %s18, 0
    %p211 = por %p209, %p210
    %p212 = scmp.ne.s32.totalorder %s204, %s206
    %p213 = scmp.eq.s32.totalorder %s23, 1
    %p214 = por %p212, %p213
    %p215 = scmp.ne.s32.totalorder %s206, %s207
    %p216 = scmp.eq.s32.totalorder %s23, 0
    %p217 = por %p215, %p216
    %p218 = scmp.ne.s32.totalorder %s206, %s207
    %p219 = scmp.eq.s32.totalorder %s24, 1
    %p220 = por %p218, %p219
    %p222 = scmp.ne.s32.totalorder %s207, %s221
    %p223 = scmp.eq.s32.totalorder %s24, 0
    %p224 = por %p222, %p223
    %s226 = sadd.s32 %s225, 1
    %p229 = scmp.eq.s32.totalorder %s18, 1
    %p230 = scmp.ne.s32.totalorder %s225, %s227
    %p231 = scmp.eq.s32.totalorder %s18, 0
    %p232 = por %p230, %p231
    %p233 = scmp.ne.s32.totalorder %s225, %s227
    %p234 = scmp.eq.s32.totalorder %s23, 1
    %p235 = por %p233, %p234
    %p236 = scmp.ne.s32.totalorder %s227, %s228
    %p237 = scmp.eq.s32.totalorder %s23, 0
    %p238 = por %p236, %p237
    %p239 = scmp.ne.s32.totalorder %s227, %s228
    %p240 = scmp.eq.s32.totalorder %s24, 1
    %p241 = por %p239, %p240
    %p243 = scmp.ne.s32.totalorder %s228, %s242
    %p244 = scmp.eq.s32.totalorder %s24, 0
    %p245 = por %p243, %p244
    %s247 = sadd.s32 %s246, 1
    %p250 = scmp.eq.s32.totalorder %s18, 1
    %p251 = scmp.ne.s32.totalorder %s246, %s248
    %p252 = scmp.eq.s32.totalorder %s18, 0
    %p253 = por %p251, %p252
    %p254 = scmp.ne.s32.totalorder %s246, %s248
    %p255 = scmp.eq.s32.totalorder %s23, 1
    %p256 = por %p254, %p255
    %p257 = scmp.ne.s32.totalorder %s248, %s249
    %p258 = scmp.eq.s32.totalorder %s23, 0
    %p259 = por %p257, %p258
    %p260 = scmp.ne.s32.totalorder %s248, %s249
    %p261 = scmp.eq.s32.totalorder %s24, 1
    %p262 = por %p260, %p261
    %p264 = scmp.ne.s32.totalorder %s249, %s263
    %p265 = scmp.eq.s32.totalorder %s24, 0
    %p266 = por %p264, %p265
    %s268 = sadd.s32 %s267, 1
    %p271 = scmp.eq.s32.totalorder %s18, 1
    %p272 = scmp.ne.s32.totalorder %s267, %s269
    %p273 = scmp.eq.s32.totalorder %s18, 0
    %p274 = por %p272, %p273
    %p275 = scmp.ne.s32.totalorder %s267, %s269
    %p276 = scmp.eq.s32.totalorder %s23, 1
    %p277 = por %p275, %p276
    %p278 = scmp.ne.s32.totalorder %s269, %s270
    %p279 = scmp.eq.s32.totalorder %s23, 0
    %p280 = por %p278, %p279
    %p281 = scmp.ne.s32.totalorder %s269, %s270
    %p282 = scmp.eq.s32.totalorder %s24, 1
    %p283 = por %p281, %p282
    %p285 = scmp.ne.s32.totalorder %s270, %s284
    %p286 = scmp.eq.s32.totalorder %s24, 0
    %p287 = por %p285, %p286
    %s288 = ssub.s32 %s18, %s25
    %p289 = scmp.eq.s32.totalorder %s288, 0
    %s291 = sadd.s32 %s290, 1
    %s292 = scalar_select %p289, %s290, %s291
    %p295 = pneg %p289
    %p296 = scmp.eq.s32.totalorder %s18, 1
    %p297 = por %p295, %p296
    %p298 = scmp.ne.s32.totalorder %s290, %s293
    %p299 = scmp.eq.s32.totalorder %s18, 0
    %p300 = por %p298, %p299
    %p301 = scmp.ne.s32.totalorder %s290, %s293
    %p302 = scmp.eq.s32.totalorder %s23, 1
    %p303 = por %p301, %p302
    %p304 = scmp.ne.s32.totalorder %s293, %s294
    %p305 = scmp.eq.s32.totalorder %s23, 0
    %p306 = por %p304, %p305
    %p307 = scmp.ne.s32.totalorder %s293, %s294
    %p308 = scmp.eq.s32.totalorder %s24, 1
    %p309 = por %p307, %p308
    %p311 = scmp.ne.s32.totalorder %s294, %s310
    %p312 = scmp.eq.s32.totalorder %s24, 0
    %p313 = por %p311, %p312
    %p314 = scmp.le.s32.totalorder 1, %s18
    %p315 = scmp.lt.s32.totalorder %s18, 3
    %p316 = pnand %p314, %p315
    %p317 = pneg %p316
    // Predicated region
    $region9: #{tpu_custom_call.1} parent=5 // pred_check
      _
    $region10: #{tpu_custom_call.1} parent=5 // pred_check_branch
      %319 = sbr.rel (%p316) target = $region12
    $region11: #{tpu_custom_call.1} parent=5 // pred_region
      %s320 = ssub.s32 %s18, 1
      // Predicated region
      $region13: #{tpu_custom_call.1} parent=11 // pred_check
        %p321 = pneg %p91
      $region14: #{tpu_custom_call.1} parent=11 // pred_check_branch
        %323 = sbr.rel (%p321) target = $region16
      $region15: #{tpu_custom_call.1} parent=11 // pred_region
        _
      $region16: #{tpu_custom_call.1} parent=11 // pred_fallthru
        _
      // Predicated region
      $region17: #{tpu_custom_call.1} parent=11 // pred_check
        %p324 = pneg %p112
      $region18: #{tpu_custom_call.1} parent=11 // pred_check_branch
        %326 = sbr.rel (%p324) target = $region20
      $region19: #{tpu_custom_call.1} parent=11 // pred_region
        _
      $region20: #{tpu_custom_call.1} parent=11 // pred_fallthru
        _
      // Predicated region
      $region21: #{tpu_custom_call.1} parent=11 // pred_check
        %p327 = pneg %p133
      $region22: #{tpu_custom_call.1} parent=11 // pred_check_branch
        %329 = sbr.rel (%p327) target = $region24
      $region23: #{tpu_custom_call.1} parent=11 // pred_region
        _
      $region24: #{tpu_custom_call.1} parent=11 // pred_fallthru
        _
      // Predicated region
      $region25: #{tpu_custom_call.1} parent=11 // pred_check
        %p330 = pneg %p154
      $region26: #{tpu_custom_call.1} parent=11 // pred_check_branch
        %332 = sbr.rel (%p330) target = $region28
      $region27: #{tpu_custom_call.1} parent=11 // pred_region
        _
      $region28: #{tpu_custom_call.1} parent=11 // pred_fallthru
        _
      // Predicated region
      $region29: #{tpu_custom_call.1} parent=11 // pred_check
        %p333 = pneg %p175
      $region30: #{tpu_custom_call.1} parent=11 // pred_check_branch
        %335 = sbr.rel (%p333) target = $region32
      $region31: #{tpu_custom_call.1} parent=11 // pred_region
        _
      $region32: #{tpu_custom_call.1} parent=11 // pred_fallthru
        _
      // Predicated region
      $region33: #{tpu_custom_call.1} parent=11 // pred_check
        %p336 = pneg %p196
      $region34: #{tpu_custom_call.1} parent=11 // pred_check_branch
        %338 = sbr.rel (%p336) target = $region36
      $region35: #{tpu_custom_call.1} parent=11 // pred_region
        _
      $region36: #{tpu_custom_call.1} parent=11 // pred_fallthru
        _
      // Predicated region
      $region37: #{tpu_custom_call.1} parent=11 // pred_check
        %p339 = pneg %p217
      $region38: #{tpu_custom_call.1} parent=11 // pred_check_branch
        %341 = sbr.rel (%p339) target = $region40
      $region39: #{tpu_custom_call.1} parent=11 // pred_region
        _
      $region40: #{tpu_custom_call.1} parent=11 // pred_fallthru
        _
      // Predicated region
      $region41: #{tpu_custom_call.1} parent=11 // pred_check
        %p342 = pneg %p238
      $region42: #{tpu_custom_call.1} parent=11 // pred_check_branch
        %344 = sbr.rel (%p342) target = $region44
      $region43: #{tpu_custom_call.1} parent=11 // pred_region
        _
      $region44: #{tpu_custom_call.1} parent=11 // pred_fallthru
        _
      // Predicated region
      $region45: #{tpu_custom_call.1} parent=11 // pred_check
        %p345 = pneg %p259
      $region46: #{tpu_custom_call.1} parent=11 // pred_check_branch
        %347 = sbr.rel (%p345) target = $region48
      $region47: #{tpu_custom_call.1} parent=11 // pred_region
        _
      $region48: #{tpu_custom_call.1} parent=11 // pred_fallthru
        _
      // Predicated region
      $region49: #{tpu_custom_call.1} parent=11 // pred_check
        %p348 = pneg %p280
      $region50: #{tpu_custom_call.1} parent=11 // pred_check_branch
        %350 = sbr.rel (%p348) target = $region52
      $region51: #{tpu_custom_call.1} parent=11 // pred_region
        _
      $region52: #{tpu_custom_call.1} parent=11 // pred_fallthru
        _
    $region12: #{tpu_custom_call.1} parent=5 // pred_fallthru
      _
    %p351 = scmp.lt.s32.totalorder %s18, 2
    // Predicated region
    $region53: #{tpu_custom_call.1} parent=5 // pred_check
      %p352 = pneg %p351
    $region54: #{tpu_custom_call.1} parent=5 // pred_check_branch
      %354 = sbr.rel (%p352) target = $region56
    $region55: #{tpu_custom_call.1} parent=5 // pred_region
      // Predicated region
      $region57: #{tpu_custom_call.1} parent=55 // pred_check
        %p355 = pneg %p38
      $region58: #{tpu_custom_call.1} parent=55 // pred_check_branch
        %357 = sbr.rel (%p355) target = $region60
      $region59: #{tpu_custom_call.1} parent=55 // pred_region
        %p358 = scmp.lt.s32.totalorder %s18, 1
        %s359 = scalar_select %p358, %s18, 1
        %s360 = smul.addr %s359, 32
        %s361 = smul.addr %s360, 8
        %s362 = scalar_lea.vmem %s0, %s361
      $region60: #{tpu_custom_call.1} parent=55 // pred_fallthru
        _
      // Predicated region
      $region61: #{tpu_custom_call.1} parent=55 // pred_check
        %p363 = pneg %p64
      $region62: #{tpu_custom_call.1} parent=55 // pred_check_branch
        %365 = sbr.rel (%p363) target = $region64
      $region63: #{tpu_custom_call.1} parent=55 // pred_region
        %p366 = scmp.lt.s32.totalorder %s18, 1
        %s367 = scalar_select %p366, %s18, 1
        %s368 = smul.addr %s367, 32
        %s369 = smul.addr %s368, 8
        %s370 = scalar_lea.vmem %s1, %s369
      $region64: #{tpu_custom_call.1} parent=55 // pred_fallthru
        _
    $region56: #{tpu_custom_call.1} parent=5 // pred_fallthru
      _
    %p371 = scmp.le.s32.totalorder 1, %s18
    %p372 = scmp.lt.s32.totalorder %s18, 3
    %p373 = pnand %p371, %p372
    %p374 = pneg %p373
    // Predicated region
    $region65: #{tpu_custom_call.1} parent=5 // pred_check
      _
    $region66: #{tpu_custom_call.1} parent=5 // pred_check_branch
      %376 = sbr.rel (%p373) target = $region68
    $region67: #{tpu_custom_call.1} parent=5 // pred_region
      %s377 = ssub.s32 %s18, 1
      %p378 = scmp.lt.s32.totalorder %s23, 1
      %s379 = scalar_select %p378, %s23, 1
      %s380 = smul.addr %s379, 32
      %s381 = smul.addr %s380, 8
      %s382 = scalar_lea.vmem %s0, %s381
      %p383 = pneg %p44
      %p384 = pneg %p41
      %p385 = scmp.lt.s32.totalorder %s23, 1
      %s386 = scalar_select %p385, %s23, 1
      %s387 = smul.addr %s386, 32
      %s388 = smul.addr %s387, 8
      %s389 = scalar_lea.vmem %s1, %s388
      %p390 = pneg %p70
      %p391 = pneg %p67
      %p392 = pneg %p91
      %p393 = pneg %p88
      %p394 = pneg %p112
      %p395 = pneg %p109
      %p396 = pneg %p133
      %p397 = pneg %p130
      %p398 = pneg %p154
      %p399 = pneg %p151
      %p400 = pneg %p175
      %p401 = pneg %p172
      %p402 = pneg %p196
      %p403 = pneg %p193
      %p404 = pneg %p217
      %p405 = pneg %p214
      %p406 = pneg %p238
      %p407 = pneg %p235
      %p408 = pneg %p259
      %p409 = pneg %p256
      %p410 = pneg %p280
      %p411 = pneg %p277
      %p412 = pneg %p306
      %p413 = pneg %p303
      %p414 = scmp.lt.s32.totalorder %s23, 1
      %s415 = scalar_select %p414, %s23, 1
      %s416 = smul.addr %s415, 32
      %s417 = smul.addr %s416, 8
      %s418 = scalar_lea.vmem %s12, %s417
      %p419 = scmp.lt.s32.totalorder %s23, 1
      %s420 = scalar_select %p419, %s23, 1
      %s421 = smul.addr %s420, 32
      %s422 = smul.addr %s421, 8
      %s423 = scalar_lea.vmem %s0, %s422
      %p424 = scmp.lt.s32.totalorder %s23, 1
      %s425 = scalar_select %p424, %s23, 1
      %s426 = smul.addr %s425, 32
      %s427 = smul.addr %s426, 8
      %s428 = scalar_lea.vmem %s1, %s427
      %p429 = scmp.lt.s32.totalorder %s23, 1
      %s430 = scalar_select %p429, %s23, 1
      %s431 = smul.addr %s430, 32
      %s432 = smul.addr %s431, 8
      %s433 = scalar_lea.vmem %s12, %s432
      %v434 = vld [vmem:[%s423] sm:$0xff]
      %v435 = vld [vmem:[%s423 + $0x8] sm:$0xff]
      %v436 = vld [vmem:[%s423 + $0x10] sm:$0xff]
      %v437 = vld [vmem:[%s423 + $0x18] sm:$0xff]
      %v438 = vld [vmem:[%s423 + $0x20] sm:$0xff]
      %v439 = vld [vmem:[%s423 + $0x28] sm:$0xff]
      %v440 = vld [vmem:[%s423 + $0x30] sm:$0xff]
      %v441 = vld [vmem:[%s423 + $0x38] sm:$0xff]
      %v442 = vld [vmem:[%s423 + $0x40] sm:$0xff]
      %v443 = vld [vmem:[%s423 + $0x48] sm:$0xff]
      %v444 = vld [vmem:[%s423 + $0x50] sm:$0xff]
      %v445 = vld [vmem:[%s423 + $0x58] sm:$0xff]
      %v446 = vld [vmem:[%s423 + $0x60] sm:$0xff]
      %v447 = vld [vmem:[%s423 + $0x68] sm:$0xff]
      %v448 = vld [vmem:[%s423 + $0x70] sm:$0xff]
      %v449 = vld [vmem:[%s423 + $0x78] sm:$0xff]
      %v450 = vld [vmem:[%s423 + $0x80] sm:$0xff]
      %v451 = vld [vmem:[%s423 + $0x88] sm:$0xff]
      %v452 = vld [vmem:[%s423 + $0x90] sm:$0xff]
      %v453 = vld [vmem:[%s423 + $0x98] sm:$0xff]
      %v454 = vld [vmem:[%s423 + $0xa0] sm:$0xff]
      %v455 = vld [vmem:[%s423 + $0xa8] sm:$0xff]
      %v456 = vld [vmem:[%s423 + $0xb0] sm:$0xff]
      %v457 = vld [vmem:[%s423 + $0xb8] sm:$0xff]
      %v458 = vld [vmem:[%s423 + $0xc0] sm:$0xff]
      %v459 = vld [vmem:[%s423 + $0xc8] sm:$0xff]
      %v460 = vld [vmem:[%s423 + $0xd0] sm:$0xff]
      %v461 = vld [vmem:[%s423 + $0xd8] sm:$0xff]
      %v462 = vld [vmem:[%s423 + $0xe0] sm:$0xff]
      %v463 = vld [vmem:[%s423 + $0xe8] sm:$0xff]
      %v464 = vld [vmem:[%s423 + $0xf0] sm:$0xff]
      %v465 = vld [vmem:[%s423 + $0xf8] sm:$0xff]
      %v466 = vld [vmem:[%s5] sm:$0xff]
      %vm467 = vcmask 261120
      %v468 = vsel %vm467, %v434, 0.0
      %469 = vadd.xlane.f32.xlu0 %v468
      %v470 = vpop.xlane.xlu0 %469
      %v471 = vsel %vm467, %v435, 0.0
      %472 = vadd.xlane.f32.xlu0 %v471
      %v473 = vpop.xlane.xlu0 %472
      %v474 = vsel %vm467, %v436, 0.0
      %475 = vadd.xlane.f32.xlu0 %v474
      %v476 = vpop.xlane.xlu0 %475
      %v477 = vsel %vm467, %v437, 0.0
      %478 = vadd.xlane.f32.xlu0 %v477
      %v479 = vpop.xlane.xlu0 %478
      %v480 = vsel %vm467, %v438, 0.0
      %481 = vadd.xlane.f32.xlu0 %v480
      %v482 = vpop.xlane.xlu0 %481
      %v483 = vsel %vm467, %v439, 0.0
      %484 = vadd.xlane.f32.xlu0 %v483
      %v485 = vpop.xlane.xlu0 %484
      %v486 = vsel %vm467, %v440, 0.0
      %487 = vadd.xlane.f32.xlu0 %v486
      %v488 = vpop.xlane.xlu0 %487
      %v489 = vsel %vm467, %v441, 0.0
      %490 = vadd.xlane.f32.xlu0 %v489
      %v491 = vpop.xlane.xlu0 %490
      %v492 = vsel %vm467, %v442, 0.0
      %493 = vadd.xlane.f32.xlu0 %v492
      %v494 = vpop.xlane.xlu0 %493
      %v495 = vsel %vm467, %v443, 0.0
      %496 = vadd.xlane.f32.xlu0 %v495
      %v497 = vpop.xlane.xlu0 %496
      %v498 = vsel %vm467, %v444, 0.0
      %499 = vadd.xlane.f32.xlu0 %v498
      %v500 = vpop.xlane.xlu0 %499
      %v501 = vsel %vm467, %v445, 0.0
      %502 = vadd.xlane.f32.xlu0 %v501
      %v503 = vpop.xlane.xlu0 %502
      %v504 = vsel %vm467, %v446, 0.0
      %505 = vadd.xlane.f32.xlu0 %v504
      %v506 = vpop.xlane.xlu0 %505
      %v507 = vsel %vm467, %v447, 0.0
      %508 = vadd.xlane.f32.xlu0 %v507
      %v509 = vpop.xlane.xlu0 %508
      %v510 = vsel %vm467, %v448, 0.0
      %511 = vadd.xlane.f32.xlu0 %v510
      %v512 = vpop.xlane.xlu0 %511
      %v513 = vsel %vm467, %v449, 0.0
      %514 = vadd.xlane.f32.xlu0 %v513
      %v515 = vpop.xlane.xlu0 %514
      %v516 = vsel %vm467, %v450, 0.0
      %517 = vadd.xlane.f32.xlu0 %v516
      %v518 = vpop.xlane.xlu0 %517
      %v519 = vsel %vm467, %v451, 0.0
      %520 = vadd.xlane.f32.xlu0 %v519
      %v521 = vpop.xlane.xlu0 %520
      %v522 = vsel %vm467, %v452, 0.0
      %523 = vadd.xlane.f32.xlu0 %v522
      %v524 = vpop.xlane.xlu0 %523
      %v525 = vsel %vm467, %v453, 0.0
      %526 = vadd.xlane.f32.xlu0 %v525
      %v527 = vpop.xlane.xlu0 %526
      %v528 = vsel %vm467, %v454, 0.0
      %529 = vadd.xlane.f32.xlu0 %v528
      %v530 = vpop.xlane.xlu0 %529
      %v531 = vsel %vm467, %v455, 0.0
      %532 = vadd.xlane.f32.xlu0 %v531
      %v533 = vpop.xlane.xlu0 %532
      %v534 = vsel %vm467, %v456, 0.0
      %535 = vadd.xlane.f32.xlu0 %v534
      %v536 = vpop.xlane.xlu0 %535
      %v537 = vsel %vm467, %v457, 0.0
      %538 = vadd.xlane.f32.xlu0 %v537
      %v539 = vpop.xlane.xlu0 %538
      %v540 = vsel %vm467, %v458, 0.0
      %541 = vadd.xlane.f32.xlu0 %v540
      %v542 = vpop.xlane.xlu0 %541
      %v543 = vsel %vm467, %v459, 0.0
      %544 = vadd.xlane.f32.xlu0 %v543
      %v545 = vpop.xlane.xlu0 %544
      %v546 = vsel %vm467, %v460, 0.0
      %547 = vadd.xlane.f32.xlu0 %v546
      %v548 = vpop.xlane.xlu0 %547
      %v549 = vsel %vm467, %v461, 0.0
      %550 = vadd.xlane.f32.xlu0 %v549
      %v551 = vpop.xlane.xlu0 %550
      %v552 = vsel %vm467, %v462, 0.0
      %553 = vadd.xlane.f32.xlu0 %v552
      %v554 = vpop.xlane.xlu0 %553
      %v555 = vsel %vm467, %v463, 0.0
      %556 = vadd.xlane.f32.xlu0 %v555
      %v557 = vpop.xlane.xlu0 %556
      %v558 = vsel %vm467, %v464, 0.0
      %559 = vadd.xlane.f32.xlu0 %v558
      %v560 = vpop.xlane.xlu0 %559
      %v561 = vsel %vm467, %v465, 0.0
      %562 = vadd.xlane.f32.xlu0 %v561
      %v563 = vpop.xlane.xlu0 %562
      %v564 = vrcp.pop 32.0
      %v565 = vmul.f32 32.0, %v564
      %v566 = vsub.f32 1.0, %v565
      %v567 = vmul.f32 %v564, %v566
      %v568 = vadd.f32 %v564, %v567
      %vm569 = vweird.f32 %v564
      %v570 = vsel %vm569, %v564, %v568
      %v571 = vmul.f32 %v470, %v570
      %v572 = vmul.f32 %v473, %v570
      %v573 = vmul.f32 %v476, %v570
      %v574 = vmul.f32 %v479, %v570
      %v575 = vmul.f32 %v482, %v570
      %v576 = vmul.f32 %v485, %v570
      %v577 = vmul.f32 %v488, %v570
      %v578 = vmul.f32 %v491, %v570
      %v579 = vmul.f32 %v494, %v570
      %v580 = vmul.f32 %v497, %v570
      %v581 = vmul.f32 %v500, %v570
      %v582 = vmul.f32 %v503, %v570
      %v583 = vmul.f32 %v506, %v570
      %v584 = vmul.f32 %v509, %v570
      %v585 = vmul.f32 %v512, %v570
      %v586 = vmul.f32 %v515, %v570
      %v587 = vmul.f32 %v518, %v570
      %v588 = vmul.f32 %v521, %v570
      %v589 = vmul.f32 %v524, %v570
      %v590 = vmul.f32 %v527, %v570
      %v591 = vmul.f32 %v530, %v570
      %v592 = vmul.f32 %v533, %v570
      %v593 = vmul.f32 %v536, %v570
      %v594 = vmul.f32 %v539, %v570
      %v595 = vmul.f32 %v542, %v570
      %v596 = vmul.f32 %v545, %v570
      %v597 = vmul.f32 %v548, %v570
      %v598 = vmul.f32 %v551, %v570
      %v599 = vmul.f32 %v554, %v570
      %v600 = vmul.f32 %v557, %v570
      %v601 = vmul.f32 %v560, %v570
      %v602 = vmul.f32 %v563, %v570
      %v603 = vsub.f32 %v434, %v571
      %v604 = vsub.f32 %v435, %v572
      %v605 = vsub.f32 %v436, %v573
      %v606 = vsub.f32 %v437, %v574
      %v607 = vsub.f32 %v438, %v575
      %v608 = vsub.f32 %v439, %v576
      %v609 = vsub.f32 %v440, %v577
      %v610 = vsub.f32 %v441, %v578
      %v611 = vsub.f32 %v442, %v579
      %v612 = vsub.f32 %v443, %v580
      %v613 = vsub.f32 %v444, %v581
      %v614 = vsub.f32 %v445, %v582
      %v615 = vsub.f32 %v446, %v583
      %v616 = vsub.f32 %v447, %v584
      %v617 = vsub.f32 %v448, %v585
      %v618 = vsub.f32 %v449, %v586
      %v619 = vsub.f32 %v450, %v587
      %v620 = vsub.f32 %v451, %v588
      %v621 = vsub.f32 %v452, %v589
      %v622 = vsub.f32 %v453, %v590
      %v623 = vsub.f32 %v454, %v591
      %v624 = vsub.f32 %v455, %v592
      %v625 = vsub.f32 %v456, %v593
      %v626 = vsub.f32 %v457, %v594
      %v627 = vsub.f32 %v458, %v595
      %v628 = vsub.f32 %v459, %v596
      %v629 = vsub.f32 %v460, %v597
      %v630 = vsub.f32 %v461, %v598
      %v631 = vsub.f32 %v462, %v599
      %v632 = vsub.f32 %v463, %v600
      %v633 = vsub.f32 %v464, %v601
      %v634 = vsub.f32 %v465, %v602
      %v635 = vmul.f32 %v603, %v603
      %v636 = vmul.f32 %v604, %v604
      %v637 = vmul.f32 %v605, %v605
      %v638 = vmul.f32 %v606, %v606
      %v639 = vmul.f32 %v607, %v607
      %v640 = vmul.f32 %v608, %v608
      %v641 = vmul.f32 %v609, %v609
      %v642 = vmul.f32 %v610, %v610
      %v643 = vmul.f32 %v611, %v611
      %v644 = vmul.f32 %v612, %v612
      %v645 = vmul.f32 %v613, %v613
      %v646 = vmul.f32 %v614, %v614
      %v647 = vmul.f32 %v615, %v615
      %v648 = vmul.f32 %v616, %v616
      %v649 = vmul.f32 %v617, %v617
      %v650 = vmul.f32 %v618, %v618
      %v651 = vmul.f32 %v619, %v619
      %v652 = vmul.f32 %v620, %v620
      %v653 = vmul.f32 %v621, %v621
      %v654 = vmul.f32 %v622, %v622
      %v655 = vmul.f32 %v623, %v623
      %v656 = vmul.f32 %v624, %v624
      %v657 = vmul.f32 %v625, %v625
      %v658 = vmul.f32 %v626, %v626
      %v659 = vmul.f32 %v627, %v627
      %v660 = vmul.f32 %v628, %v628
      %v661 = vmul.f32 %v629, %v629
      %v662 = vmul.f32 %v630, %v630
      %v663 = vmul.f32 %v631, %v631
      %v664 = vmul.f32 %v632, %v632
      %v665 = vmul.f32 %v633, %v633
      %v666 = vmul.f32 %v634, %v634
      %v667 = vsel %vm467, %v635, 0.0
      %668 = vadd.xlane.f32.xlu0 %v667
      %v669 = vpop.xlane.xlu0 %668
      %v670 = vsel %vm467, %v636, 0.0
      %671 = vadd.xlane.f32.xlu0 %v670
      %v672 = vpop.xlane.xlu0 %671
      %v673 = vsel %vm467, %v637, 0.0
      %674 = vadd.xlane.f32.xlu0 %v673
      %v675 = vpop.xlane.xlu0 %674
      %v676 = vsel %vm467, %v638, 0.0
      %677 = vadd.xlane.f32.xlu0 %v676
      %v678 = vpop.xlane.xlu0 %677
      %v679 = vsel %vm467, %v639, 0.0
      %680 = vadd.xlane.f32.xlu0 %v679
      %v681 = vpop.xlane.xlu0 %680
      %v682 = vsel %vm467, %v640, 0.0
      %683 = vadd.xlane.f32.xlu0 %v682
      %v684 = vpop.xlane.xlu0 %683
      %v685 = vsel %vm467, %v641, 0.0
      %686 = vadd.xlane.f32.xlu0 %v685
      %v687 = vpop.xlane.xlu0 %686
      %v688 = vsel %vm467, %v642, 0.0
      %689 = vadd.xlane.f32.xlu0 %v688
      %v690 = vpop.xlane.xlu0 %689
      %v691 = vsel %vm467, %v643, 0.0
      %692 = vadd.xlane.f32.xlu0 %v691
      %v693 = vpop.xlane.xlu0 %692
      %v694 = vsel %vm467, %v644, 0.0
      %695 = vadd.xlane.f32.xlu0 %v694
      %v696 = vpop.xlane.xlu0 %695
      %v697 = vsel %vm467, %v645, 0.0
      %698 = vadd.xlane.f32.xlu0 %v697
      %v699 = vpop.xlane.xlu0 %698
      %v700 = vsel %vm467, %v646, 0.0
      %701 = vadd.xlane.f32.xlu0 %v700
      %v702 = vpop.xlane.xlu0 %701
      %v703 = vsel %vm467, %v647, 0.0
      %704 = vadd.xlane.f32.xlu0 %v703
      %v705 = vpop.xlane.xlu0 %704
      %v706 = vsel %vm467, %v648, 0.0
      %707 = vadd.xlane.f32.xlu0 %v706
      %v708 = vpop.xlane.xlu0 %707
      %v709 = vsel %vm467, %v649, 0.0
      %710 = vadd.xlane.f32.xlu0 %v709
      %v711 = vpop.xlane.xlu0 %710
      %v712 = vsel %vm467, %v650, 0.0
      %713 = vadd.xlane.f32.xlu0 %v712
      %v714 = vpop.xlane.xlu0 %713
      %v715 = vsel %vm467, %v651, 0.0
      %716 = vadd.xlane.f32.xlu0 %v715
      %v717 = vpop.xlane.xlu0 %716
      %v718 = vsel %vm467, %v652, 0.0
      %719 = vadd.xlane.f32.xlu0 %v718
      %v720 = vpop.xlane.xlu0 %719
      %v721 = vsel %vm467, %v653, 0.0
      %722 = vadd.xlane.f32.xlu0 %v721
      %v723 = vpop.xlane.xlu0 %722
      %v724 = vsel %vm467, %v654, 0.0
      %725 = vadd.xlane.f32.xlu0 %v724
      %v726 = vpop.xlane.xlu0 %725
      %v727 = vsel %vm467, %v655, 0.0
      %728 = vadd.xlane.f32.xlu0 %v727
      %v729 = vpop.xlane.xlu0 %728
      %v730 = vsel %vm467, %v656, 0.0
      %731 = vadd.xlane.f32.xlu0 %v730
      %v732 = vpop.xlane.xlu0 %731
      %v733 = vsel %vm467, %v657, 0.0
      %734 = vadd.xlane.f32.xlu0 %v733
      %v735 = vpop.xlane.xlu0 %734
      %v736 = vsel %vm467, %v658, 0.0
      %737 = vadd.xlane.f32.xlu0 %v736
      %v738 = vpop.xlane.xlu0 %737
      %v739 = vsel %vm467, %v659, 0.0
      %740 = vadd.xlane.f32.xlu0 %v739
      %v741 = vpop.xlane.xlu0 %740
      %v742 = vsel %vm467, %v660, 0.0
      %743 = vadd.xlane.f32.xlu0 %v742
      %v744 = vpop.xlane.xlu0 %743
      %v745 = vsel %vm467, %v661, 0.0
      %746 = vadd.xlane.f32.xlu0 %v745
      %v747 = vpop.xlane.xlu0 %746
      %v748 = vsel %vm467, %v662, 0.0
      %749 = vadd.xlane.f32.xlu0 %v748
      %v750 = vpop.xlane.xlu0 %749
      %v751 = vsel %vm467, %v663, 0.0
      %752 = vadd.xlane.f32.xlu0 %v751
      %v753 = vpop.xlane.xlu0 %752
      %v754 = vsel %vm467, %v664, 0.0
      %755 = vadd.xlane.f32.xlu0 %v754
      %v756 = vpop.xlane.xlu0 %755
      %v757 = vsel %vm467, %v665, 0.0
      %758 = vadd.xlane.f32.xlu0 %v757
      %v759 = vpop.xlane.xlu0 %758
      %v760 = vsel %vm467, %v666, 0.0
      %761 = vadd.xlane.f32.xlu0 %v760
      %v762 = vpop.xlane.xlu0 %761
      %v763 = vmul.f32 %v669, %v570
      %v764 = vmul.f32 %v672, %v570
      %v765 = vmul.f32 %v675, %v570
      %v766 = vmul.f32 %v678, %v570
      %v767 = vmul.f32 %v681, %v570
      %v768 = vmul.f32 %v684, %v570
      %v769 = vmul.f32 %v687, %v570
      %v770 = vmul.f32 %v690, %v570
      %v771 = vmul.f32 %v693, %v570
      %v772 = vmul.f32 %v696, %v570
      %v773 = vmul.f32 %v699, %v570
      %v774 = vmul.f32 %v702, %v570
      %v775 = vmul.f32 %v705, %v570
      %v776 = vmul.f32 %v708, %v570
      %v777 = vmul.f32 %v711, %v570
      %v778 = vmul.f32 %v714, %v570
      %v779 = vmul.f32 %v717, %v570
      %v780 = vmul.f32 %v720, %v570
      %v781 = vmul.f32 %v723, %v570
      %v782 = vmul.f32 %v726, %v570
      %v783 = vmul.f32 %v729, %v570
      %v784 = vmul.f32 %v732, %v570
      %v785 = vmul.f32 %v735, %v570
      %v786 = vmul.f32 %v738, %v570
      %v787 = vmul.f32 %v741, %v570
      %v788 = vmul.f32 %v744, %v570
      %v789 = vmul.f32 %v747, %v570
      %v790 = vmul.f32 %v750, %v570
      %v791 = vmul.f32 %v753, %v570
      %v792 = vmul.f32 %v756, %v570
      %v793 = vmul.f32 %v759, %v570
      %v794 = vmul.f32 %v762, %v570
      %v795 = vadd.f32 %v763, 1e-05
      %v796 = vadd.f32 %v764, 1e-05
      %v797 = vadd.f32 %v765, 1e-05
      %v798 = vadd.f32 %v766, 1e-05
      %v799 = vadd.f32 %v767, 1e-05
      %v800 = vadd.f32 %v768, 1e-05
      %v801 = vadd.f32 %v769, 1e-05
      %v802 = vadd.f32 %v770, 1e-05
      %v803 = vadd.f32 %v771, 1e-05
      %v804 = vadd.f32 %v772, 1e-05
      %v805 = vadd.f32 %v773, 1e-05
      %v806 = vadd.f32 %v774, 1e-05
      %v807 = vadd.f32 %v775, 1e-05
      %v808 = vadd.f32 %v776, 1e-05
      %v809 = vadd.f32 %v777, 1e-05
      %v810 = vadd.f32 %v778, 1e-05
      %v811 = vadd.f32 %v779, 1e-05
      %v812 = vadd.f32 %v780, 1e-05
      %v813 = vadd.f32 %v781, 1e-05
      %v814 = vadd.f32 %v782, 1e-05
      %v815 = vadd.f32 %v783, 1e-05
      %v816 = vadd.f32 %v784, 1e-05
      %v817 = vadd.f32 %v785, 1e-05
      %v818 = vadd.f32 %v786, 1e-05
      %v819 = vadd.f32 %v787, 1e-05
      %v820 = vadd.f32 %v788, 1e-05
      %v821 = vadd.f32 %v789, 1e-05
      %v822 = vadd.f32 %v790, 1e-05
      %v823 = vadd.f32 %v791, 1e-05
      %v824 = vadd.f32 %v792, 1e-05
      %v825 = vadd.f32 %v793, 1e-05
      %v826 = vadd.f32 %v794, 1e-05
      %v827 = vrsqrt.pop %v795
      %v828 = vmul.f32 %v827, %v795
      %v829 = vmul.f32 %v828, %v827
      %v830 = vmul.f32 0.5, %v829
      %v831 = vsub.f32 1.5, %v830
      %v832 = vmul.f32 %v827, %v831
      %vm833 = vweird.f32 %v795
      %vm834 = vweird.f32 %v827
      %vm835 = vmor %vm833, %vm834
      %v836 = vsel %vm835, %v827, %v832
      %v837 = vrsqrt.pop %v796
      %v838 = vmul.f32 %v837, %v796
      %v839 = vmul.f32 %v838, %v837
      %v840 = vmul.f32 0.5, %v839
      %v841 = vsub.f32 1.5, %v840
      %v842 = vmul.f32 %v837, %v841
      %vm843 = vweird.f32 %v796
      %vm844 = vweird.f32 %v837
      %vm845 = vmor %vm843, %vm844
      %v846 = vsel %vm845, %v837, %v842
      %v847 = vrsqrt.pop %v797
      %v848 = vmul.f32 %v847, %v797
      %v849 = vmul.f32 %v848, %v847
      %v850 = vmul.f32 0.5, %v849
      %v851 = vsub.f32 1.5, %v850
      %v852 = vmul.f32 %v847, %v851
      %vm853 = vweird.f32 %v797
      %vm854 = vweird.f32 %v847
      %vm855 = vmor %vm853, %vm854
      %v856 = vsel %vm855, %v847, %v852
      %v857 = vrsqrt.pop %v798
      %v858 = vmul.f32 %v857, %v798
      %v859 = vmul.f32 %v858, %v857
      %v860 = vmul.f32 0.5, %v859
      %v861 = vsub.f32 1.5, %v860
      %v862 = vmul.f32 %v857, %v861
      %vm863 = vweird.f32 %v798
      %vm864 = vweird.f32 %v857
      %vm865 = vmor %vm863, %vm864
      %v866 = vsel %vm865, %v857, %v862
      %v867 = vrsqrt.pop %v799
      %v868 = vmul.f32 %v867, %v799
      %v869 = vmul.f32 %v868, %v867
      %v870 = vmul.f32 0.5, %v869
      %v871 = vsub.f32 1.5, %v870
      %v872 = vmul.f32 %v867, %v871
      %vm873 = vweird.f32 %v799
      %vm874 = vweird.f32 %v867
      %vm875 = vmor %vm873, %vm874
      %v876 = vsel %vm875, %v867, %v872
      %v877 = vrsqrt.pop %v800
      %v878 = vmul.f32 %v877, %v800
      %v879 = vmul.f32 %v878, %v877
      %v880 = vmul.f32 0.5, %v879
      %v881 = vsub.f32 1.5, %v880
      %v882 = vmul.f32 %v877, %v881
      %vm883 = vweird.f32 %v800
      %vm884 = vweird.f32 %v877
      %vm885 = vmor %vm883, %vm884
      %v886 = vsel %vm885, %v877, %v882
      %v887 = vrsqrt.pop %v801
      %v888 = vmul.f32 %v887, %v801
      %v889 = vmul.f32 %v888, %v887
      %v890 = vmul.f32 0.5, %v889
      %v891 = vsub.f32 1.5, %v890
      %v892 = vmul.f32 %v887, %v891
      %vm893 = vweird.f32 %v801
      %vm894 = vweird.f32 %v887
      %vm895 = vmor %vm893, %vm894
      %v896 = vsel %vm895, %v887, %v892
      %v897 = vrsqrt.pop %v802
      %v898 = vmul.f32 %v897, %v802
      %v899 = vmul.f32 %v898, %v897
      %v900 = vmul.f32 0.5, %v899
      %v901 = vsub.f32 1.5, %v900
      %v902 = vmul.f32 %v897, %v901
      %vm903 = vweird.f32 %v802
      %vm904 = vweird.f32 %v897
      %vm905 = vmor %vm903, %vm904
      %v906 = vsel %vm905, %v897, %v902
      %v907 = vrsqrt.pop %v803
      %v908 = vmul.f32 %v907, %v803
      %v909 = vmul.f32 %v908, %v907
      %v910 = vmul.f32 0.5, %v909
      %v911 = vsub.f32 1.5, %v910
      %v912 = vmul.f32 %v907, %v911
      %vm913 = vweird.f32 %v803
      %vm914 = vweird.f32 %v907
      %vm915 = vmor %vm913, %vm914
      %v916 = vsel %vm915, %v907, %v912
      %v917 = vrsqrt.pop %v804
      %v918 = vmul.f32 %v917, %v804
      %v919 = vmul.f32 %v918, %v917
      %v920 = vmul.f32 0.5, %v919
      %v921 = vsub.f32 1.5, %v920
      %v922 = vmul.f32 %v917, %v921
      %vm923 = vweird.f32 %v804
      %vm924 = vweird.f32 %v917
      %vm925 = vmor %vm923, %vm924
      %v926 = vsel %vm925, %v917, %v922
      %v927 = vrsqrt.pop %v805
      %v928 = vmul.f32 %v927, %v805
      %v929 = vmul.f32 %v928, %v927
      %v930 = vmul.f32 0.5, %v929
      %v931 = vsub.f32 1.5, %v930
      %v932 = vmul.f32 %v927, %v931
      %vm933 = vweird.f32 %v805
      %vm934 = vweird.f32 %v927
      %vm935 = vmor %vm933, %vm934
      %v936 = vsel %vm935, %v927, %v932
      %v937 = vrsqrt.pop %v806
      %v938 = vmul.f32 %v937, %v806
      %v939 = vmul.f32 %v938, %v937
      %v940 = vmul.f32 0.5, %v939
      %v941 = vsub.f32 1.5, %v940
      %v942 = vmul.f32 %v937, %v941
      %vm943 = vweird.f32 %v806
      %vm944 = vweird.f32 %v937
      %vm945 = vmor %vm943, %vm944
      %v946 = vsel %vm945, %v937, %v942
      %v947 = vrsqrt.pop %v807
      %v948 = vmul.f32 %v947, %v807
      %v949 = vmul.f32 %v948, %v947
      %v950 = vmul.f32 0.5, %v949
      %v951 = vsub.f32 1.5, %v950
      %v952 = vmul.f32 %v947, %v951
      %vm953 = vweird.f32 %v807
      %vm954 = vweird.f32 %v947
      %vm955 = vmor %vm953, %vm954
      %v956 = vsel %vm955, %v947, %v952
      %v957 = vrsqrt.pop %v808
      %v958 = vmul.f32 %v957, %v808
      %v959 = vmul.f32 %v958, %v957
      %v960 = vmul.f32 0.5, %v959
      %v961 = vsub.f32 1.5, %v960
      %v962 = vmul.f32 %v957, %v961
      %vm963 = vweird.f32 %v808
      %vm964 = vweird.f32 %v957
      %vm965 = vmor %vm963, %vm964
      %v966 = vsel %vm965, %v957, %v962
      %v967 = vrsqrt.pop %v809
      %v968 = vmul.f32 %v967, %v809
      %v969 = vmul.f32 %v968, %v967
      %v970 = vmul.f32 0.5, %v969
      %v971 = vsub.f32 1.5, %v970
      %v972 = vmul.f32 %v967, %v971
      %vm973 = vweird.f32 %v809
      %vm974 = vweird.f32 %v967
      %vm975 = vmor %vm973, %vm974
      %v976 = vsel %vm975, %v967, %v972
      %v977 = vrsqrt.pop %v810
      %v978 = vmul.f32 %v977, %v810
      %v979 = vmul.f32 %v978, %v977
      %v980 = vmul.f32 0.5, %v979
      %v981 = vsub.f32 1.5, %v980
      %v982 = vmul.f32 %v977, %v981
      %vm983 = vweird.f32 %v810
      %vm984 = vweird.f32 %v977
      %vm985 = vmor %vm983, %vm984
      %v986 = vsel %vm985, %v977, %v982
      %v987 = vrsqrt.pop %v811
      %v988 = vmul.f32 %v987, %v811
      %v989 = vmul.f32 %v988, %v987
      %v990 = vmul.f32 0.5, %v989
      %v991 = vsub.f32 1.5, %v990
      %v992 = vmul.f32 %v987, %v991
      %vm993 = vweird.f32 %v811
      %vm994 = vweird.f32 %v987
      %vm995 = vmor %vm993, %vm994
      %v996 = vsel %vm995, %v987, %v992
      %v997 = vrsqrt.pop %v812
      %v998 = vmul.f32 %v997, %v812
      %v999 = vmul.f32 %v998, %v997
      %v1000 = vmul.f32 0.5, %v999
      %v1001 = vsub.f32 1.5, %v1000
      %v1002 = vmul.f32 %v997, %v1001
      %vm1003 = vweird.f32 %v812
      %vm1004 = vweird.f32 %v997
      %vm1005 = vmor %vm1003, %vm1004
      %v1006 = vsel %vm1005, %v997, %v1002
      %v1007 = vrsqrt.pop %v813
      %v1008 = vmul.f32 %v1007, %v813
      %v1009 = vmul.f32 %v1008, %v1007
      %v1010 = vmul.f32 0.5, %v1009
      %v1011 = vsub.f32 1.5, %v1010
      %v1012 = vmul.f32 %v1007, %v1011
      %vm1013 = vweird.f32 %v813
      %vm1014 = vweird.f32 %v1007
      %vm1015 = vmor %vm1013, %vm1014
      %v1016 = vsel %vm1015, %v1007, %v1012
      %v1017 = vrsqrt.pop %v814
      %v1018 = vmul.f32 %v1017, %v814
      %v1019 = vmul.f32 %v1018, %v1017
      %v1020 = vmul.f32 0.5, %v1019
      %v1021 = vsub.f32 1.5, %v1020
      %v1022 = vmul.f32 %v1017, %v1021
      %vm1023 = vweird.f32 %v814
      %vm1024 = vweird.f32 %v1017
      %vm1025 = vmor %vm1023, %vm1024
      %v1026 = vsel %vm1025, %v1017, %v1022
      %v1027 = vrsqrt.pop %v815
      %v1028 = vmul.f32 %v1027, %v815
      %v1029 = vmul.f32 %v1028, %v1027
      %v1030 = vmul.f32 0.5, %v1029
      %v1031 = vsub.f32 1.5, %v1030
      %v1032 = vmul.f32 %v1027, %v1031
      %vm1033 = vweird.f32 %v815
      %vm1034 = vweird.f32 %v1027
      %vm1035 = vmor %vm1033, %vm1034
      %v1036 = vsel %vm1035, %v1027, %v1032
      %v1037 = vrsqrt.pop %v816
      %v1038 = vmul.f32 %v1037, %v816
      %v1039 = vmul.f32 %v1038, %v1037
      %v1040 = vmul.f32 0.5, %v1039
      %v1041 = vsub.f32 1.5, %v1040
      %v1042 = vmul.f32 %v1037, %v1041
      %vm1043 = vweird.f32 %v816
      %vm1044 = vweird.f32 %v1037
      %vm1045 = vmor %vm1043, %vm1044
      %v1046 = vsel %vm1045, %v1037, %v1042
      %v1047 = vrsqrt.pop %v817
      %v1048 = vmul.f32 %v1047, %v817
      %v1049 = vmul.f32 %v1048, %v1047
      %v1050 = vmul.f32 0.5, %v1049
      %v1051 = vsub.f32 1.5, %v1050
      %v1052 = vmul.f32 %v1047, %v1051
      %vm1053 = vweird.f32 %v817
      %vm1054 = vweird.f32 %v1047
      %vm1055 = vmor %vm1053, %vm1054
      %v1056 = vsel %vm1055, %v1047, %v1052
      %v1057 = vrsqrt.pop %v818
      %v1058 = vmul.f32 %v1057, %v818
      %v1059 = vmul.f32 %v1058, %v1057
      %v1060 = vmul.f32 0.5, %v1059
      %v1061 = vsub.f32 1.5, %v1060
      %v1062 = vmul.f32 %v1057, %v1061
      %vm1063 = vweird.f32 %v818
      %vm1064 = vweird.f32 %v1057
      %vm1065 = vmor %vm1063, %vm1064
      %v1066 = vsel %vm1065, %v1057, %v1062
      %v1067 = vrsqrt.pop %v819
      %v1068 = vmul.f32 %v1067, %v819
      %v1069 = vmul.f32 %v1068, %v1067
      %v1070 = vmul.f32 0.5, %v1069
      %v1071 = vsub.f32 1.5, %v1070
      %v1072 = vmul.f32 %v1067, %v1071
      %vm1073 = vweird.f32 %v819
      %vm1074 = vweird.f32 %v1067
      %vm1075 = vmor %vm1073, %vm1074
      %v1076 = vsel %vm1075, %v1067, %v1072
      %v1077 = vrsqrt.pop %v820
      %v1078 = vmul.f32 %v1077, %v820
      %v1079 = vmul.f32 %v1078, %v1077
      %v1080 = vmul.f32 0.5, %v1079
      %v1081 = vsub.f32 1.5, %v1080
      %v1082 = vmul.f32 %v1077, %v1081
      %vm1083 = vweird.f32 %v820
      %vm1084 = vweird.f32 %v1077
      %vm1085 = vmor %vm1083, %vm1084
      %v1086 = vsel %vm1085, %v1077, %v1082
      %v1087 = vrsqrt.pop %v821
      %v1088 = vmul.f32 %v1087, %v821
      %v1089 = vmul.f32 %v1088, %v1087
      %v1090 = vmul.f32 0.5, %v1089
      %v1091 = vsub.f32 1.5, %v1090
      %v1092 = vmul.f32 %v1087, %v1091
      %vm1093 = vweird.f32 %v821
      %vm1094 = vweird.f32 %v1087
      %vm1095 = vmor %vm1093, %vm1094
      %v1096 = vsel %vm1095, %v1087, %v1092
      %v1097 = vrsqrt.pop %v822
      %v1098 = vmul.f32 %v1097, %v822
      %v1099 = vmul.f32 %v1098, %v1097
      %v1100 = vmul.f32 0.5, %v1099
      %v1101 = vsub.f32 1.5, %v1100
      %v1102 = vmul.f32 %v1097, %v1101
      %vm1103 = vweird.f32 %v822
      %vm1104 = vweird.f32 %v1097
      %vm1105 = vmor %vm1103, %vm1104
      %v1106 = vsel %vm1105, %v1097, %v1102
      %v1107 = vrsqrt.pop %v823
      %v1108 = vmul.f32 %v1107, %v823
      %v1109 = vmul.f32 %v1108, %v1107
      %v1110 = vmul.f32 0.5, %v1109
      %v1111 = vsub.f32 1.5, %v1110
      %v1112 = vmul.f32 %v1107, %v1111
      %vm1113 = vweird.f32 %v823
      %vm1114 = vweird.f32 %v1107
      %vm1115 = vmor %vm1113, %vm1114
      %v1116 = vsel %vm1115, %v1107, %v1112
      %v1117 = vrsqrt.pop %v824
      %v1118 = vmul.f32 %v1117, %v824
      %v1119 = vmul.f32 %v1118, %v1117
      %v1120 = vmul.f32 0.5, %v1119
      %v1121 = vsub.f32 1.5, %v1120
      %v1122 = vmul.f32 %v1117, %v1121
      %vm1123 = vweird.f32 %v824
      %vm1124 = vweird.f32 %v1117
      %vm1125 = vmor %vm1123, %vm1124
      %v1126 = vsel %vm1125, %v1117, %v1122
      %v1127 = vrsqrt.pop %v825
      %v1128 = vmul.f32 %v1127, %v825
      %v1129 = vmul.f32 %v1128, %v1127
      %v1130 = vmul.f32 0.5, %v1129
      %v1131 = vsub.f32 1.5, %v1130
      %v1132 = vmul.f32 %v1127, %v1131
      %vm1133 = vweird.f32 %v825
      %vm1134 = vweird.f32 %v1127
      %vm1135 = vmor %vm1133, %vm1134
      %v1136 = vsel %vm1135, %v1127, %v1132
      %v1137 = vrsqrt.pop %v826
      %v1138 = vmul.f32 %v1137, %v826
      %v1139 = vmul.f32 %v1138, %v1137
      %v1140 = vmul.f32 0.5, %v1139
      %v1141 = vsub.f32 1.5, %v1140
      %v1142 = vmul.f32 %v1137, %v1141
      %vm1143 = vweird.f32 %v826
      %vm1144 = vweird.f32 %v1137
      %vm1145 = vmor %vm1143, %vm1144
      %v1146 = vsel %vm1145, %v1137, %v1142
      %v1147 = vmul.f32 %v603, %v836
      %v1148 = vmul.f32 %v604, %v846
      %v1149 = vmul.f32 %v605, %v856
      %v1150 = vmul.f32 %v606, %v866
      %v1151 = vmul.f32 %v607, %v876
      %v1152 = vmul.f32 %v608, %v886
      %v1153 = vmul.f32 %v609, %v896
      %v1154 = vmul.f32 %v610, %v906
      %v1155 = vmul.f32 %v611, %v916
      %v1156 = vmul.f32 %v612, %v926
      %v1157 = vmul.f32 %v613, %v936
      %v1158 = vmul.f32 %v614, %v946
      %v1159 = vmul.f32 %v615, %v956
      %v1160 = vmul.f32 %v616, %v966
      %v1161 = vmul.f32 %v617, %v976
      %v1162 = vmul.f32 %v618, %v986
      %v1163 = vmul.f32 %v619, %v996
      %v1164 = vmul.f32 %v620, %v1006
      %v1165 = vmul.f32 %v621, %v1016
      %v1166 = vmul.f32 %v622, %v1026
      %v1167 = vmul.f32 %v623, %v1036
      %v1168 = vmul.f32 %v624, %v1046
      %v1169 = vmul.f32 %v625, %v1056
      %v1170 = vmul.f32 %v626, %v1066
      %v1171 = vmul.f32 %v627, %v1076
      %v1172 = vmul.f32 %v628, %v1086
      %v1173 = vmul.f32 %v629, %v1096
      %v1174 = vmul.f32 %v630, %v1106
      %v1175 = vmul.f32 %v631, %v1116
      %v1176 = vmul.f32 %v632, %v1126
      %v1177 = vmul.f32 %v633, %v1136
      %v1178 = vmul.f32 %v634, %v1146
      %v1179 = vperm.slane %v466, 0
      %v1180 = vmul.f32 %v1147, %v1179
      %v1181 = vmul.f32 %v1148, %v1179
      %v1182 = vmul.f32 %v1149, %v1179
      %v1183 = vmul.f32 %v1150, %v1179
      %v1184 = vmul.f32 %v1151, %v1179
      %v1185 = vmul.f32 %v1152, %v1179
      %v1186 = vmul.f32 %v1153, %v1179
      %v1187 = vmul.f32 %v1154, %v1179
      %v1188 = vmul.f32 %v1155, %v1179
      %v1189 = vmul.f32 %v1156, %v1179
      %v1190 = vmul.f32 %v1157, %v1179
      %v1191 = vmul.f32 %v1158, %v1179
      %v1192 = vmul.f32 %v1159, %v1179
      %v1193 = vmul.f32 %v1160, %v1179
      %v1194 = vmul.f32 %v1161, %v1179
      %v1195 = vmul.f32 %v1162, %v1179
      %v1196 = vmul.f32 %v1163, %v1179
      %v1197 = vmul.f32 %v1164, %v1179
      %v1198 = vmul.f32 %v1165, %v1179
      %v1199 = vmul.f32 %v1166, %v1179
      %v1200 = vmul.f32 %v1167, %v1179
      %v1201 = vmul.f32 %v1168, %v1179
      %v1202 = vmul.f32 %v1169, %v1179
      %v1203 = vmul.f32 %v1170, %v1179
      %v1204 = vmul.f32 %v1171, %v1179
      %v1205 = vmul.f32 %v1172, %v1179
      %v1206 = vmul.f32 %v1173, %v1179
      %v1207 = vmul.f32 %v1174, %v1179
      %v1208 = vmul.f32 %v1175, %v1179
      %v1209 = vmul.f32 %v1176, %v1179
      %v1210 = vmul.f32 %v1177, %v1179
      %v1211 = vmul.f32 %v1178, %v1179
      %v1212 = vperm.slane %v466, 1
      %v1213 = vadd.f32 %v1180, %v1212
      %v1214 = vadd.f32 %v1181, %v1212
      %v1215 = vadd.f32 %v1182, %v1212
      %v1216 = vadd.f32 %v1183, %v1212
      %v1217 = vadd.f32 %v1184, %v1212
      %v1218 = vadd.f32 %v1185, %v1212
      %v1219 = vadd.f32 %v1186, %v1212
      %v1220 = vadd.f32 %v1187, %v1212
      %v1221 = vadd.f32 %v1188, %v1212
      %v1222 = vadd.f32 %v1189, %v1212
      %v1223 = vadd.f32 %v1190, %v1212
      %v1224 = vadd.f32 %v1191, %v1212
      %v1225 = vadd.f32 %v1192, %v1212
      %v1226 = vadd.f32 %v1193, %v1212
      %v1227 = vadd.f32 %v1194, %v1212
      %v1228 = vadd.f32 %v1195, %v1212
      %v1229 = vadd.f32 %v1196, %v1212
      %v1230 = vadd.f32 %v1197, %v1212
      %v1231 = vadd.f32 %v1198, %v1212
      %v1232 = vadd.f32 %v1199, %v1212
      %v1233 = vadd.f32 %v1200, %v1212
      %v1234 = vadd.f32 %v1201, %v1212
      %v1235 = vadd.f32 %v1202, %v1212
      %v1236 = vadd.f32 %v1203, %v1212
      %v1237 = vadd.f32 %v1204, %v1212
      %v1238 = vadd.f32 %v1205, %v1212
      %v1239 = vadd.f32 %v1206, %v1212
      %v1240 = vadd.f32 %v1207, %v1212
      %v1241 = vadd.f32 %v1208, %v1212
      %v1242 = vadd.f32 %v1209, %v1212
      %v1243 = vadd.f32 %v1210, %v1212
      %v1244 = vadd.f32 %v1211, %v1212
      %v1245 = vld [vmem:[%s2] sm:$0xff]
      %v1246 = vld [vmem:[%s2 + $0x8] sm:$0xff]
      %v1247 = vld [vmem:[%s2 + $0x10] sm:$0xff]
      %v1248 = vld [vmem:[%s2 + $0x18] sm:$0xff]
      %v1249 = vperm.slane %v466, 2
      %v1251 = vsel %vm467, %v1213, 0
      %v1254 = vsel %vm467, %v1214, 0
      %v1257 = vsel %vm467, %v1215, 0
      %v1260 = vsel %vm467, %v1216, 0
      %v1263 = vsel %vm467, %v1217, 0
      %v1266 = vsel %vm467, %v1218, 0
      %v1269 = vsel %vm467, %v1219, 0
      %v1272 = vsel %vm467, %v1220, 0
      %v1275 = vsel %vm467, %v1221, 0
      %v1278 = vsel %vm467, %v1222, 0
      %v1281 = vsel %vm467, %v1223, 0
      %v1284 = vsel %vm467, %v1224, 0
      %v1287 = vsel %vm467, %v1225, 0
      %v1290 = vsel %vm467, %v1226, 0
      %v1293 = vsel %vm467, %v1227, 0
      %v1296 = vsel %vm467, %v1228, 0
      %v1299 = vsel %vm467, %v1229, 0
      %v1302 = vsel %vm467, %v1230, 0
      %v1305 = vsel %vm467, %v1231, 0
      %v1308 = vsel %vm467, %v1232, 0
      %v1311 = vsel %vm467, %v1233, 0
      %v1314 = vsel %vm467, %v1234, 0
      %v1317 = vsel %vm467, %v1235, 0
      %v1320 = vsel %vm467, %v1236, 0
      %v1323 = vsel %vm467, %v1237, 0
      %v1326 = vsel %vm467, %v1238, 0
      %v1329 = vsel %vm467, %v1239, 0
      %v1332 = vsel %vm467, %v1240, 0
      %v1335 = vsel %vm467, %v1241, 0
      %v1338 = vsel %vm467, %v1242, 0
      %v1341 = vsel %vm467, %v1243, 0
      %v1344 = vsel %vm467, %v1244, 0
      %1346 = vmatpush.msra.mxu0 0.0
      %1347 = vmatpush.msra.mxu0 0.0
      %1348 = vmatpush.msra.mxu0 0.0
      %1349 = vmatpush.msra.mxu0 0.0
      %1350 = vmatpush.msra.mxu0 0.0
      %1351 = vmatpush.msra.mxu0 0.0
      %1352 = vmatpush.msra.mxu0 0.0
      %1353 = vmatpush.msra.mxu0 0.0
      %1354 = vmatpush.msra.mxu0 0.0
      %1355 = vmatpush.msra.mxu0 0.0
      %1356 = vmatpush.msra.mxu0 0.0
      %1357 = vmatpush.msra.mxu0 0.0
      %1358 = vmatpush.msra.mxu0 %v1248
      %1359 = vmatpush.msra.mxu0 %v1247
      %1360 = vmatpush.msra.mxu0 %v1246
      %1361 = vmatpush.msra.mxu0 %v1245
      %1362 = vmatmul.f32.gmra.mxu0 %v1251
      %v1363 = vpop.f32.mrf.mxu0
      %v1364 = vadd.f32 %v1249, %v1363
      %1365 = vmatmul.f32.gmra.mxu0 %v1254
      %v1366 = vpop.f32.mrf.mxu0
      %v1367 = vadd.f32 %v1249, %v1366
      %1368 = vmatmul.f32.gmra.mxu0 %v1257
      %v1369 = vpop.f32.mrf.mxu0
      %v1370 = vadd.f32 %v1249, %v1369
      %1371 = vmatmul.f32.gmra.mxu0 %v1260
      %v1372 = vpop.f32.mrf.mxu0
      %v1373 = vadd.f32 %v1249, %v1372
      %1374 = vmatmul.f32.gmra.mxu0 %v1263
      %v1375 = vpop.f32.mrf.mxu0
      %v1376 = vadd.f32 %v1249, %v1375
      %1377 = vmatmul.f32.gmra.mxu0 %v1266
      %v1378 = vpop.f32.mrf.mxu0
      %v1379 = vadd.f32 %v1249, %v1378
      %1380 = vmatmul.f32.gmra.mxu0 %v1269
      %v1381 = vpop.f32.mrf.mxu0
      %v1382 = vadd.f32 %v1249, %v1381
      %1383 = vmatmul.f32.gmra.mxu0 %v1272
      %v1384 = vpop.f32.mrf.mxu0
      %v1385 = vadd.f32 %v1249, %v1384
      %1386 = vmatmul.f32.gmra.mxu0 %v1275
      %v1387 = vpop.f32.mrf.mxu0
      %v1388 = vadd.f32 %v1249, %v1387
      %1389 = vmatmul.f32.gmra.mxu0 %v1278
      %v1390 = vpop.f32.mrf.mxu0
      %v1391 = vadd.f32 %v1249, %v1390
      %1392 = vmatmul.f32.gmra.mxu0 %v1281
      %v1393 = vpop.f32.mrf.mxu0
      %v1394 = vadd.f32 %v1249, %v1393
      %1395 = vmatmul.f32.gmra.mxu0 %v1284
      %v1396 = vpop.f32.mrf.mxu0
      %v1397 = vadd.f32 %v1249, %v1396
      %1398 = vmatmul.f32.gmra.mxu0 %v1287
      %v1399 = vpop.f32.mrf.mxu0
      %v1400 = vadd.f32 %v1249, %v1399
      %1401 = vmatmul.f32.gmra.mxu0 %v1290
      %v1402 = vpop.f32.mrf.mxu0
      %v1403 = vadd.f32 %v1249, %v1402
      %1404 = vmatmul.f32.gmra.mxu0 %v1293
      %v1405 = vpop.f32.mrf.mxu0
      %v1406 = vadd.f32 %v1249, %v1405
      %1407 = vmatmul.f32.gmra.mxu0 %v1296
      %v1408 = vpop.f32.mrf.mxu0
      %v1409 = vadd.f32 %v1249, %v1408
      %1410 = vmatmul.f32.gmra.mxu0 %v1299
      %v1411 = vpop.f32.mrf.mxu0
      %v1412 = vadd.f32 %v1249, %v1411
      %1413 = vmatmul.f32.gmra.mxu0 %v1302
      %v1414 = vpop.f32.mrf.mxu0
      %v1415 = vadd.f32 %v1249, %v1414
      %1416 = vmatmul.f32.gmra.mxu0 %v1305
      %v1417 = vpop.f32.mrf.mxu0
      %v1418 = vadd.f32 %v1249, %v1417
      %1419 = vmatmul.f32.gmra.mxu0 %v1308
      %v1420 = vpop.f32.mrf.mxu0
      %v1421 = vadd.f32 %v1249, %v1420
      %1422 = vmatmul.f32.gmra.mxu0 %v1311
      %v1423 = vpop.f32.mrf.mxu0
      %v1424 = vadd.f32 %v1249, %v1423
      %1425 = vmatmul.f32.gmra.mxu0 %v1314
      %v1426 = vpop.f32.mrf.mxu0
      %v1427 = vadd.f32 %v1249, %v1426
      %1428 = vmatmul.f32.gmra.mxu0 %v1317
      %v1429 = vpop.f32.mrf.mxu0
      %v1430 = vadd.f32 %v1249, %v1429
      %1431 = vmatmul.f32.gmra.mxu0 %v1320
      %v1432 = vpop.f32.mrf.mxu0
      %v1433 = vadd.f32 %v1249, %v1432
      %1434 = vmatmul.f32.gmra.mxu0 %v1323
      %v1435 = vpop.f32.mrf.mxu0
      %v1436 = vadd.f32 %v1249, %v1435
      %1437 = vmatmul.f32.gmra.mxu0 %v1326
      %v1438 = vpop.f32.mrf.mxu0
      %v1439 = vadd.f32 %v1249, %v1438
      %1440 = vmatmul.f32.gmra.mxu0 %v1329
      %v1441 = vpop.f32.mrf.mxu0
      %v1442 = vadd.f32 %v1249, %v1441
      %1443 = vmatmul.f32.gmra.mxu0 %v1332
      %v1444 = vpop.f32.mrf.mxu0
      %v1445 = vadd.f32 %v1249, %v1444
      %1446 = vmatmul.f32.gmra.mxu0 %v1335
      %v1447 = vpop.f32.mrf.mxu0
      %v1448 = vadd.f32 %v1249, %v1447
      %1449 = vmatmul.f32.gmra.mxu0 %v1338
      %v1450 = vpop.f32.mrf.mxu0
      %v1451 = vadd.f32 %v1249, %v1450
      %1452 = vmatmul.f32.gmra.mxu0 %v1341
      %v1453 = vpop.f32.mrf.mxu0
      %v1454 = vadd.f32 %v1249, %v1453
      %1455 = vmatmul.f32.gmra.mxu0 %v1344
      %v1456 = vpop.f32.mrf.mxu0
      %v1457 = vadd.f32 %v1249, %v1456
      %1458 = vdwg.mxu0
      %v1459 = vld [vmem:[%s6] sm:$0xf]
      %v1460 = vld [vmem:[%s10] sm:$0xff]
      %v1461 = vld [vmem:[%s10 + $0x8] sm:$0xff]
      %v1462 = vld [vmem:[%s10 + $0x10] sm:$0xff]
      %v1463 = vld [vmem:[%s10 + $0x18] sm:$0xff]
      %v1464 = vld [vmem:[%s10 + $0x20] sm:$0xff]
      %v1465 = vld [vmem:[%s10 + $0x28] sm:$0xff]
      %v1466 = vld [vmem:[%s10 + $0x30] sm:$0xff]
      %v1467 = vld [vmem:[%s10 + $0x38] sm:$0xff]
      %v1468 = vld [vmem:[%s10 + $0x40] sm:$0xff]
      %v1469 = vld [vmem:[%s10 + $0x48] sm:$0xff]
      %v1470 = vld [vmem:[%s10 + $0x50] sm:$0xff]
      %v1471 = vld [vmem:[%s10 + $0x58] sm:$0xff]
      %v1472 = vld [vmem:[%s10 + $0x60] sm:$0xff]
      %v1473 = vld [vmem:[%s10 + $0x68] sm:$0xff]
      %v1474 = vld [vmem:[%s10 + $0x70] sm:$0xff]
      %v1475 = vld [vmem:[%s10 + $0x78] sm:$0xff]
      %v1476 = vld [vmem:[%s10 + $0x80] sm:$0xff]
      %v1477 = vld [vmem:[%s10 + $0x88] sm:$0xff]
      %v1478 = vld [vmem:[%s10 + $0x90] sm:$0xff]
      %v1479 = vld [vmem:[%s10 + $0x98] sm:$0xff]
      %v1480 = vld [vmem:[%s10 + $0xa0] sm:$0xff]
      %v1481 = vld [vmem:[%s10 + $0xa8] sm:$0xff]
      %v1482 = vld [vmem:[%s10 + $0xb0] sm:$0xff]
      %v1483 = vld [vmem:[%s10 + $0xb8] sm:$0xff]
      %v1484 = vld [vmem:[%s10 + $0xc0] sm:$0xff]
      %v1485 = vld [vmem:[%s10 + $0xc8] sm:$0xff]
      %v1486 = vld [vmem:[%s10 + $0xd0] sm:$0xff]
      %v1487 = vld [vmem:[%s10 + $0xd8] sm:$0xff]
      %v1488 = vld [vmem:[%s10 + $0xe0] sm:$0xff]
      %v1489 = vld [vmem:[%s10 + $0xe8] sm:$0xff]
      %v1490 = vld [vmem:[%s10 + $0xf0] sm:$0xff]
      %v1491 = vld [vmem:[%s10 + $0xf8] sm:$0xff]
      %1524 = vrot.lane.b32.xlu0 %v1364, 32
      %v1525 = vpop.permute.xlu0 %1524
      %1526 = vrot.lane.b32.xlu0 %v1367, 32
      %v1527 = vpop.permute.xlu0 %1526
      %1528 = vrot.lane.b32.xlu0 %v1370, 32
      %v1529 = vpop.permute.xlu0 %1528
      %1530 = vrot.lane.b32.xlu0 %v1373, 32
      %v1531 = vpop.permute.xlu0 %1530
      %1532 = vrot.lane.b32.xlu0 %v1376, 32
      %v1533 = vpop.permute.xlu0 %1532
      %1534 = vrot.lane.b32.xlu0 %v1379, 32
      %v1535 = vpop.permute.xlu0 %1534
      %1536 = vrot.lane.b32.xlu0 %v1382, 32
      %v1537 = vpop.permute.xlu0 %1536
      %1538 = vrot.lane.b32.xlu0 %v1385, 32
      %v1539 = vpop.permute.xlu0 %1538
      %1540 = vrot.lane.b32.xlu0 %v1388, 32
      %v1541 = vpop.permute.xlu0 %1540
      %1542 = vrot.lane.b32.xlu0 %v1391, 32
      %v1543 = vpop.permute.xlu0 %1542
      %1544 = vrot.lane.b32.xlu0 %v1394, 32
      %v1545 = vpop.permute.xlu0 %1544
      %1546 = vrot.lane.b32.xlu0 %v1397, 32
      %v1547 = vpop.permute.xlu0 %1546
      %1548 = vrot.lane.b32.xlu0 %v1400, 32
      %v1549 = vpop.permute.xlu0 %1548
      %1550 = vrot.lane.b32.xlu0 %v1403, 32
      %v1551 = vpop.permute.xlu0 %1550
      %1552 = vrot.lane.b32.xlu0 %v1406, 32
      %v1553 = vpop.permute.xlu0 %1552
      %1554 = vrot.lane.b32.xlu0 %v1409, 32
      %v1555 = vpop.permute.xlu0 %1554
      %1556 = vrot.lane.b32.xlu0 %v1412, 32
      %v1557 = vpop.permute.xlu0 %1556
      %1558 = vrot.lane.b32.xlu0 %v1415, 32
      %v1559 = vpop.permute.xlu0 %1558
      %1560 = vrot.lane.b32.xlu0 %v1418, 32
      %v1561 = vpop.permute.xlu0 %1560
      %1562 = vrot.lane.b32.xlu0 %v1421, 32
      %v1563 = vpop.permute.xlu0 %1562
      %1564 = vrot.lane.b32.xlu0 %v1424, 32
      %v1565 = vpop.permute.xlu0 %1564
      %1566 = vrot.lane.b32.xlu0 %v1427, 32
      %v1567 = vpop.permute.xlu0 %1566
      %1568 = vrot.lane.b32.xlu0 %v1430, 32
      %v1569 = vpop.permute.xlu0 %1568
      %1570 = vrot.lane.b32.xlu0 %v1433, 32
      %v1571 = vpop.permute.xlu0 %1570
      %1572 = vrot.lane.b32.xlu0 %v1436, 32
      %v1573 = vpop.permute.xlu0 %1572
      %1574 = vrot.lane.b32.xlu0 %v1439, 32
      %v1575 = vpop.permute.xlu0 %1574
      %1576 = vrot.lane.b32.xlu0 %v1442, 32
      %v1577 = vpop.permute.xlu0 %1576
      %1578 = vrot.lane.b32.xlu0 %v1445, 32
      %v1579 = vpop.permute.xlu0 %1578
      %1580 = vrot.lane.b32.xlu0 %v1448, 32
      %v1581 = vpop.permute.xlu0 %1580
      %1582 = vrot.lane.b32.xlu0 %v1451, 32
      %v1583 = vpop.permute.xlu0 %1582
      %1584 = vrot.lane.b32.xlu0 %v1454, 32
      %v1585 = vpop.permute.xlu0 %1584
      %1586 = vrot.lane.b32.xlu0 %v1457, 32
      %v1587 = vpop.permute.xlu0 %1586
      %vm1588 = vcmask 31744
      %v1589 = vsel %vm1588, %v1525, 0
      %v1591 = vsel %vm1588, %v1527, 0
      %v1593 = vsel %vm1588, %v1529, 0
      %v1595 = vsel %vm1588, %v1531, 0
      %v1597 = vsel %vm1588, %v1533, 0
      %v1599 = vsel %vm1588, %v1535, 0
      %v1601 = vsel %vm1588, %v1537, 0
      %v1603 = vsel %vm1588, %v1539, 0
      %v1605 = vsel %vm1588, %v1541, 0
      %v1607 = vsel %vm1588, %v1543, 0
      %v1609 = vsel %vm1588, %v1545, 0
      %v1611 = vsel %vm1588, %v1547, 0
      %v1613 = vsel %vm1588, %v1549, 0
      %v1615 = vsel %vm1588, %v1551, 0
      %v1617 = vsel %vm1588, %v1553, 0
      %v1619 = vsel %vm1588, %v1555, 0
      %v1621 = vsel %vm1588, %v1557, 0
      %v1623 = vsel %vm1588, %v1559, 0
      %v1625 = vsel %vm1588, %v1561, 0
      %v1627 = vsel %vm1588, %v1563, 0
      %v1629 = vsel %vm1588, %v1565, 0
      %v1631 = vsel %vm1588, %v1567, 0
      %v1633 = vsel %vm1588, %v1569, 0
      %v1635 = vsel %vm1588, %v1571, 0
      %v1637 = vsel %vm1588, %v1573, 0
      %v1639 = vsel %vm1588, %v1575, 0
      %v1641 = vsel %vm1588, %v1577, 0
      %v1643 = vsel %vm1588, %v1579, 0
      %v1645 = vsel %vm1588, %v1581, 0
      %v1647 = vsel %vm1588, %v1583, 0
      %v1649 = vsel %vm1588, %v1585, 0
      %v1651 = vsel %vm1588, %v1587, 0
      %vm1653 = vcmask 1043456
      %v1655 = vsel %vm1653, %v1459, 0
      %1657 = vmatpush.msra.mxu0 0.0
      %1658 = vmatpush.msra.mxu0 0.0
      %1659 = vmatpush.msra.mxu0 0.0
      %1660 = vmatpush.msra.mxu0 0.0
      %1661 = vmatpush.msra.mxu0 0.0
      %1662 = vmatpush.msra.mxu0 0.0
      %1663 = vmatpush.msra.mxu0 0.0
      %1664 = vmatpush.msra.mxu0 0.0
      %1665 = vmatpush.msra.mxu0 0.0
      %1666 = vmatpush.msra.mxu0 0.0
      %1667 = vmatpush.msra.mxu0 0.0
      %1668 = vmatpush.msra.mxu0 0.0
      %1669 = vmatpush.msra.mxu0 0.0
      %1670 = vmatpush.msra.mxu0 0.0
      %1671 = vmatpush.msra.mxu0 0.0
      %1672 = vmatpush.msra.mxu0 %v1655
      %1673 = vmatmul.f32.gmra.mxu0 %v1589
      %v1674 = vpop.f32.mrf.mxu0
      %v1675 = vadd.f32 0.0, %v1674
      %1676 = vmatmul.f32.gmra.mxu0 %v1591
      %v1677 = vpop.f32.mrf.mxu0
      %v1678 = vadd.f32 0.0, %v1677
      %1679 = vmatmul.f32.gmra.mxu0 %v1593
      %v1680 = vpop.f32.mrf.mxu0
      %v1681 = vadd.f32 0.0, %v1680
      %1682 = vmatmul.f32.gmra.mxu0 %v1595
      %v1683 = vpop.f32.mrf.mxu0
      %v1684 = vadd.f32 0.0, %v1683
      %1685 = vmatmul.f32.gmra.mxu0 %v1597
      %v1686 = vpop.f32.mrf.mxu0
      %v1687 = vadd.f32 0.0, %v1686
      %1688 = vmatmul.f32.gmra.mxu0 %v1599
      %v1689 = vpop.f32.mrf.mxu0
      %v1690 = vadd.f32 0.0, %v1689
      %1691 = vmatmul.f32.gmra.mxu0 %v1601
      %v1692 = vpop.f32.mrf.mxu0
      %v1693 = vadd.f32 0.0, %v1692
      %1694 = vmatmul.f32.gmra.mxu0 %v1603
      %v1695 = vpop.f32.mrf.mxu0
      %v1696 = vadd.f32 0.0, %v1695
      %1697 = vmatmul.f32.gmra.mxu0 %v1605
      %v1698 = vpop.f32.mrf.mxu0
      %v1699 = vadd.f32 0.0, %v1698
      %1700 = vmatmul.f32.gmra.mxu0 %v1607
      %v1701 = vpop.f32.mrf.mxu0
      %v1702 = vadd.f32 0.0, %v1701
      %1703 = vmatmul.f32.gmra.mxu0 %v1609
      %v1704 = vpop.f32.mrf.mxu0
      %v1705 = vadd.f32 0.0, %v1704
      %1706 = vmatmul.f32.gmra.mxu0 %v1611
      %v1707 = vpop.f32.mrf.mxu0
      %v1708 = vadd.f32 0.0, %v1707
      %1709 = vmatmul.f32.gmra.mxu0 %v1613
      %v1710 = vpop.f32.mrf.mxu0
      %v1711 = vadd.f32 0.0, %v1710
      %1712 = vmatmul.f32.gmra.mxu0 %v1615
      %v1713 = vpop.f32.mrf.mxu0
      %v1714 = vadd.f32 0.0, %v1713
      %1715 = vmatmul.f32.gmra.mxu0 %v1617
      %v1716 = vpop.f32.mrf.mxu0
      %v1717 = vadd.f32 0.0, %v1716
      %1718 = vmatmul.f32.gmra.mxu0 %v1619
      %v1719 = vpop.f32.mrf.mxu0
      %v1720 = vadd.f32 0.0, %v1719
      %1721 = vmatmul.f32.gmra.mxu0 %v1621
      %v1722 = vpop.f32.mrf.mxu0
      %v1723 = vadd.f32 0.0, %v1722
      %1724 = vmatmul.f32.gmra.mxu0 %v1623
      %v1725 = vpop.f32.mrf.mxu0
      %v1726 = vadd.f32 0.0, %v1725
      %1727 = vmatmul.f32.gmra.mxu0 %v1625
      %v1728 = vpop.f32.mrf.mxu0
      %v1729 = vadd.f32 0.0, %v1728
      %1730 = vmatmul.f32.gmra.mxu0 %v1627
      %v1731 = vpop.f32.mrf.mxu0
      %v1732 = vadd.f32 0.0, %v1731
      %1733 = vmatmul.f32.gmra.mxu0 %v1629
      %v1734 = vpop.f32.mrf.mxu0
      %v1735 = vadd.f32 0.0, %v1734
      %1736 = vmatmul.f32.gmra.mxu0 %v1631
      %v1737 = vpop.f32.mrf.mxu0
      %v1738 = vadd.f32 0.0, %v1737
      %1739 = vmatmul.f32.gmra.mxu0 %v1633
      %v1740 = vpop.f32.mrf.mxu0
      %v1741 = vadd.f32 0.0, %v1740
      %1742 = vmatmul.f32.gmra.mxu0 %v1635
      %v1743 = vpop.f32.mrf.mxu0
      %v1744 = vadd.f32 0.0, %v1743
      %1745 = vmatmul.f32.gmra.mxu0 %v1637
      %v1746 = vpop.f32.mrf.mxu0
      %v1747 = vadd.f32 0.0, %v1746
      %1748 = vmatmul.f32.gmra.mxu0 %v1639
      %v1749 = vpop.f32.mrf.mxu0
      %v1750 = vadd.f32 0.0, %v1749
      %1751 = vmatmul.f32.gmra.mxu0 %v1641
      %v1752 = vpop.f32.mrf.mxu0
      %v1753 = vadd.f32 0.0, %v1752
      %1754 = vmatmul.f32.gmra.mxu0 %v1643
      %v1755 = vpop.f32.mrf.mxu0
      %v1756 = vadd.f32 0.0, %v1755
      %1757 = vmatmul.f32.gmra.mxu0 %v1645
      %v1758 = vpop.f32.mrf.mxu0
      %v1759 = vadd.f32 0.0, %v1758
      %1760 = vmatmul.f32.gmra.mxu0 %v1647
      %v1761 = vpop.f32.mrf.mxu0
      %v1762 = vadd.f32 0.0, %v1761
      %1763 = vmatmul.f32.gmra.mxu0 %v1649
      %v1764 = vpop.f32.mrf.mxu0
      %v1765 = vadd.f32 0.0, %v1764
      %1766 = vmatmul.f32.gmra.mxu0 %v1651
      %v1767 = vpop.f32.mrf.mxu0
      %v1768 = vadd.f32 0.0, %v1767
      %1769 = vdwg.mxu0
      %v1770 = vld [vmem:[%s8] sm:$0xff]
      %v1771 = vld [vmem:[%s8 + $0x8] sm:$0xff]
      %v1772 = vmul.f32 %v1675, %v1460
      %v1773 = vmul.f32 %v1678, %v1461
      %v1774 = vmul.f32 %v1681, %v1462
      %v1775 = vmul.f32 %v1684, %v1463
      %v1776 = vmul.f32 %v1687, %v1464
      %v1777 = vmul.f32 %v1690, %v1465
      %v1778 = vmul.f32 %v1693, %v1466
      %v1779 = vmul.f32 %v1696, %v1467
      %v1780 = vmul.f32 %v1699, %v1468
      %v1781 = vmul.f32 %v1702, %v1469
      %v1782 = vmul.f32 %v1705, %v1470
      %v1783 = vmul.f32 %v1708, %v1471
      %v1784 = vmul.f32 %v1711, %v1472
      %v1785 = vmul.f32 %v1714, %v1473
      %v1786 = vmul.f32 %v1717, %v1474
      %v1787 = vmul.f32 %v1720, %v1475
      %v1788 = vmul.f32 %v1723, %v1476
      %v1789 = vmul.f32 %v1726, %v1477
      %v1790 = vmul.f32 %v1729, %v1478
      %v1791 = vmul.f32 %v1732, %v1479
      %v1792 = vmul.f32 %v1735, %v1480
      %v1793 = vmul.f32 %v1738, %v1481
      %v1794 = vmul.f32 %v1741, %v1482
      %v1795 = vmul.f32 %v1744, %v1483
      %v1796 = vmul.f32 %v1747, %v1484
      %v1797 = vmul.f32 %v1750, %v1485
      %v1798 = vmul.f32 %v1753, %v1486
      %v1799 = vmul.f32 %v1756, %v1487
      %v1800 = vmul.f32 %v1759, %v1488
      %v1801 = vmul.f32 %v1762, %v1489
      %v1802 = vmul.f32 %v1765, %v1490
      %v1803 = vmul.f32 %v1768, %v1491
      %1804 = vmatpush.msra.mxu0 %v1787
      %1805 = vmatpush.msra.mxu0 %v1786
      %1806 = vmatpush.msra.mxu0 %v1785
      %1807 = vmatpush.msra.mxu0 %v1784
      %1808 = vmatpush.msra.mxu0 %v1783
      %1809 = vmatpush.msra.mxu0 %v1782
      %1810 = vmatpush.msra.mxu0 %v1781
      %1811 = vmatpush.msra.mxu0 %v1780
      %1812 = vmatpush.msra.mxu0 %v1779
      %1813 = vmatpush.msra.mxu0 %v1778
      %1814 = vmatpush.msra.mxu0 %v1777
      %1815 = vmatpush.msra.mxu0 %v1776
      %1816 = vmatpush.msra.mxu0 %v1775
      %1817 = vmatpush.msra.mxu0 %v1774
      %1818 = vmatpush.msra.mxu0 %v1773
      %1819 = vmatpush.msra.mxu0 %v1772
      %1820 = vmatmul.f32.gmra.mxu0 %v1770
      %v1821 = vpop.f32.mrf.mxu0
      %v1822 = vadd.f32 0.0, %v1821
      %1823 = vdwg.mxu0
      %1824 = vmatpush.msra.mxu0 %v1803
      %1825 = vmatpush.msra.mxu0 %v1802
      %1826 = vmatpush.msra.mxu0 %v1801
      %1827 = vmatpush.msra.mxu0 %v1800
      %1828 = vmatpush.msra.mxu0 %v1799
      %1829 = vmatpush.msra.mxu0 %v1798
      %1830 = vmatpush.msra.mxu0 %v1797
      %1831 = vmatpush.msra.mxu0 %v1796
      %1832 = vmatpush.msra.mxu0 %v1795
      %1833 = vmatpush.msra.mxu0 %v1794
      %1834 = vmatpush.msra.mxu0 %v1793
      %1835 = vmatpush.msra.mxu0 %v1792
      %1836 = vmatpush.msra.mxu0 %v1791
      %1837 = vmatpush.msra.mxu0 %v1790
      %1838 = vmatpush.msra.mxu0 %v1789
      %1839 = vmatpush.msra.mxu0 %v1788
      %1840 = vmatmul.f32.gmra.mxu0 %v1771
      %v1841 = vpop.f32.mrf.mxu0
      %v1842 = vadd.f32 %v1822, %v1841
      %1843 = vdwg.mxu0
      %v1844 = vld [vmem:[%s9] sm:$0xff]
      %v1845 = vld [vmem:[%s9 + $0x8] sm:$0xff]
      %v1846 = vld [vmem:[%s9 + $0x10] sm:$0xff]
      %v1847 = vld [vmem:[%s9 + $0x18] sm:$0xff]
      %v1848 = vld [vmem:[%s9 + $0x20] sm:$0xff]
      %v1849 = vld [vmem:[%s9 + $0x28] sm:$0xff]
      %v1850 = vld [vmem:[%s9 + $0x30] sm:$0xff]
      %v1851 = vld [vmem:[%s9 + $0x38] sm:$0xff]
      %v1852 = vld [vmem:[%s9 + $0x40] sm:$0xff]
      %v1853 = vld [vmem:[%s9 + $0x48] sm:$0xff]
      %v1854 = vld [vmem:[%s9 + $0x50] sm:$0xff]
      %v1855 = vld [vmem:[%s9 + $0x58] sm:$0xff]
      %v1856 = vld [vmem:[%s9 + $0x60] sm:$0xff]
      %v1857 = vld [vmem:[%s9 + $0x68] sm:$0xff]
      %v1858 = vld [vmem:[%s9 + $0x70] sm:$0xff]
      %v1859 = vld [vmem:[%s9 + $0x78] sm:$0xff]
      %v1860 = vld [vmem:[%s9 + $0x80] sm:$0xff]
      %v1861 = vld [vmem:[%s9 + $0x88] sm:$0xff]
      %v1862 = vld [vmem:[%s9 + $0x90] sm:$0xff]
      %v1863 = vld [vmem:[%s9 + $0x98] sm:$0xff]
      %v1864 = vld [vmem:[%s9 + $0xa0] sm:$0xff]
      %v1865 = vld [vmem:[%s9 + $0xa8] sm:$0xff]
      %v1866 = vld [vmem:[%s9 + $0xb0] sm:$0xff]
      %v1867 = vld [vmem:[%s9 + $0xb8] sm:$0xff]
      %v1868 = vld [vmem:[%s9 + $0xc0] sm:$0xff]
      %v1869 = vld [vmem:[%s9 + $0xc8] sm:$0xff]
      %v1870 = vld [vmem:[%s9 + $0xd0] sm:$0xff]
      %v1871 = vld [vmem:[%s9 + $0xd8] sm:$0xff]
      %v1872 = vld [vmem:[%s9 + $0xe0] sm:$0xff]
      %v1873 = vld [vmem:[%s9 + $0xe8] sm:$0xff]
      %v1874 = vld [vmem:[%s9 + $0xf0] sm:$0xff]
      %v1875 = vld [vmem:[%s9 + $0xf8] sm:$0xff]
      %vm1876 = vcmask 64512
      %v1878 = vsel %vm1876, %v1844, 0
      %v1881 = vsel %vm1876, %v1845, 0
      %v1884 = vsel %vm1876, %v1846, 0
      %v1887 = vsel %vm1876, %v1847, 0
      %v1890 = vsel %vm1876, %v1848, 0
      %v1893 = vsel %vm1876, %v1849, 0
      %v1896 = vsel %vm1876, %v1850, 0
      %v1899 = vsel %vm1876, %v1851, 0
      %v1902 = vsel %vm1876, %v1852, 0
      %v1905 = vsel %vm1876, %v1853, 0
      %v1908 = vsel %vm1876, %v1854, 0
      %v1911 = vsel %vm1876, %v1855, 0
      %v1914 = vsel %vm1876, %v1856, 0
      %v1917 = vsel %vm1876, %v1857, 0
      %v1920 = vsel %vm1876, %v1858, 0
      %v1923 = vsel %vm1876, %v1859, 0
      %v1926 = vsel %vm1876, %v1860, 0
      %v1929 = vsel %vm1876, %v1861, 0
      %v1932 = vsel %vm1876, %v1862, 0
      %v1935 = vsel %vm1876, %v1863, 0
      %v1938 = vsel %vm1876, %v1864, 0
      %v1941 = vsel %vm1876, %v1865, 0
      %v1944 = vsel %vm1876, %v1866, 0
      %v1947 = vsel %vm1876, %v1867, 0
      %v1950 = vsel %vm1876, %v1868, 0
      %v1953 = vsel %vm1876, %v1869, 0
      %v1956 = vsel %vm1876, %v1870, 0
      %v1959 = vsel %vm1876, %v1871, 0
      %v1962 = vsel %vm1876, %v1872, 0
      %v1965 = vsel %vm1876, %v1873, 0
      %v1968 = vsel %vm1876, %v1874, 0
      %v1971 = vsel %vm1876, %v1875, 0
      %1973 = vmatpush.msra.mxu0 0.0
      %1974 = vmatpush.msra.mxu0 0.0
      %1975 = vmatpush.msra.mxu0 0.0
      %1976 = vmatpush.msra.mxu0 0.0
      %1977 = vmatpush.msra.mxu0 0.0
      %1978 = vmatpush.msra.mxu0 0.0
      %1979 = vmatpush.msra.mxu0 0.0
      %1980 = vmatpush.msra.mxu0 0.0
      %1981 = vmatpush.msra.mxu0 0.0
      %1982 = vmatpush.msra.mxu0 0.0
      %1983 = vmatpush.msra.mxu0 0.0
      %1984 = vmatpush.msra.mxu0 0.0
      %1985 = vmatpush.msra.mxu0 0.0
      %1986 = vmatpush.msra.mxu0 0.0
      %1987 = vmatpush.msra.mxu0 0.0
      %1988 = vmatpush.msra.mxu0 %v1842
      %1989 = vmatmul.f32.gmra.mxu0 %v1878
      %v1990 = vpop.f32.mrf.mxu0
      %v1991 = vadd.f32 0.0, %v1990
      %1992 = vmatmul.f32.gmra.mxu0 %v1881
      %v1993 = vpop.f32.mrf.mxu0
      %v1994 = vadd.f32 0.0, %v1993
      %1995 = vmatmul.f32.gmra.mxu0 %v1884
      %v1996 = vpop.f32.mrf.mxu0
      %v1997 = vadd.f32 0.0, %v1996
      %1998 = vmatmul.f32.gmra.mxu0 %v1887
      %v1999 = vpop.f32.mrf.mxu0
      %v2000 = vadd.f32 0.0, %v1999
      %2001 = vmatmul.f32.gmra.mxu0 %v1890
      %v2002 = vpop.f32.mrf.mxu0
      %v2003 = vadd.f32 0.0, %v2002
      %2004 = vmatmul.f32.gmra.mxu0 %v1893
      %v2005 = vpop.f32.mrf.mxu0
      %v2006 = vadd.f32 0.0, %v2005
      %2007 = vmatmul.f32.gmra.mxu0 %v1896
      %v2008 = vpop.f32.mrf.mxu0
      %v2009 = vadd.f32 0.0, %v2008
      %2010 = vmatmul.f32.gmra.mxu0 %v1899
      %v2011 = vpop.f32.mrf.mxu0
      %v2012 = vadd.f32 0.0, %v2011
      %2013 = vmatmul.f32.gmra.mxu0 %v1902
      %v2014 = vpop.f32.mrf.mxu0
      %v2015 = vadd.f32 0.0, %v2014
      %2016 = vmatmul.f32.gmra.mxu0 %v1905
      %v2017 = vpop.f32.mrf.mxu0
      %v2018 = vadd.f32 0.0, %v2017
      %2019 = vmatmul.f32.gmra.mxu0 %v1908
      %v2020 = vpop.f32.mrf.mxu0
      %v2021 = vadd.f32 0.0, %v2020
      %2022 = vmatmul.f32.gmra.mxu0 %v1911
      %v2023 = vpop.f32.mrf.mxu0
      %v2024 = vadd.f32 0.0, %v2023
      %2025 = vmatmul.f32.gmra.mxu0 %v1914
      %v2026 = vpop.f32.mrf.mxu0
      %v2027 = vadd.f32 0.0, %v2026
      %2028 = vmatmul.f32.gmra.mxu0 %v1917
      %v2029 = vpop.f32.mrf.mxu0
      %v2030 = vadd.f32 0.0, %v2029
      %2031 = vmatmul.f32.gmra.mxu0 %v1920
      %v2032 = vpop.f32.mrf.mxu0
      %v2033 = vadd.f32 0.0, %v2032
      %2034 = vmatmul.f32.gmra.mxu0 %v1923
      %v2035 = vpop.f32.mrf.mxu0
      %v2036 = vadd.f32 0.0, %v2035
      %2037 = vmatmul.f32.gmra.mxu0 %v1926
      %v2038 = vpop.f32.mrf.mxu0
      %v2039 = vadd.f32 0.0, %v2038
      %2040 = vmatmul.f32.gmra.mxu0 %v1929
      %v2041 = vpop.f32.mrf.mxu0
      %v2042 = vadd.f32 0.0, %v2041
      %2043 = vmatmul.f32.gmra.mxu0 %v1932
      %v2044 = vpop.f32.mrf.mxu0
      %v2045 = vadd.f32 0.0, %v2044
      %2046 = vmatmul.f32.gmra.mxu0 %v1935
      %v2047 = vpop.f32.mrf.mxu0
      %v2048 = vadd.f32 0.0, %v2047
      %2049 = vmatmul.f32.gmra.mxu0 %v1938
      %v2050 = vpop.f32.mrf.mxu0
      %v2051 = vadd.f32 0.0, %v2050
      %2052 = vmatmul.f32.gmra.mxu0 %v1941
      %v2053 = vpop.f32.mrf.mxu0
      %v2054 = vadd.f32 0.0, %v2053
      %2055 = vmatmul.f32.gmra.mxu0 %v1944
      %v2056 = vpop.f32.mrf.mxu0
      %v2057 = vadd.f32 0.0, %v2056
      %2058 = vmatmul.f32.gmra.mxu0 %v1947
      %v2059 = vpop.f32.mrf.mxu0
      %v2060 = vadd.f32 0.0, %v2059
      %2061 = vmatmul.f32.gmra.mxu0 %v1950
      %v2062 = vpop.f32.mrf.mxu0
      %v2063 = vadd.f32 0.0, %v2062
      %2064 = vmatmul.f32.gmra.mxu0 %v1953
      %v2065 = vpop.f32.mrf.mxu0
      %v2066 = vadd.f32 0.0, %v2065
      %2067 = vmatmul.f32.gmra.mxu0 %v1956
      %v2068 = vpop.f32.mrf.mxu0
      %v2069 = vadd.f32 0.0, %v2068
      %2070 = vmatmul.f32.gmra.mxu0 %v1959
      %v2071 = vpop.f32.mrf.mxu0
      %v2072 = vadd.f32 0.0, %v2071
      %2073 = vmatmul.f32.gmra.mxu0 %v1962
      %v2074 = vpop.f32.mrf.mxu0
      %v2075 = vadd.f32 0.0, %v2074
      %2076 = vmatmul.f32.gmra.mxu0 %v1965
      %v2077 = vpop.f32.mrf.mxu0
      %v2078 = vadd.f32 0.0, %v2077
      %2079 = vmatmul.f32.gmra.mxu0 %v1968
      %v2080 = vpop.f32.mrf.mxu0
      %v2081 = vadd.f32 0.0, %v2080
      %2082 = vmatmul.f32.gmra.mxu0 %v1971
      %v2083 = vpop.f32.mrf.mxu0
      %v2084 = vadd.f32 0.0, %v2083
      %2085 = vdwg.mxu0
      %2086 = vrot.lane.b32.xlu0 %v1364, 28
      %v2087 = vpop.permute.xlu0 %2086
      %2088 = vrot.lane.b32.xlu0 %v1367, 28
      %v2089 = vpop.permute.xlu0 %2088
      %2090 = vrot.lane.b32.xlu0 %v1370, 28
      %v2091 = vpop.permute.xlu0 %2090
      %2092 = vrot.lane.b32.xlu0 %v1373, 28
      %v2093 = vpop.permute.xlu0 %2092
      %2094 = vrot.lane.b32.xlu0 %v1376, 28
      %v2095 = vpop.permute.xlu0 %2094
      %2096 = vrot.lane.b32.xlu0 %v1379, 28
      %v2097 = vpop.permute.xlu0 %2096
      %2098 = vrot.lane.b32.xlu0 %v1382, 28
      %v2099 = vpop.permute.xlu0 %2098
      %2100 = vrot.lane.b32.xlu0 %v1385, 28
      %v2101 = vpop.permute.xlu0 %2100
      %2102 = vrot.lane.b32.xlu0 %v1388, 28
      %v2103 = vpop.permute.xlu0 %2102
      %2104 = vrot.lane.b32.xlu0 %v1391, 28
      %v2105 = vpop.permute.xlu0 %2104
      %2106 = vrot.lane.b32.xlu0 %v1394, 28
      %v2107 = vpop.permute.xlu0 %2106
      %2108 = vrot.lane.b32.xlu0 %v1397, 28
      %v2109 = vpop.permute.xlu0 %2108
      %2110 = vrot.lane.b32.xlu0 %v1400, 28
      %v2111 = vpop.permute.xlu0 %2110
      %2112 = vrot.lane.b32.xlu0 %v1403, 28
      %v2113 = vpop.permute.xlu0 %2112
      %2114 = vrot.lane.b32.xlu0 %v1406, 28
      %v2115 = vpop.permute.xlu0 %2114
      %2116 = vrot.lane.b32.xlu0 %v1409, 28
      %v2117 = vpop.permute.xlu0 %2116
      %2118 = vrot.lane.b32.xlu0 %v1412, 28
      %v2119 = vpop.permute.xlu0 %2118
      %2120 = vrot.lane.b32.xlu0 %v1415, 28
      %v2121 = vpop.permute.xlu0 %2120
      %2122 = vrot.lane.b32.xlu0 %v1418, 28
      %v2123 = vpop.permute.xlu0 %2122
      %2124 = vrot.lane.b32.xlu0 %v1421, 28
      %v2125 = vpop.permute.xlu0 %2124
      %2126 = vrot.lane.b32.xlu0 %v1424, 28
      %v2127 = vpop.permute.xlu0 %2126
      %2128 = vrot.lane.b32.xlu0 %v1427, 28
      %v2129 = vpop.permute.xlu0 %2128
      %2130 = vrot.lane.b32.xlu0 %v1430, 28
      %v2131 = vpop.permute.xlu0 %2130
      %2132 = vrot.lane.b32.xlu0 %v1433, 28
      %v2133 = vpop.permute.xlu0 %2132
      %2134 = vrot.lane.b32.xlu0 %v1436, 28
      %v2135 = vpop.permute.xlu0 %2134
      %2136 = vrot.lane.b32.xlu0 %v1439, 28
      %v2137 = vpop.permute.xlu0 %2136
      %2138 = vrot.lane.b32.xlu0 %v1442, 28
      %v2139 = vpop.permute.xlu0 %2138
      %2140 = vrot.lane.b32.xlu0 %v1445, 28
      %v2141 = vpop.permute.xlu0 %2140
      %2142 = vrot.lane.b32.xlu0 %v1448, 28
      %v2143 = vpop.permute.xlu0 %2142
      %2144 = vrot.lane.b32.xlu0 %v1451, 28
      %v2145 = vpop.permute.xlu0 %2144
      %2146 = vrot.lane.b32.xlu0 %v1454, 28
      %v2147 = vpop.permute.xlu0 %2146
      %2148 = vrot.lane.b32.xlu0 %v1457, 28
      %v2149 = vpop.permute.xlu0 %2148
      %v2150 = vsel %vm1588, %v2087, 0
      %v2152 = vsel %vm1588, %v2089, 0
      %v2154 = vsel %vm1588, %v2091, 0
      %v2156 = vsel %vm1588, %v2093, 0
      %v2158 = vsel %vm1588, %v2095, 0
      %v2160 = vsel %vm1588, %v2097, 0
      %v2162 = vsel %vm1588, %v2099, 0
      %v2164 = vsel %vm1588, %v2101, 0
      %v2166 = vsel %vm1588, %v2103, 0
      %v2168 = vsel %vm1588, %v2105, 0
      %v2170 = vsel %vm1588, %v2107, 0
      %v2172 = vsel %vm1588, %v2109, 0
      %v2174 = vsel %vm1588, %v2111, 0
      %v2176 = vsel %vm1588, %v2113, 0
      %v2178 = vsel %vm1588, %v2115, 0
      %v2180 = vsel %vm1588, %v2117, 0
      %v2182 = vsel %vm1588, %v2119, 0
      %v2184 = vsel %vm1588, %v2121, 0
      %v2186 = vsel %vm1588, %v2123, 0
      %v2188 = vsel %vm1588, %v2125, 0
      %v2190 = vsel %vm1588, %v2127, 0
      %v2192 = vsel %vm1588, %v2129, 0
      %v2194 = vsel %vm1588, %v2131, 0
      %v2196 = vsel %vm1588, %v2133, 0
      %v2198 = vsel %vm1588, %v2135, 0
      %v2200 = vsel %vm1588, %v2137, 0
      %v2202 = vsel %vm1588, %v2139, 0
      %v2204 = vsel %vm1588, %v2141, 0
      %v2206 = vsel %vm1588, %v2143, 0
      %v2208 = vsel %vm1588, %v2145, 0
      %v2210 = vsel %vm1588, %v2147, 0
      %v2212 = vsel %vm1588, %v2149, 0
      %2214 = vmatpush.msra.mxu0 0.0
      %2215 = vmatpush.msra.mxu0 0.0
      %2216 = vmatpush.msra.mxu0 0.0
      %2217 = vmatpush.msra.mxu0 0.0
      %2218 = vmatpush.msra.mxu0 0.0
      %2219 = vmatpush.msra.mxu0 0.0
      %2220 = vmatpush.msra.mxu0 0.0
      %2221 = vmatpush.msra.mxu0 0.0
      %2222 = vmatpush.msra.mxu0 0.0
      %2223 = vmatpush.msra.mxu0 0.0
      %2224 = vmatpush.msra.mxu0 0.0
      %2225 = vmatpush.msra.mxu0 0.0
      %2226 = vmatpush.msra.mxu0 0.0
      %2227 = vmatpush.msra.mxu0 0.0
      %2228 = vmatpush.msra.mxu0 0.0
      %2229 = vmatpush.msra.mxu0 %v1655
      %2230 = vmatmul.f32.gmra.mxu0 %v2150
      %v2231 = vpop.f32.mrf.mxu0
      %v2232 = vadd.f32 %v1991, %v2231
      %2233 = vmatmul.f32.gmra.mxu0 %v2152
      %v2234 = vpop.f32.mrf.mxu0
      %v2235 = vadd.f32 %v1994, %v2234
      %2236 = vmatmul.f32.gmra.mxu0 %v2154
      %v2237 = vpop.f32.mrf.mxu0
      %v2238 = vadd.f32 %v1997, %v2237
      %2239 = vmatmul.f32.gmra.mxu0 %v2156
      %v2240 = vpop.f32.mrf.mxu0
      %v2241 = vadd.f32 %v2000, %v2240
      %2242 = vmatmul.f32.gmra.mxu0 %v2158
      %v2243 = vpop.f32.mrf.mxu0
      %v2244 = vadd.f32 %v2003, %v2243
      %2245 = vmatmul.f32.gmra.mxu0 %v2160
      %v2246 = vpop.f32.mrf.mxu0
      %v2247 = vadd.f32 %v2006, %v2246
      %2248 = vmatmul.f32.gmra.mxu0 %v2162
      %v2249 = vpop.f32.mrf.mxu0
      %v2250 = vadd.f32 %v2009, %v2249
      %2251 = vmatmul.f32.gmra.mxu0 %v2164
      %v2252 = vpop.f32.mrf.mxu0
      %v2253 = vadd.f32 %v2012, %v2252
      %2254 = vmatmul.f32.gmra.mxu0 %v2166
      %v2255 = vpop.f32.mrf.mxu0
      %v2256 = vadd.f32 %v2015, %v2255
      %2257 = vmatmul.f32.gmra.mxu0 %v2168
      %v2258 = vpop.f32.mrf.mxu0
      %v2259 = vadd.f32 %v2018, %v2258
      %2260 = vmatmul.f32.gmra.mxu0 %v2170
      %v2261 = vpop.f32.mrf.mxu0
      %v2262 = vadd.f32 %v2021, %v2261
      %2263 = vmatmul.f32.gmra.mxu0 %v2172
      %v2264 = vpop.f32.mrf.mxu0
      %v2265 = vadd.f32 %v2024, %v2264
      %2266 = vmatmul.f32.gmra.mxu0 %v2174
      %v2267 = vpop.f32.mrf.mxu0
      %v2268 = vadd.f32 %v2027, %v2267
      %2269 = vmatmul.f32.gmra.mxu0 %v2176
      %v2270 = vpop.f32.mrf.mxu0
      %v2271 = vadd.f32 %v2030, %v2270
      %2272 = vmatmul.f32.gmra.mxu0 %v2178
      %v2273 = vpop.f32.mrf.mxu0
      %v2274 = vadd.f32 %v2033, %v2273
      %2275 = vmatmul.f32.gmra.mxu0 %v2180
      %v2276 = vpop.f32.mrf.mxu0
      %v2277 = vadd.f32 %v2036, %v2276
      %2278 = vmatmul.f32.gmra.mxu0 %v2182
      %v2279 = vpop.f32.mrf.mxu0
      %v2280 = vadd.f32 %v2039, %v2279
      %2281 = vmatmul.f32.gmra.mxu0 %v2184
      %v2282 = vpop.f32.mrf.mxu0
      %v2283 = vadd.f32 %v2042, %v2282
      %2284 = vmatmul.f32.gmra.mxu0 %v2186
      %v2285 = vpop.f32.mrf.mxu0
      %v2286 = vadd.f32 %v2045, %v2285
      %2287 = vmatmul.f32.gmra.mxu0 %v2188
      %v2288 = vpop.f32.mrf.mxu0
      %v2289 = vadd.f32 %v2048, %v2288
      %2290 = vmatmul.f32.gmra.mxu0 %v2190
      %v2291 = vpop.f32.mrf.mxu0
      %v2292 = vadd.f32 %v2051, %v2291
      %2293 = vmatmul.f32.gmra.mxu0 %v2192
      %v2294 = vpop.f32.mrf.mxu0
      %v2295 = vadd.f32 %v2054, %v2294
      %2296 = vmatmul.f32.gmra.mxu0 %v2194
      %v2297 = vpop.f32.mrf.mxu0
      %v2298 = vadd.f32 %v2057, %v2297
      %2299 = vmatmul.f32.gmra.mxu0 %v2196
      %v2300 = vpop.f32.mrf.mxu0
      %v2301 = vadd.f32 %v2060, %v2300
      %2302 = vmatmul.f32.gmra.mxu0 %v2198
      %v2303 = vpop.f32.mrf.mxu0
      %v2304 = vadd.f32 %v2063, %v2303
      %2305 = vmatmul.f32.gmra.mxu0 %v2200
      %v2306 = vpop.f32.mrf.mxu0
      %v2307 = vadd.f32 %v2066, %v2306
      %2308 = vmatmul.f32.gmra.mxu0 %v2202
      %v2309 = vpop.f32.mrf.mxu0
      %v2310 = vadd.f32 %v2069, %v2309
      %2311 = vmatmul.f32.gmra.mxu0 %v2204
      %v2312 = vpop.f32.mrf.mxu0
      %v2313 = vadd.f32 %v2072, %v2312
      %2314 = vmatmul.f32.gmra.mxu0 %v2206
      %v2315 = vpop.f32.mrf.mxu0
      %v2316 = vadd.f32 %v2075, %v2315
      %2317 = vmatmul.f32.gmra.mxu0 %v2208
      %v2318 = vpop.f32.mrf.mxu0
      %v2319 = vadd.f32 %v2078, %v2318
      %2320 = vmatmul.f32.gmra.mxu0 %v2210
      %v2321 = vpop.f32.mrf.mxu0
      %v2322 = vadd.f32 %v2081, %v2321
      %2323 = vmatmul.f32.gmra.mxu0 %v2212
      %v2324 = vpop.f32.mrf.mxu0
      %v2325 = vadd.f32 %v2084, %v2324
      %2326 = vdwg.mxu0
      %vm2327 = vcmp.ge.f32.partialorder %v2232, 0.0
      %vm2328 = vcmp.ge.f32.partialorder %v2235, 0.0
      %vm2329 = vcmp.ge.f32.partialorder %v2238, 0.0
      %vm2330 = vcmp.ge.f32.partialorder %v2241, 0.0
      %vm2331 = vcmp.ge.f32.partialorder %v2244, 0.0
      %vm2332 = vcmp.ge.f32.partialorder %v2247, 0.0
      %vm2333 = vcmp.ge.f32.partialorder %v2250, 0.0
      %vm2334 = vcmp.ge.f32.partialorder %v2253, 0.0
      %vm2335 = vcmp.ge.f32.partialorder %v2256, 0.0
      %vm2336 = vcmp.ge.f32.partialorder %v2259, 0.0
      %vm2337 = vcmp.ge.f32.partialorder %v2262, 0.0
      %vm2338 = vcmp.ge.f32.partialorder %v2265, 0.0
      %vm2339 = vcmp.ge.f32.partialorder %v2268, 0.0
      %vm2340 = vcmp.ge.f32.partialorder %v2271, 0.0
      %vm2341 = vcmp.ge.f32.partialorder %v2274, 0.0
      %vm2342 = vcmp.ge.f32.partialorder %v2277, 0.0
      %vm2343 = vcmp.ge.f32.partialorder %v2280, 0.0
      %vm2344 = vcmp.ge.f32.partialorder %v2283, 0.0
      %vm2345 = vcmp.ge.f32.partialorder %v2286, 0.0
      %vm2346 = vcmp.ge.f32.partialorder %v2289, 0.0
      %vm2347 = vcmp.ge.f32.partialorder %v2292, 0.0
      %vm2348 = vcmp.ge.f32.partialorder %v2295, 0.0
      %vm2349 = vcmp.ge.f32.partialorder %v2298, 0.0
      %vm2350 = vcmp.ge.f32.partialorder %v2301, 0.0
      %vm2351 = vcmp.ge.f32.partialorder %v2304, 0.0
      %vm2352 = vcmp.ge.f32.partialorder %v2307, 0.0
      %vm2353 = vcmp.ge.f32.partialorder %v2310, 0.0
      %vm2354 = vcmp.ge.f32.partialorder %v2313, 0.0
      %vm2355 = vcmp.ge.f32.partialorder %v2316, 0.0
      %vm2356 = vcmp.ge.f32.partialorder %v2319, 0.0
      %vm2357 = vcmp.ge.f32.partialorder %v2322, 0.0
      %vm2358 = vcmp.ge.f32.partialorder %v2325, 0.0
      %v2359 = vmul.f32 %v2232, 0.2
      %v2360 = vmul.f32 %v2235, 0.2
      %v2361 = vmul.f32 %v2238, 0.2
      %v2362 = vmul.f32 %v2241, 0.2
      %v2363 = vmul.f32 %v2244, 0.2
      %v2364 = vmul.f32 %v2247, 0.2
      %v2365 = vmul.f32 %v2250, 0.2
      %v2366 = vmul.f32 %v2253, 0.2
      %v2367 = vmul.f32 %v2256, 0.2
      %v2368 = vmul.f32 %v2259, 0.2
      %v2369 = vmul.f32 %v2262, 0.2
      %v2370 = vmul.f32 %v2265, 0.2
      %v2371 = vmul.f32 %v2268, 0.2
      %v2372 = vmul.f32 %v2271, 0.2
      %v2373 = vmul.f32 %v2274, 0.2
      %v2374 = vmul.f32 %v2277, 0.2
      %v2375 = vmul.f32 %v2280, 0.2
      %v2376 = vmul.f32 %v2283, 0.2
      %v2377 = vmul.f32 %v2286, 0.2
      %v2378 = vmul.f32 %v2289, 0.2
      %v2379 = vmul.f32 %v2292, 0.2
      %v2380 = vmul.f32 %v2295, 0.2
      %v2381 = vmul.f32 %v2298, 0.2
      %v2382 = vmul.f32 %v2301, 0.2
      %v2383 = vmul.f32 %v2304, 0.2
      %v2384 = vmul.f32 %v2307, 0.2
      %v2385 = vmul.f32 %v2310, 0.2
      %v2386 = vmul.f32 %v2313, 0.2
      %v2387 = vmul.f32 %v2316, 0.2
      %v2388 = vmul.f32 %v2319, 0.2
      %v2389 = vmul.f32 %v2322, 0.2
      %v2390 = vmul.f32 %v2325, 0.2
      %v2391 = vsel %vm2327, %v2232, %v2359
      %v2392 = vsel %vm2328, %v2235, %v2360
      %v2393 = vsel %vm2329, %v2238, %v2361
      %v2394 = vsel %vm2330, %v2241, %v2362
      %v2395 = vsel %vm2331, %v2244, %v2363
      %v2396 = vsel %vm2332, %v2247, %v2364
      %v2397 = vsel %vm2333, %v2250, %v2365
      %v2398 = vsel %vm2334, %v2253, %v2366
      %v2399 = vsel %vm2335, %v2256, %v2367
      %v2400 = vsel %vm2336, %v2259, %v2368
      %v2401 = vsel %vm2337, %v2262, %v2369
      %v2402 = vsel %vm2338, %v2265, %v2370
      %v2403 = vsel %vm2339, %v2268, %v2371
      %v2404 = vsel %vm2340, %v2271, %v2372
      %v2405 = vsel %vm2341, %v2274, %v2373
      %v2406 = vsel %vm2342, %v2277, %v2374
      %v2407 = vsel %vm2343, %v2280, %v2375
      %v2408 = vsel %vm2344, %v2283, %v2376
      %v2409 = vsel %vm2345, %v2286, %v2377
      %v2410 = vsel %vm2346, %v2289, %v2378
      %v2411 = vsel %vm2347, %v2292, %v2379
      %v2412 = vsel %vm2348, %v2295, %v2380
      %v2413 = vsel %vm2349, %v2298, %v2381
      %v2414 = vsel %vm2350, %v2301, %v2382
      %v2415 = vsel %vm2351, %v2304, %v2383
      %v2416 = vsel %vm2352, %v2307, %v2384
      %v2417 = vsel %vm2353, %v2310, %v2385
      %v2418 = vsel %vm2354, %v2313, %v2386
      %v2419 = vsel %vm2355, %v2316, %v2387
      %v2420 = vsel %vm2356, %v2319, %v2388
      %v2421 = vsel %vm2357, %v2322, %v2389
      %v2422 = vsel %vm2358, %v2325, %v2390
      %v2423 = vld [vmem:[%s428] sm:$0xff]
      %v2424 = vld [vmem:[%s428 + $0x8] sm:$0xff]
      %v2425 = vld [vmem:[%s428 + $0x10] sm:$0xff]
      %v2426 = vld [vmem:[%s428 + $0x18] sm:$0xff]
      %v2427 = vld [vmem:[%s428 + $0x20] sm:$0xff]
      %v2428 = vld [vmem:[%s428 + $0x28] sm:$0xff]
      %v2429 = vld [vmem:[%s428 + $0x30] sm:$0xff]
      %v2430 = vld [vmem:[%s428 + $0x38] sm:$0xff]
      %v2431 = vld [vmem:[%s428 + $0x40] sm:$0xff]
      %v2432 = vld [vmem:[%s428 + $0x48] sm:$0xff]
      %v2433 = vld [vmem:[%s428 + $0x50] sm:$0xff]
      %v2434 = vld [vmem:[%s428 + $0x58] sm:$0xff]
      %v2435 = vld [vmem:[%s428 + $0x60] sm:$0xff]
      %v2436 = vld [vmem:[%s428 + $0x68] sm:$0xff]
      %v2437 = vld [vmem:[%s428 + $0x70] sm:$0xff]
      %v2438 = vld [vmem:[%s428 + $0x78] sm:$0xff]
      %v2439 = vld [vmem:[%s428 + $0x80] sm:$0xff]
      %v2440 = vld [vmem:[%s428 + $0x88] sm:$0xff]
      %v2441 = vld [vmem:[%s428 + $0x90] sm:$0xff]
      %v2442 = vld [vmem:[%s428 + $0x98] sm:$0xff]
      %v2443 = vld [vmem:[%s428 + $0xa0] sm:$0xff]
      %v2444 = vld [vmem:[%s428 + $0xa8] sm:$0xff]
      %v2445 = vld [vmem:[%s428 + $0xb0] sm:$0xff]
      %v2446 = vld [vmem:[%s428 + $0xb8] sm:$0xff]
      %v2447 = vld [vmem:[%s428 + $0xc0] sm:$0xff]
      %v2448 = vld [vmem:[%s428 + $0xc8] sm:$0xff]
      %v2449 = vld [vmem:[%s428 + $0xd0] sm:$0xff]
      %v2450 = vld [vmem:[%s428 + $0xd8] sm:$0xff]
      %v2451 = vld [vmem:[%s428 + $0xe0] sm:$0xff]
      %v2452 = vld [vmem:[%s428 + $0xe8] sm:$0xff]
      %v2453 = vld [vmem:[%s428 + $0xf0] sm:$0xff]
      %v2454 = vld [vmem:[%s428 + $0xf8] sm:$0xff]
      %v2455 = vadd.f32 %v2391, %v2423
      %v2456 = vadd.f32 %v2392, %v2424
      %v2457 = vadd.f32 %v2393, %v2425
      %v2458 = vadd.f32 %v2394, %v2426
      %v2459 = vadd.f32 %v2395, %v2427
      %v2460 = vadd.f32 %v2396, %v2428
      %v2461 = vadd.f32 %v2397, %v2429
      %v2462 = vadd.f32 %v2398, %v2430
      %v2463 = vadd.f32 %v2399, %v2431
      %v2464 = vadd.f32 %v2400, %v2432
      %v2465 = vadd.f32 %v2401, %v2433
      %v2466 = vadd.f32 %v2402, %v2434
      %v2467 = vadd.f32 %v2403, %v2435
      %v2468 = vadd.f32 %v2404, %v2436
      %v2469 = vadd.f32 %v2405, %v2437
      %v2470 = vadd.f32 %v2406, %v2438
      %v2471 = vadd.f32 %v2407, %v2439
      %v2472 = vadd.f32 %v2408, %v2440
      %v2473 = vadd.f32 %v2409, %v2441
      %v2474 = vadd.f32 %v2410, %v2442
      %v2475 = vadd.f32 %v2411, %v2443
      %v2476 = vadd.f32 %v2412, %v2444
      %v2477 = vadd.f32 %v2413, %v2445
      %v2478 = vadd.f32 %v2414, %v2446
      %v2479 = vadd.f32 %v2415, %v2447
      %v2480 = vadd.f32 %v2416, %v2448
      %v2481 = vadd.f32 %v2417, %v2449
      %v2482 = vadd.f32 %v2418, %v2450
      %v2483 = vadd.f32 %v2419, %v2451
      %v2484 = vadd.f32 %v2420, %v2452
      %v2485 = vadd.f32 %v2421, %v2453
      %v2486 = vadd.f32 %v2422, %v2454
      %2487 = vmax.xlane.f32.xlu0 %v2455
      %v2488 = vpop.xlane.xlu0 %2487
      %2489 = vmax.xlane.f32.xlu0 %v2456
      %v2490 = vpop.xlane.xlu0 %2489
      %2491 = vmax.xlane.f32.xlu0 %v2457
      %v2492 = vpop.xlane.xlu0 %2491
      %2493 = vmax.xlane.f32.xlu0 %v2458
      %v2494 = vpop.xlane.xlu0 %2493
      %2495 = vmax.xlane.f32.xlu0 %v2459
      %v2496 = vpop.xlane.xlu0 %2495
      %2497 = vmax.xlane.f32.xlu0 %v2460
      %v2498 = vpop.xlane.xlu0 %2497
      %2499 = vmax.xlane.f32.xlu0 %v2461
      %v2500 = vpop.xlane.xlu0 %2499
      %2501 = vmax.xlane.f32.xlu0 %v2462
      %v2502 = vpop.xlane.xlu0 %2501
      %2503 = vmax.xlane.f32.xlu0 %v2463
      %v2504 = vpop.xlane.xlu0 %2503
      %2505 = vmax.xlane.f32.xlu0 %v2464
      %v2506 = vpop.xlane.xlu0 %2505
      %2507 = vmax.xlane.f32.xlu0 %v2465
      %v2508 = vpop.xlane.xlu0 %2507
      %2509 = vmax.xlane.f32.xlu0 %v2466
      %v2510 = vpop.xlane.xlu0 %2509
      %2511 = vmax.xlane.f32.xlu0 %v2467
      %v2512 = vpop.xlane.xlu0 %2511
      %2513 = vmax.xlane.f32.xlu0 %v2468
      %v2514 = vpop.xlane.xlu0 %2513
      %2515 = vmax.xlane.f32.xlu0 %v2469
      %v2516 = vpop.xlane.xlu0 %2515
      %2517 = vmax.xlane.f32.xlu0 %v2470
      %v2518 = vpop.xlane.xlu0 %2517
      %2519 = vmax.xlane.f32.xlu0 %v2471
      %v2520 = vpop.xlane.xlu0 %2519
      %2521 = vmax.xlane.f32.xlu0 %v2472
      %v2522 = vpop.xlane.xlu0 %2521
      %2523 = vmax.xlane.f32.xlu0 %v2473
      %v2524 = vpop.xlane.xlu0 %2523
      %2525 = vmax.xlane.f32.xlu0 %v2474
      %v2526 = vpop.xlane.xlu0 %2525
      %2527 = vmax.xlane.f32.xlu0 %v2475
      %v2528 = vpop.xlane.xlu0 %2527
      %2529 = vmax.xlane.f32.xlu0 %v2476
      %v2530 = vpop.xlane.xlu0 %2529
      %2531 = vmax.xlane.f32.xlu0 %v2477
      %v2532 = vpop.xlane.xlu0 %2531
      %2533 = vmax.xlane.f32.xlu0 %v2478
      %v2534 = vpop.xlane.xlu0 %2533
      %2535 = vmax.xlane.f32.xlu0 %v2479
      %v2536 = vpop.xlane.xlu0 %2535
      %2537 = vmax.xlane.f32.xlu0 %v2480
      %v2538 = vpop.xlane.xlu0 %2537
      %2539 = vmax.xlane.f32.xlu0 %v2481
      %v2540 = vpop.xlane.xlu0 %2539
      %2541 = vmax.xlane.f32.xlu0 %v2482
      %v2542 = vpop.xlane.xlu0 %2541
      %2543 = vmax.xlane.f32.xlu0 %v2483
      %v2544 = vpop.xlane.xlu0 %2543
      %2545 = vmax.xlane.f32.xlu0 %v2484
      %v2546 = vpop.xlane.xlu0 %2545
      %2547 = vmax.xlane.f32.xlu0 %v2485
      %v2548 = vpop.xlane.xlu0 %2547
      %2549 = vmax.xlane.f32.xlu0 %v2486
      %v2550 = vpop.xlane.xlu0 %2549
      %v2551 = vsub.f32 %v2455, %v2488
      %v2552 = vsub.f32 %v2456, %v2490
      %v2553 = vsub.f32 %v2457, %v2492
      %v2554 = vsub.f32 %v2458, %v2494
      %v2555 = vsub.f32 %v2459, %v2496
      %v2556 = vsub.f32 %v2460, %v2498
      %v2557 = vsub.f32 %v2461, %v2500
      %v2558 = vsub.f32 %v2462, %v2502
      %v2559 = vsub.f32 %v2463, %v2504
      %v2560 = vsub.f32 %v2464, %v2506
      %v2561 = vsub.f32 %v2465, %v2508
      %v2562 = vsub.f32 %v2466, %v2510
      %v2563 = vsub.f32 %v2467, %v2512
      %v2564 = vsub.f32 %v2468, %v2514
      %v2565 = vsub.f32 %v2469, %v2516
      %v2566 = vsub.f32 %v2470, %v2518
      %v2567 = vsub.f32 %v2471, %v2520
      %v2568 = vsub.f32 %v2472, %v2522
      %v2569 = vsub.f32 %v2473, %v2524
      %v2570 = vsub.f32 %v2474, %v2526
      %v2571 = vsub.f32 %v2475, %v2528
      %v2572 = vsub.f32 %v2476, %v2530
      %v2573 = vsub.f32 %v2477, %v2532
      %v2574 = vsub.f32 %v2478, %v2534
      %v2575 = vsub.f32 %v2479, %v2536
      %v2576 = vsub.f32 %v2480, %v2538
      %v2577 = vsub.f32 %v2481, %v2540
      %v2578 = vsub.f32 %v2482, %v2542
      %v2579 = vsub.f32 %v2483, %v2544
      %v2580 = vsub.f32 %v2484, %v2546
      %v2581 = vsub.f32 %v2485, %v2548
      %v2582 = vsub.f32 %v2486, %v2550
      %v2583 = vmul.f32 %v2551, 1.442695
      %v2584 = vpow.pop %v2583
      %v2585 = vmul.f32 %v2552, 1.442695
      %v2586 = vpow.pop %v2585
      %v2587 = vmul.f32 %v2553, 1.442695
      %v2588 = vpow.pop %v2587
      %v2589 = vmul.f32 %v2554, 1.442695
      %v2590 = vpow.pop %v2589
      %v2591 = vmul.f32 %v2555, 1.442695
      %v2592 = vpow.pop %v2591
      %v2593 = vmul.f32 %v2556, 1.442695
      %v2594 = vpow.pop %v2593
      %v2595 = vmul.f32 %v2557, 1.442695
      %v2596 = vpow.pop %v2595
      %v2597 = vmul.f32 %v2558, 1.442695
      %v2598 = vpow.pop %v2597
      %v2599 = vmul.f32 %v2559, 1.442695
      %v2600 = vpow.pop %v2599
      %v2601 = vmul.f32 %v2560, 1.442695
      %v2602 = vpow.pop %v2601
      %v2603 = vmul.f32 %v2561, 1.442695
      %v2604 = vpow.pop %v2603
      %v2605 = vmul.f32 %v2562, 1.442695
      %v2606 = vpow.pop %v2605
      %v2607 = vmul.f32 %v2563, 1.442695
      %v2608 = vpow.pop %v2607
      %v2609 = vmul.f32 %v2564, 1.442695
      %v2610 = vpow.pop %v2609
      %v2611 = vmul.f32 %v2565, 1.442695
      %v2612 = vpow.pop %v2611
      %v2613 = vmul.f32 %v2566, 1.442695
      %v2614 = vpow.pop %v2613
      %v2615 = vmul.f32 %v2567, 1.442695
      %v2616 = vpow.pop %v2615
      %v2617 = vmul.f32 %v2568, 1.442695
      %v2618 = vpow.pop %v2617
      %v2619 = vmul.f32 %v2569, 1.442695
      %v2620 = vpow.pop %v2619
      %v2621 = vmul.f32 %v2570, 1.442695
      %v2622 = vpow.pop %v2621
      %v2623 = vmul.f32 %v2571, 1.442695
      %v2624 = vpow.pop %v2623
      %v2625 = vmul.f32 %v2572, 1.442695
      %v2626 = vpow.pop %v2625
      %v2627 = vmul.f32 %v2573, 1.442695
      %v2628 = vpow.pop %v2627
      %v2629 = vmul.f32 %v2574, 1.442695
      %v2630 = vpow.pop %v2629
      %v2631 = vmul.f32 %v2575, 1.442695
      %v2632 = vpow.pop %v2631
      %v2633 = vmul.f32 %v2576, 1.442695
      %v2634 = vpow.pop %v2633
      %v2635 = vmul.f32 %v2577, 1.442695
      %v2636 = vpow.pop %v2635
      %v2637 = vmul.f32 %v2578, 1.442695
      %v2638 = vpow.pop %v2637
      %v2639 = vmul.f32 %v2579, 1.442695
      %v2640 = vpow.pop %v2639
      %v2641 = vmul.f32 %v2580, 1.442695
      %v2642 = vpow.pop %v2641
      %v2643 = vmul.f32 %v2581, 1.442695
      %v2644 = vpow.pop %v2643
      %v2645 = vmul.f32 %v2582, 1.442695
      %v2646 = vpow.pop %v2645
      %v2647 = vld [vmem:[%s7] sm:$0xff]
      %v2648 = vld [vmem:[%s7 + $0x8] sm:$0xff]
      %v2649 = vld [vmem:[%s7 + $0x10] sm:$0xff]
      %v2650 = vld [vmem:[%s7 + $0x18] sm:$0xff]
      %v2651 = vld [vmem:[%s7 + $0x20] sm:$0xff]
      %v2652 = vld [vmem:[%s7 + $0x28] sm:$0xff]
      %v2653 = vld [vmem:[%s7 + $0x30] sm:$0xff]
      %v2654 = vld [vmem:[%s7 + $0x38] sm:$0xff]
      %v2655 = vld [vmem:[%s7 + $0x40] sm:$0xff]
      %v2656 = vld [vmem:[%s7 + $0x48] sm:$0xff]
      %v2657 = vld [vmem:[%s7 + $0x50] sm:$0xff]
      %v2658 = vld [vmem:[%s7 + $0x58] sm:$0xff]
      %v2659 = vld [vmem:[%s7 + $0x60] sm:$0xff]
      %v2660 = vld [vmem:[%s7 + $0x68] sm:$0xff]
      %v2661 = vld [vmem:[%s7 + $0x70] sm:$0xff]
      %v2662 = vld [vmem:[%s7 + $0x78] sm:$0xff]
      %2663 = vmatpush.msra.mxu0 %v2662
      %2664 = vmatpush.msra.mxu0 %v2661
      %2665 = vmatpush.msra.mxu0 %v2660
      %2666 = vmatpush.msra.mxu0 %v2659
      %2667 = vmatpush.msra.mxu0 %v2658
      %2668 = vmatpush.msra.mxu0 %v2657
      %2669 = vmatpush.msra.mxu0 %v2656
      %2670 = vmatpush.msra.mxu0 %v2655
      %2671 = vmatpush.msra.mxu0 %v2654
      %2672 = vmatpush.msra.mxu0 %v2653
      %2673 = vmatpush.msra.mxu0 %v2652
      %2674 = vmatpush.msra.mxu0 %v2651
      %2675 = vmatpush.msra.mxu0 %v2650
      %2676 = vmatpush.msra.mxu0 %v2649
      %2677 = vmatpush.msra.mxu0 %v2648
      %2678 = vmatpush.msra.mxu0 %v2647
      %2679 = vmatmul.f32.gmra.mxu0 %v2584
      %v2680 = vpop.f32.mrf.mxu0
      %v2681 = vadd.f32 0.0, %v2680
      %2682 = vmatmul.f32.gmra.mxu0 %v2586
      %v2683 = vpop.f32.mrf.mxu0
      %v2684 = vadd.f32 0.0, %v2683
      %2685 = vmatmul.f32.gmra.mxu0 %v2588
      %v2686 = vpop.f32.mrf.mxu0
      %v2687 = vadd.f32 0.0, %v2686
      %2688 = vmatmul.f32.gmra.mxu0 %v2590
      %v2689 = vpop.f32.mrf.mxu0
      %v2690 = vadd.f32 0.0, %v2689
      %2691 = vmatmul.f32.gmra.mxu0 %v2592
      %v2692 = vpop.f32.mrf.mxu0
      %v2693 = vadd.f32 0.0, %v2692
      %2694 = vmatmul.f32.gmra.mxu0 %v2594
      %v2695 = vpop.f32.mrf.mxu0
      %v2696 = vadd.f32 0.0, %v2695
      %2697 = vmatmul.f32.gmra.mxu0 %v2596
      %v2698 = vpop.f32.mrf.mxu0
      %v2699 = vadd.f32 0.0, %v2698
      %2700 = vmatmul.f32.gmra.mxu0 %v2598
      %v2701 = vpop.f32.mrf.mxu0
      %v2702 = vadd.f32 0.0, %v2701
      %2703 = vmatmul.f32.gmra.mxu0 %v2600
      %v2704 = vpop.f32.mrf.mxu0
      %v2705 = vadd.f32 0.0, %v2704
      %2706 = vmatmul.f32.gmra.mxu0 %v2602
      %v2707 = vpop.f32.mrf.mxu0
      %v2708 = vadd.f32 0.0, %v2707
      %2709 = vmatmul.f32.gmra.mxu0 %v2604
      %v2710 = vpop.f32.mrf.mxu0
      %v2711 = vadd.f32 0.0, %v2710
      %2712 = vmatmul.f32.gmra.mxu0 %v2606
      %v2713 = vpop.f32.mrf.mxu0
      %v2714 = vadd.f32 0.0, %v2713
      %2715 = vmatmul.f32.gmra.mxu0 %v2608
      %v2716 = vpop.f32.mrf.mxu0
      %v2717 = vadd.f32 0.0, %v2716
      %2718 = vmatmul.f32.gmra.mxu0 %v2610
      %v2719 = vpop.f32.mrf.mxu0
      %v2720 = vadd.f32 0.0, %v2719
      %2721 = vmatmul.f32.gmra.mxu0 %v2612
      %v2722 = vpop.f32.mrf.mxu0
      %v2723 = vadd.f32 0.0, %v2722
      %2724 = vmatmul.f32.gmra.mxu0 %v2614
      %v2725 = vpop.f32.mrf.mxu0
      %v2726 = vadd.f32 0.0, %v2725
      %2727 = vmatmul.f32.gmra.mxu0 %v2616
      %v2728 = vpop.f32.mrf.mxu0
      %v2729 = vadd.f32 0.0, %v2728
      %2730 = vmatmul.f32.gmra.mxu0 %v2618
      %v2731 = vpop.f32.mrf.mxu0
      %v2732 = vadd.f32 0.0, %v2731
      %2733 = vmatmul.f32.gmra.mxu0 %v2620
      %v2734 = vpop.f32.mrf.mxu0
      %v2735 = vadd.f32 0.0, %v2734
      %2736 = vmatmul.f32.gmra.mxu0 %v2622
      %v2737 = vpop.f32.mrf.mxu0
      %v2738 = vadd.f32 0.0, %v2737
      %2739 = vmatmul.f32.gmra.mxu0 %v2624
      %v2740 = vpop.f32.mrf.mxu0
      %v2741 = vadd.f32 0.0, %v2740
      %2742 = vmatmul.f32.gmra.mxu0 %v2626
      %v2743 = vpop.f32.mrf.mxu0
      %v2744 = vadd.f32 0.0, %v2743
      %2745 = vmatmul.f32.gmra.mxu0 %v2628
      %v2746 = vpop.f32.mrf.mxu0
      %v2747 = vadd.f32 0.0, %v2746
      %2748 = vmatmul.f32.gmra.mxu0 %v2630
      %v2749 = vpop.f32.mrf.mxu0
      %v2750 = vadd.f32 0.0, %v2749
      %2751 = vmatmul.f32.gmra.mxu0 %v2632
      %v2752 = vpop.f32.mrf.mxu0
      %v2753 = vadd.f32 0.0, %v2752
      %2754 = vmatmul.f32.gmra.mxu0 %v2634
      %v2755 = vpop.f32.mrf.mxu0
      %v2756 = vadd.f32 0.0, %v2755
      %2757 = vmatmul.f32.gmra.mxu0 %v2636
      %v2758 = vpop.f32.mrf.mxu0
      %v2759 = vadd.f32 0.0, %v2758
      %2760 = vmatmul.f32.gmra.mxu0 %v2638
      %v2761 = vpop.f32.mrf.mxu0
      %v2762 = vadd.f32 0.0, %v2761
      %2763 = vmatmul.f32.gmra.mxu0 %v2640
      %v2764 = vpop.f32.mrf.mxu0
      %v2765 = vadd.f32 0.0, %v2764
      %2766 = vmatmul.f32.gmra.mxu0 %v2642
      %v2767 = vpop.f32.mrf.mxu0
      %v2768 = vadd.f32 0.0, %v2767
      %2769 = vmatmul.f32.gmra.mxu0 %v2644
      %v2770 = vpop.f32.mrf.mxu0
      %v2771 = vadd.f32 0.0, %v2770
      %2772 = vmatmul.f32.gmra.mxu0 %v2646
      %v2773 = vpop.f32.mrf.mxu0
      %v2774 = vadd.f32 0.0, %v2773
      %2775 = vdwg.mxu0
      %v2776 = vmax.f32 %v2681, 1e-30
      %v2777 = vmax.f32 %v2684, 1e-30
      %v2778 = vmax.f32 %v2687, 1e-30
      %v2779 = vmax.f32 %v2690, 1e-30
      %v2780 = vmax.f32 %v2693, 1e-30
      %v2781 = vmax.f32 %v2696, 1e-30
      %v2782 = vmax.f32 %v2699, 1e-30
      %v2783 = vmax.f32 %v2702, 1e-30
      %v2784 = vmax.f32 %v2705, 1e-30
      %v2785 = vmax.f32 %v2708, 1e-30
      %v2786 = vmax.f32 %v2711, 1e-30
      %v2787 = vmax.f32 %v2714, 1e-30
      %v2788 = vmax.f32 %v2717, 1e-30
      %v2789 = vmax.f32 %v2720, 1e-30
      %v2790 = vmax.f32 %v2723, 1e-30
      %v2791 = vmax.f32 %v2726, 1e-30
      %v2792 = vmax.f32 %v2729, 1e-30
      %v2793 = vmax.f32 %v2732, 1e-30
      %v2794 = vmax.f32 %v2735, 1e-30
      %v2795 = vmax.f32 %v2738, 1e-30
      %v2796 = vmax.f32 %v2741, 1e-30
      %v2797 = vmax.f32 %v2744, 1e-30
      %v2798 = vmax.f32 %v2747, 1e-30
      %v2799 = vmax.f32 %v2750, 1e-30
      %v2800 = vmax.f32 %v2753, 1e-30
      %v2801 = vmax.f32 %v2756, 1e-30
      %v2802 = vmax.f32 %v2759, 1e-30
      %v2803 = vmax.f32 %v2762, 1e-30
      %v2804 = vmax.f32 %v2765, 1e-30
      %v2805 = vmax.f32 %v2768, 1e-30
      %v2806 = vmax.f32 %v2771, 1e-30
      %v2807 = vmax.f32 %v2774, 1e-30
      %v2808 = vrcp.pop %v2776
      %v2809 = vrcp.pop %v2777
      %v2810 = vrcp.pop %v2778
      %v2811 = vrcp.pop %v2779
      %v2812 = vrcp.pop %v2780
      %v2813 = vrcp.pop %v2781
      %v2814 = vrcp.pop %v2782
      %v2815 = vrcp.pop %v2783
      %v2816 = vrcp.pop %v2784
      %v2817 = vrcp.pop %v2785
      %v2818 = vrcp.pop %v2786
      %v2819 = vrcp.pop %v2787
      %v2820 = vrcp.pop %v2788
      %v2821 = vrcp.pop %v2789
      %v2822 = vrcp.pop %v2790
      %v2823 = vrcp.pop %v2791
      %v2824 = vrcp.pop %v2792
      %v2825 = vrcp.pop %v2793
      %v2826 = vrcp.pop %v2794
      %v2827 = vrcp.pop %v2795
      %v2828 = vrcp.pop %v2796
      %v2829 = vrcp.pop %v2797
      %v2830 = vrcp.pop %v2798
      %v2831 = vrcp.pop %v2799
      %v2832 = vrcp.pop %v2800
      %v2833 = vrcp.pop %v2801
      %v2834 = vrcp.pop %v2802
      %v2835 = vrcp.pop %v2803
      %v2836 = vrcp.pop %v2804
      %v2837 = vrcp.pop %v2805
      %v2838 = vrcp.pop %v2806
      %v2839 = vrcp.pop %v2807
      %v2841 = vsel %vm1588, %v2808, 0
      %v2844 = vsel %vm1588, %v2809, 0
      %v2847 = vsel %vm1588, %v2810, 0
      %v2850 = vsel %vm1588, %v2811, 0
      %v2853 = vsel %vm1588, %v2812, 0
      %v2856 = vsel %vm1588, %v2813, 0
      %v2859 = vsel %vm1588, %v2814, 0
      %v2862 = vsel %vm1588, %v2815, 0
      %v2865 = vsel %vm1588, %v2816, 0
      %v2868 = vsel %vm1588, %v2817, 0
      %v2871 = vsel %vm1588, %v2818, 0
      %v2874 = vsel %vm1588, %v2819, 0
      %v2877 = vsel %vm1588, %v2820, 0
      %v2880 = vsel %vm1588, %v2821, 0
      %v2883 = vsel %vm1588, %v2822, 0
      %v2886 = vsel %vm1588, %v2823, 0
      %v2889 = vsel %vm1588, %v2824, 0
      %v2892 = vsel %vm1588, %v2825, 0
      %v2895 = vsel %vm1588, %v2826, 0
      %v2898 = vsel %vm1588, %v2827, 0
      %v2901 = vsel %vm1588, %v2828, 0
      %v2904 = vsel %vm1588, %v2829, 0
      %v2907 = vsel %vm1588, %v2830, 0
      %v2910 = vsel %vm1588, %v2831, 0
      %v2913 = vsel %vm1588, %v2832, 0
      %v2916 = vsel %vm1588, %v2833, 0
      %v2919 = vsel %vm1588, %v2834, 0
      %v2922 = vsel %vm1588, %v2835, 0
      %v2925 = vsel %vm1588, %v2836, 0
      %v2928 = vsel %vm1588, %v2837, 0
      %v2931 = vsel %vm1588, %v2838, 0
      %v2934 = vsel %vm1588, %v2839, 0
      %2936 = vmatpush.msra.mxu0 0.0
      %2937 = vmatpush.msra.mxu0 0.0
      %2938 = vmatpush.msra.mxu0 0.0
      %2939 = vmatpush.msra.mxu0 0.0
      %2940 = vmatpush.msra.mxu0 0.0
      %2941 = vmatpush.msra.mxu0 0.0
      %2942 = vmatpush.msra.mxu0 0.0
      %2943 = vmatpush.msra.mxu0 0.0
      %2944 = vmatpush.msra.mxu0 0.0
      %2945 = vmatpush.msra.mxu0 0.0
      %2946 = vmatpush.msra.mxu0 0.0
      %2947 = vmatpush.msra.mxu0 0.0
      %2948 = vmatpush.msra.mxu0 0.0
      %2949 = vmatpush.msra.mxu0 0.0
      %2950 = vmatpush.msra.mxu0 0.0
      %2951 = vmatpush.msra.mxu0 %v1655
      %2952 = vmatmul.f32.gmra.mxu0 %v2841
      %v2953 = vpop.f32.mrf.mxu0
      %v2954 = vadd.f32 0.0, %v2953
      %2955 = vmatmul.f32.gmra.mxu0 %v2844
      %v2956 = vpop.f32.mrf.mxu0
      %v2957 = vadd.f32 0.0, %v2956
      %2958 = vmatmul.f32.gmra.mxu0 %v2847
      %v2959 = vpop.f32.mrf.mxu0
      %v2960 = vadd.f32 0.0, %v2959
      %2961 = vmatmul.f32.gmra.mxu0 %v2850
      %v2962 = vpop.f32.mrf.mxu0
      %v2963 = vadd.f32 0.0, %v2962
      %2964 = vmatmul.f32.gmra.mxu0 %v2853
      %v2965 = vpop.f32.mrf.mxu0
      %v2966 = vadd.f32 0.0, %v2965
      %2967 = vmatmul.f32.gmra.mxu0 %v2856
      %v2968 = vpop.f32.mrf.mxu0
      %v2969 = vadd.f32 0.0, %v2968
      %2970 = vmatmul.f32.gmra.mxu0 %v2859
      %v2971 = vpop.f32.mrf.mxu0
      %v2972 = vadd.f32 0.0, %v2971
      %2973 = vmatmul.f32.gmra.mxu0 %v2862
      %v2974 = vpop.f32.mrf.mxu0
      %v2975 = vadd.f32 0.0, %v2974
      %2976 = vmatmul.f32.gmra.mxu0 %v2865
      %v2977 = vpop.f32.mrf.mxu0
      %v2978 = vadd.f32 0.0, %v2977
      %2979 = vmatmul.f32.gmra.mxu0 %v2868
      %v2980 = vpop.f32.mrf.mxu0
      %v2981 = vadd.f32 0.0, %v2980
      %2982 = vmatmul.f32.gmra.mxu0 %v2871
      %v2983 = vpop.f32.mrf.mxu0
      %v2984 = vadd.f32 0.0, %v2983
      %2985 = vmatmul.f32.gmra.mxu0 %v2874
      %v2986 = vpop.f32.mrf.mxu0
      %v2987 = vadd.f32 0.0, %v2986
      %2988 = vmatmul.f32.gmra.mxu0 %v2877
      %v2989 = vpop.f32.mrf.mxu0
      %v2990 = vadd.f32 0.0, %v2989
      %2991 = vmatmul.f32.gmra.mxu0 %v2880
      %v2992 = vpop.f32.mrf.mxu0
      %v2993 = vadd.f32 0.0, %v2992
      %2994 = vmatmul.f32.gmra.mxu0 %v2883
      %v2995 = vpop.f32.mrf.mxu0
      %v2996 = vadd.f32 0.0, %v2995
      %2997 = vmatmul.f32.gmra.mxu0 %v2886
      %v2998 = vpop.f32.mrf.mxu0
      %v2999 = vadd.f32 0.0, %v2998
      %3000 = vmatmul.f32.gmra.mxu0 %v2889
      %v3001 = vpop.f32.mrf.mxu0
      %v3002 = vadd.f32 0.0, %v3001
      %3003 = vmatmul.f32.gmra.mxu0 %v2892
      %v3004 = vpop.f32.mrf.mxu0
      %v3005 = vadd.f32 0.0, %v3004
      %3006 = vmatmul.f32.gmra.mxu0 %v2895
      %v3007 = vpop.f32.mrf.mxu0
      %v3008 = vadd.f32 0.0, %v3007
      %3009 = vmatmul.f32.gmra.mxu0 %v2898
      %v3010 = vpop.f32.mrf.mxu0
      %v3011 = vadd.f32 0.0, %v3010
      %3012 = vmatmul.f32.gmra.mxu0 %v2901
      %v3013 = vpop.f32.mrf.mxu0
      %v3014 = vadd.f32 0.0, %v3013
      %3015 = vmatmul.f32.gmra.mxu0 %v2904
      %v3016 = vpop.f32.mrf.mxu0
      %v3017 = vadd.f32 0.0, %v3016
      %3018 = vmatmul.f32.gmra.mxu0 %v2907
      %v3019 = vpop.f32.mrf.mxu0
      %v3020 = vadd.f32 0.0, %v3019
      %3021 = vmatmul.f32.gmra.mxu0 %v2910
      %v3022 = vpop.f32.mrf.mxu0
      %v3023 = vadd.f32 0.0, %v3022
      %3024 = vmatmul.f32.gmra.mxu0 %v2913
      %v3025 = vpop.f32.mrf.mxu0
      %v3026 = vadd.f32 0.0, %v3025
      %3027 = vmatmul.f32.gmra.mxu0 %v2916
      %v3028 = vpop.f32.mrf.mxu0
      %v3029 = vadd.f32 0.0, %v3028
      %3030 = vmatmul.f32.gmra.mxu0 %v2919
      %v3031 = vpop.f32.mrf.mxu0
      %v3032 = vadd.f32 0.0, %v3031
      %3033 = vmatmul.f32.gmra.mxu0 %v2922
      %v3034 = vpop.f32.mrf.mxu0
      %v3035 = vadd.f32 0.0, %v3034
      %3036 = vmatmul.f32.gmra.mxu0 %v2925
      %v3037 = vpop.f32.mrf.mxu0
      %v3038 = vadd.f32 0.0, %v3037
      %3039 = vmatmul.f32.gmra.mxu0 %v2928
      %v3040 = vpop.f32.mrf.mxu0
      %v3041 = vadd.f32 0.0, %v3040
      %3042 = vmatmul.f32.gmra.mxu0 %v2931
      %v3043 = vpop.f32.mrf.mxu0
      %v3044 = vadd.f32 0.0, %v3043
      %3045 = vmatmul.f32.gmra.mxu0 %v2934
      %v3046 = vpop.f32.mrf.mxu0
      %v3047 = vadd.f32 0.0, %v3046
      %3048 = vdwg.mxu0
      %v3049 = vmul.f32 %v2584, %v2954
      %v3050 = vmul.f32 %v2586, %v2957
      %v3051 = vmul.f32 %v2588, %v2960
      %v3052 = vmul.f32 %v2590, %v2963
      %v3053 = vmul.f32 %v2592, %v2966
      %v3054 = vmul.f32 %v2594, %v2969
      %v3055 = vmul.f32 %v2596, %v2972
      %v3056 = vmul.f32 %v2598, %v2975
      %v3057 = vmul.f32 %v2600, %v2978
      %v3058 = vmul.f32 %v2602, %v2981
      %v3059 = vmul.f32 %v2604, %v2984
      %v3060 = vmul.f32 %v2606, %v2987
      %v3061 = vmul.f32 %v2608, %v2990
      %v3062 = vmul.f32 %v2610, %v2993
      %v3063 = vmul.f32 %v2612, %v2996
      %v3064 = vmul.f32 %v2614, %v2999
      %v3065 = vmul.f32 %v2616, %v3002
      %v3066 = vmul.f32 %v2618, %v3005
      %v3067 = vmul.f32 %v2620, %v3008
      %v3068 = vmul.f32 %v2622, %v3011
      %v3069 = vmul.f32 %v2624, %v3014
      %v3070 = vmul.f32 %v2626, %v3017
      %v3071 = vmul.f32 %v2628, %v3020
      %v3072 = vmul.f32 %v2630, %v3023
      %v3073 = vmul.f32 %v2632, %v3026
      %v3074 = vmul.f32 %v2634, %v3029
      %v3075 = vmul.f32 %v2636, %v3032
      %v3076 = vmul.f32 %v2638, %v3035
      %v3077 = vmul.f32 %v2640, %v3038
      %v3078 = vmul.f32 %v2642, %v3041
      %v3079 = vmul.f32 %v2644, %v3044
      %v3080 = vmul.f32 %v2646, %v3047
      %v3081 = vld [vmem:[%s11] sm:$0xff]
      %v3082 = vld [vmem:[%s11 + $0x8] sm:$0xff]
      %v3083 = vld [vmem:[%s11 + $0x10] sm:$0xff]
      %v3084 = vld [vmem:[%s11 + $0x18] sm:$0xff]
      %v3085 = vld [vmem:[%s11 + $0x20] sm:$0xff]
      %v3086 = vld [vmem:[%s11 + $0x28] sm:$0xff]
      %v3087 = vld [vmem:[%s11 + $0x30] sm:$0xff]
      %v3088 = vld [vmem:[%s11 + $0x38] sm:$0xff]
      %v3089 = vld [vmem:[%s11 + $0x40] sm:$0xff]
      %v3090 = vld [vmem:[%s11 + $0x48] sm:$0xff]
      %v3091 = vld [vmem:[%s11 + $0x50] sm:$0xff]
      %v3092 = vld [vmem:[%s11 + $0x58] sm:$0xff]
      %v3093 = vld [vmem:[%s11 + $0x60] sm:$0xff]
      %v3094 = vld [vmem:[%s11 + $0x68] sm:$0xff]
      %v3095 = vld [vmem:[%s11 + $0x70] sm:$0xff]
      %v3096 = vld [vmem:[%s11 + $0x78] sm:$0xff]
      %v3098 = vsel %vm467, %v1460, 0
      %v3101 = vsel %vm467, %v1461, 0
      %v3104 = vsel %vm467, %v1462, 0
      %v3107 = vsel %vm467, %v1463, 0
      %v3110 = vsel %vm467, %v1464, 0
      %v3113 = vsel %vm467, %v1465, 0
      %v3116 = vsel %vm467, %v1466, 0
      %v3119 = vsel %vm467, %v1467, 0
      %v3122 = vsel %vm467, %v1468, 0
      %v3125 = vsel %vm467, %v1469, 0
      %v3128 = vsel %vm467, %v1470, 0
      %v3131 = vsel %vm467, %v1471, 0
      %v3134 = vsel %vm467, %v1472, 0
      %v3137 = vsel %vm467, %v1473, 0
      %v3140 = vsel %vm467, %v1474, 0
      %v3143 = vsel %vm467, %v1475, 0
      %3145 = vmatpush.msra.mxu0 0.0
      %3146 = vmatpush.msra.mxu0 0.0
      %3147 = vmatpush.msra.mxu0 0.0
      %3148 = vmatpush.msra.mxu0 0.0
      %3149 = vmatpush.msra.mxu0 0.0
      %3150 = vmatpush.msra.mxu0 0.0
      %3151 = vmatpush.msra.mxu0 0.0
      %3152 = vmatpush.msra.mxu0 0.0
      %3153 = vmatpush.msra.mxu0 0.0
      %3154 = vmatpush.msra.mxu0 0.0
      %3155 = vmatpush.msra.mxu0 0.0
      %3156 = vmatpush.msra.mxu0 0.0
      %3157 = vmatpush.msra.mxu0 %v1373
      %3158 = vmatpush.msra.mxu0 %v1370
      %3159 = vmatpush.msra.mxu0 %v1367
      %3160 = vmatpush.msra.mxu0 %v1364
      %3161 = vmatmul.f32.gmra.mxu0 %v3098
      %v3162 = vpop.f32.mrf.mxu0
      %v3163 = vadd.f32 0.0, %v3162
      %3164 = vmatmul.f32.gmra.mxu0 %v3101
      %v3165 = vpop.f32.mrf.mxu0
      %v3166 = vadd.f32 0.0, %v3165
      %3167 = vmatmul.f32.gmra.mxu0 %v3104
      %v3168 = vpop.f32.mrf.mxu0
      %v3169 = vadd.f32 0.0, %v3168
      %3170 = vmatmul.f32.gmra.mxu0 %v3107
      %v3171 = vpop.f32.mrf.mxu0
      %v3172 = vadd.f32 0.0, %v3171
      %3173 = vmatmul.f32.gmra.mxu0 %v3110
      %v3174 = vpop.f32.mrf.mxu0
      %v3175 = vadd.f32 0.0, %v3174
      %3176 = vmatmul.f32.gmra.mxu0 %v3113
      %v3177 = vpop.f32.mrf.mxu0
      %v3178 = vadd.f32 0.0, %v3177
      %3179 = vmatmul.f32.gmra.mxu0 %v3116
      %v3180 = vpop.f32.mrf.mxu0
      %v3181 = vadd.f32 0.0, %v3180
      %3182 = vmatmul.f32.gmra.mxu0 %v3119
      %v3183 = vpop.f32.mrf.mxu0
      %v3184 = vadd.f32 0.0, %v3183
      %3185 = vmatmul.f32.gmra.mxu0 %v3122
      %v3186 = vpop.f32.mrf.mxu0
      %v3187 = vadd.f32 0.0, %v3186
      %3188 = vmatmul.f32.gmra.mxu0 %v3125
      %v3189 = vpop.f32.mrf.mxu0
      %v3190 = vadd.f32 0.0, %v3189
      %3191 = vmatmul.f32.gmra.mxu0 %v3128
      %v3192 = vpop.f32.mrf.mxu0
      %v3193 = vadd.f32 0.0, %v3192
      %3194 = vmatmul.f32.gmra.mxu0 %v3131
      %v3195 = vpop.f32.mrf.mxu0
      %v3196 = vadd.f32 0.0, %v3195
      %3197 = vmatmul.f32.gmra.mxu0 %v3134
      %v3198 = vpop.f32.mrf.mxu0
      %v3199 = vadd.f32 0.0, %v3198
      %3200 = vmatmul.f32.gmra.mxu0 %v3137
      %v3201 = vpop.f32.mrf.mxu0
      %v3202 = vadd.f32 0.0, %v3201
      %3203 = vmatmul.f32.gmra.mxu0 %v3140
      %v3204 = vpop.f32.mrf.mxu0
      %v3205 = vadd.f32 0.0, %v3204
      %3206 = vmatmul.f32.gmra.mxu0 %v3143
      %v3207 = vpop.f32.mrf.mxu0
      %v3208 = vadd.f32 0.0, %v3207
      %3209 = vdwg.mxu0
      %v3210 = vmul.f32 %v3163, %v3081
      %v3211 = vmul.f32 %v3166, %v3082
      %v3212 = vmul.f32 %v3169, %v3083
      %v3213 = vmul.f32 %v3172, %v3084
      %v3214 = vmul.f32 %v3175, %v3085
      %v3215 = vmul.f32 %v3178, %v3086
      %v3216 = vmul.f32 %v3181, %v3087
      %v3217 = vmul.f32 %v3184, %v3088
      %v3218 = vmul.f32 %v3187, %v3089
      %v3219 = vmul.f32 %v3190, %v3090
      %v3220 = vmul.f32 %v3193, %v3091
      %v3221 = vmul.f32 %v3196, %v3092
      %v3222 = vmul.f32 %v3199, %v3093
      %v3223 = vmul.f32 %v3202, %v3094
      %v3224 = vmul.f32 %v3205, %v3095
      %v3225 = vmul.f32 %v3208, %v3096
      %3226 = vmatpush.msra.mxu0 %v3225
      %3227 = vmatpush.msra.mxu0 %v3224
      %3228 = vmatpush.msra.mxu0 %v3223
      %3229 = vmatpush.msra.mxu0 %v3222
      %3230 = vmatpush.msra.mxu0 %v3221
      %3231 = vmatpush.msra.mxu0 %v3220
      %3232 = vmatpush.msra.mxu0 %v3219
      %3233 = vmatpush.msra.mxu0 %v3218
      %3234 = vmatpush.msra.mxu0 %v3217
      %3235 = vmatpush.msra.mxu0 %v3216
      %3236 = vmatpush.msra.mxu0 %v3215
      %3237 = vmatpush.msra.mxu0 %v3214
      %3238 = vmatpush.msra.mxu0 %v3213
      %3239 = vmatpush.msra.mxu0 %v3212
      %3240 = vmatpush.msra.mxu0 %v3211
      %3241 = vmatpush.msra.mxu0 %v3210
      %3242 = vmatmul.f32.gmra.mxu0 %v3049
      %v3243 = vpop.f32.mrf.mxu0
      %v3244 = vadd.f32 0.0, %v3243
      %3245 = vmatmul.f32.gmra.mxu0 %v3050
      %v3246 = vpop.f32.mrf.mxu0
      %v3247 = vadd.f32 0.0, %v3246
      %3248 = vmatmul.f32.gmra.mxu0 %v3051
      %v3249 = vpop.f32.mrf.mxu0
      %v3250 = vadd.f32 0.0, %v3249
      %3251 = vmatmul.f32.gmra.mxu0 %v3052
      %v3252 = vpop.f32.mrf.mxu0
      %v3253 = vadd.f32 0.0, %v3252
      %3254 = vdwg.mxu0
      %3255 = vmatpush.msra.mxu0 0.0
      %3256 = vmatpush.msra.mxu0 0.0
      %3257 = vmatpush.msra.mxu0 0.0
      %3258 = vmatpush.msra.mxu0 0.0
      %3259 = vmatpush.msra.mxu0 0.0
      %3260 = vmatpush.msra.mxu0 0.0
      %3261 = vmatpush.msra.mxu0 0.0
      %3262 = vmatpush.msra.mxu0 0.0
      %3263 = vmatpush.msra.mxu0 0.0
      %3264 = vmatpush.msra.mxu0 0.0
      %3265 = vmatpush.msra.mxu0 0.0
      %3266 = vmatpush.msra.mxu0 0.0
      %3267 = vmatpush.msra.mxu0 %v1385
      %3268 = vmatpush.msra.mxu0 %v1382
      %3269 = vmatpush.msra.mxu0 %v1379
      %3270 = vmatpush.msra.mxu0 %v1376
      %3271 = vmatmul.f32.gmra.mxu0 %v3098
      %v3272 = vpop.f32.mrf.mxu0
      %v3273 = vadd.f32 0.0, %v3272
      %3274 = vmatmul.f32.gmra.mxu0 %v3101
      %v3275 = vpop.f32.mrf.mxu0
      %v3276 = vadd.f32 0.0, %v3275
      %3277 = vmatmul.f32.gmra.mxu0 %v3104
      %v3278 = vpop.f32.mrf.mxu0
      %v3279 = vadd.f32 0.0, %v3278
      %3280 = vmatmul.f32.gmra.mxu0 %v3107
      %v3281 = vpop.f32.mrf.mxu0
      %v3282 = vadd.f32 0.0, %v3281
      %3283 = vmatmul.f32.gmra.mxu0 %v3110
      %v3284 = vpop.f32.mrf.mxu0
      %v3285 = vadd.f32 0.0, %v3284
      %3286 = vmatmul.f32.gmra.mxu0 %v3113
      %v3287 = vpop.f32.mrf.mxu0
      %v3288 = vadd.f32 0.0, %v3287
      %3289 = vmatmul.f32.gmra.mxu0 %v3116
      %v3290 = vpop.f32.mrf.mxu0
      %v3291 = vadd.f32 0.0, %v3290
      %3292 = vmatmul.f32.gmra.mxu0 %v3119
      %v3293 = vpop.f32.mrf.mxu0
      %v3294 = vadd.f32 0.0, %v3293
      %3295 = vmatmul.f32.gmra.mxu0 %v3122
      %v3296 = vpop.f32.mrf.mxu0
      %v3297 = vadd.f32 0.0, %v3296
      %3298 = vmatmul.f32.gmra.mxu0 %v3125
      %v3299 = vpop.f32.mrf.mxu0
      %v3300 = vadd.f32 0.0, %v3299
      %3301 = vmatmul.f32.gmra.mxu0 %v3128
      %v3302 = vpop.f32.mrf.mxu0
      %v3303 = vadd.f32 0.0, %v3302
      %3304 = vmatmul.f32.gmra.mxu0 %v3131
      %v3305 = vpop.f32.mrf.mxu0
      %v3306 = vadd.f32 0.0, %v3305
      %3307 = vmatmul.f32.gmra.mxu0 %v3134
      %v3308 = vpop.f32.mrf.mxu0
      %v3309 = vadd.f32 0.0, %v3308
      %3310 = vmatmul.f32.gmra.mxu0 %v3137
      %v3311 = vpop.f32.mrf.mxu0
      %v3312 = vadd.f32 0.0, %v3311
      %3313 = vmatmul.f32.gmra.mxu0 %v3140
      %v3314 = vpop.f32.mrf.mxu0
      %v3315 = vadd.f32 0.0, %v3314
      %3316 = vmatmul.f32.gmra.mxu0 %v3143
      %v3317 = vpop.f32.mrf.mxu0
      %v3318 = vadd.f32 0.0, %v3317
      %3319 = vdwg.mxu0
      %v3320 = vmul.f32 %v3273, %v3081
      %v3321 = vmul.f32 %v3276, %v3082
      %v3322 = vmul.f32 %v3279, %v3083
      %v3323 = vmul.f32 %v3282, %v3084
      %v3324 = vmul.f32 %v3285, %v3085
      %v3325 = vmul.f32 %v3288, %v3086
      %v3326 = vmul.f32 %v3291, %v3087
      %v3327 = vmul.f32 %v3294, %v3088
      %v3328 = vmul.f32 %v3297, %v3089
      %v3329 = vmul.f32 %v3300, %v3090
      %v3330 = vmul.f32 %v3303, %v3091
      %v3331 = vmul.f32 %v3306, %v3092
      %v3332 = vmul.f32 %v3309, %v3093
      %v3333 = vmul.f32 %v3312, %v3094
      %v3334 = vmul.f32 %v3315, %v3095
      %v3335 = vmul.f32 %v3318, %v3096
      %3336 = vmatpush.msra.mxu0 %v3335
      %3337 = vmatpush.msra.mxu0 %v3334
      %3338 = vmatpush.msra.mxu0 %v3333
      %3339 = vmatpush.msra.mxu0 %v3332
      %3340 = vmatpush.msra.mxu0 %v3331
      %3341 = vmatpush.msra.mxu0 %v3330
      %3342 = vmatpush.msra.mxu0 %v3329
      %3343 = vmatpush.msra.mxu0 %v3328
      %3344 = vmatpush.msra.mxu0 %v3327
      %3345 = vmatpush.msra.mxu0 %v3326
      %3346 = vmatpush.msra.mxu0 %v3325
      %3347 = vmatpush.msra.mxu0 %v3324
      %3348 = vmatpush.msra.mxu0 %v3323
      %3349 = vmatpush.msra.mxu0 %v3322
      %3350 = vmatpush.msra.mxu0 %v3321
      %3351 = vmatpush.msra.mxu0 %v3320
      %3352 = vmatmul.f32.gmra.mxu0 %v3053
      %v3353 = vpop.f32.mrf.mxu0
      %v3354 = vadd.f32 0.0, %v3353
      %3355 = vmatmul.f32.gmra.mxu0 %v3054
      %v3356 = vpop.f32.mrf.mxu0
      %v3357 = vadd.f32 0.0, %v3356
      %3358 = vmatmul.f32.gmra.mxu0 %v3055
      %v3359 = vpop.f32.mrf.mxu0
      %v3360 = vadd.f32 0.0, %v3359
      %3361 = vmatmul.f32.gmra.mxu0 %v3056
      %v3362 = vpop.f32.mrf.mxu0
      %v3363 = vadd.f32 0.0, %v3362
      %3364 = vdwg.mxu0
      %3365 = vmatpush.msra.mxu0 0.0
      %3366 = vmatpush.msra.mxu0 0.0
      %3367 = vmatpush.msra.mxu0 0.0
      %3368 = vmatpush.msra.mxu0 0.0
      %3369 = vmatpush.msra.mxu0 0.0
      %3370 = vmatpush.msra.mxu0 0.0
      %3371 = vmatpush.msra.mxu0 0.0
      %3372 = vmatpush.msra.mxu0 0.0
      %3373 = vmatpush.msra.mxu0 0.0
      %3374 = vmatpush.msra.mxu0 0.0
      %3375 = vmatpush.msra.mxu0 0.0
      %3376 = vmatpush.msra.mxu0 0.0
      %3377 = vmatpush.msra.mxu0 %v1397
      %3378 = vmatpush.msra.mxu0 %v1394
      %3379 = vmatpush.msra.mxu0 %v1391
      %3380 = vmatpush.msra.mxu0 %v1388
      %3381 = vmatmul.f32.gmra.mxu0 %v3098
      %v3382 = vpop.f32.mrf.mxu0
      %v3383 = vadd.f32 0.0, %v3382
      %3384 = vmatmul.f32.gmra.mxu0 %v3101
      %v3385 = vpop.f32.mrf.mxu0
      %v3386 = vadd.f32 0.0, %v3385
      %3387 = vmatmul.f32.gmra.mxu0 %v3104
      %v3388 = vpop.f32.mrf.mxu0
      %v3389 = vadd.f32 0.0, %v3388
      %3390 = vmatmul.f32.gmra.mxu0 %v3107
      %v3391 = vpop.f32.mrf.mxu0
      %v3392 = vadd.f32 0.0, %v3391
      %3393 = vmatmul.f32.gmra.mxu0 %v3110
      %v3394 = vpop.f32.mrf.mxu0
      %v3395 = vadd.f32 0.0, %v3394
      %3396 = vmatmul.f32.gmra.mxu0 %v3113
      %v3397 = vpop.f32.mrf.mxu0
      %v3398 = vadd.f32 0.0, %v3397
      %3399 = vmatmul.f32.gmra.mxu0 %v3116
      %v3400 = vpop.f32.mrf.mxu0
      %v3401 = vadd.f32 0.0, %v3400
      %3402 = vmatmul.f32.gmra.mxu0 %v3119
      %v3403 = vpop.f32.mrf.mxu0
      %v3404 = vadd.f32 0.0, %v3403
      %3405 = vmatmul.f32.gmra.mxu0 %v3122
      %v3406 = vpop.f32.mrf.mxu0
      %v3407 = vadd.f32 0.0, %v3406
      %3408 = vmatmul.f32.gmra.mxu0 %v3125
      %v3409 = vpop.f32.mrf.mxu0
      %v3410 = vadd.f32 0.0, %v3409
      %3411 = vmatmul.f32.gmra.mxu0 %v3128
      %v3412 = vpop.f32.mrf.mxu0
      %v3413 = vadd.f32 0.0, %v3412
      %3414 = vmatmul.f32.gmra.mxu0 %v3131
      %v3415 = vpop.f32.mrf.mxu0
      %v3416 = vadd.f32 0.0, %v3415
      %3417 = vmatmul.f32.gmra.mxu0 %v3134
      %v3418 = vpop.f32.mrf.mxu0
      %v3419 = vadd.f32 0.0, %v3418
      %3420 = vmatmul.f32.gmra.mxu0 %v3137
      %v3421 = vpop.f32.mrf.mxu0
      %v3422 = vadd.f32 0.0, %v3421
      %3423 = vmatmul.f32.gmra.mxu0 %v3140
      %v3424 = vpop.f32.mrf.mxu0
      %v3425 = vadd.f32 0.0, %v3424
      %3426 = vmatmul.f32.gmra.mxu0 %v3143
      %v3427 = vpop.f32.mrf.mxu0
      %v3428 = vadd.f32 0.0, %v3427
      %3429 = vdwg.mxu0
      %v3430 = vmul.f32 %v3383, %v3081
      %v3431 = vmul.f32 %v3386, %v3082
      %v3432 = vmul.f32 %v3389, %v3083
      %v3433 = vmul.f32 %v3392, %v3084
      %v3434 = vmul.f32 %v3395, %v3085
      %v3435 = vmul.f32 %v3398, %v3086
      %v3436 = vmul.f32 %v3401, %v3087
      %v3437 = vmul.f32 %v3404, %v3088
      %v3438 = vmul.f32 %v3407, %v3089
      %v3439 = vmul.f32 %v3410, %v3090
      %v3440 = vmul.f32 %v3413, %v3091
      %v3441 = vmul.f32 %v3416, %v3092
      %v3442 = vmul.f32 %v3419, %v3093
      %v3443 = vmul.f32 %v3422, %v3094
      %v3444 = vmul.f32 %v3425, %v3095
      %v3445 = vmul.f32 %v3428, %v3096
      %3446 = vmatpush.msra.mxu0 %v3445
      %3447 = vmatpush.msra.mxu0 %v3444
      %3448 = vmatpush.msra.mxu0 %v3443
      %3449 = vmatpush.msra.mxu0 %v3442
      %3450 = vmatpush.msra.mxu0 %v3441
      %3451 = vmatpush.msra.mxu0 %v3440
      %3452 = vmatpush.msra.mxu0 %v3439
      %3453 = vmatpush.msra.mxu0 %v3438
      %3454 = vmatpush.msra.mxu0 %v3437
      %3455 = vmatpush.msra.mxu0 %v3436
      %3456 = vmatpush.msra.mxu0 %v3435
      %3457 = vmatpush.msra.mxu0 %v3434
      %3458 = vmatpush.msra.mxu0 %v3433
      %3459 = vmatpush.msra.mxu0 %v3432
      %3460 = vmatpush.msra.mxu0 %v3431
      %3461 = vmatpush.msra.mxu0 %v3430
      %3462 = vmatmul.f32.gmra.mxu0 %v3057
      %v3463 = vpop.f32.mrf.mxu0
      %v3464 = vadd.f32 0.0, %v3463
      %3465 = vmatmul.f32.gmra.mxu0 %v3058
      %v3466 = vpop.f32.mrf.mxu0
      %v3467 = vadd.f32 0.0, %v3466
      %3468 = vmatmul.f32.gmra.mxu0 %v3059
      %v3469 = vpop.f32.mrf.mxu0
      %v3470 = vadd.f32 0.0, %v3469
      %3471 = vmatmul.f32.gmra.mxu0 %v3060
      %v3472 = vpop.f32.mrf.mxu0
      %v3473 = vadd.f32 0.0, %v3472
      %3474 = vdwg.mxu0
      %3475 = vmatpush.msra.mxu0 0.0
      %3476 = vmatpush.msra.mxu0 0.0
      %3477 = vmatpush.msra.mxu0 0.0
      %3478 = vmatpush.msra.mxu0 0.0
      %3479 = vmatpush.msra.mxu0 0.0
      %3480 = vmatpush.msra.mxu0 0.0
      %3481 = vmatpush.msra.mxu0 0.0
      %3482 = vmatpush.msra.mxu0 0.0
      %3483 = vmatpush.msra.mxu0 0.0
      %3484 = vmatpush.msra.mxu0 0.0
      %3485 = vmatpush.msra.mxu0 0.0
      %3486 = vmatpush.msra.mxu0 0.0
      %3487 = vmatpush.msra.mxu0 %v1409
      %3488 = vmatpush.msra.mxu0 %v1406
      %3489 = vmatpush.msra.mxu0 %v1403
      %3490 = vmatpush.msra.mxu0 %v1400
      %3491 = vmatmul.f32.gmra.mxu0 %v3098
      %v3492 = vpop.f32.mrf.mxu0
      %v3493 = vadd.f32 0.0, %v3492
      %3494 = vmatmul.f32.gmra.mxu0 %v3101
      %v3495 = vpop.f32.mrf.mxu0
      %v3496 = vadd.f32 0.0, %v3495
      %3497 = vmatmul.f32.gmra.mxu0 %v3104
      %v3498 = vpop.f32.mrf.mxu0
      %v3499 = vadd.f32 0.0, %v3498
      %3500 = vmatmul.f32.gmra.mxu0 %v3107
      %v3501 = vpop.f32.mrf.mxu0
      %v3502 = vadd.f32 0.0, %v3501
      %3503 = vmatmul.f32.gmra.mxu0 %v3110
      %v3504 = vpop.f32.mrf.mxu0
      %v3505 = vadd.f32 0.0, %v3504
      %3506 = vmatmul.f32.gmra.mxu0 %v3113
      %v3507 = vpop.f32.mrf.mxu0
      %v3508 = vadd.f32 0.0, %v3507
      %3509 = vmatmul.f32.gmra.mxu0 %v3116
      %v3510 = vpop.f32.mrf.mxu0
      %v3511 = vadd.f32 0.0, %v3510
      %3512 = vmatmul.f32.gmra.mxu0 %v3119
      %v3513 = vpop.f32.mrf.mxu0
      %v3514 = vadd.f32 0.0, %v3513
      %3515 = vmatmul.f32.gmra.mxu0 %v3122
      %v3516 = vpop.f32.mrf.mxu0
      %v3517 = vadd.f32 0.0, %v3516
      %3518 = vmatmul.f32.gmra.mxu0 %v3125
      %v3519 = vpop.f32.mrf.mxu0
      %v3520 = vadd.f32 0.0, %v3519
      %3521 = vmatmul.f32.gmra.mxu0 %v3128
      %v3522 = vpop.f32.mrf.mxu0
      %v3523 = vadd.f32 0.0, %v3522
      %3524 = vmatmul.f32.gmra.mxu0 %v3131
      %v3525 = vpop.f32.mrf.mxu0
      %v3526 = vadd.f32 0.0, %v3525
      %3527 = vmatmul.f32.gmra.mxu0 %v3134
      %v3528 = vpop.f32.mrf.mxu0
      %v3529 = vadd.f32 0.0, %v3528
      %3530 = vmatmul.f32.gmra.mxu0 %v3137
      %v3531 = vpop.f32.mrf.mxu0
      %v3532 = vadd.f32 0.0, %v3531
      %3533 = vmatmul.f32.gmra.mxu0 %v3140
      %v3534 = vpop.f32.mrf.mxu0
      %v3535 = vadd.f32 0.0, %v3534
      %3536 = vmatmul.f32.gmra.mxu0 %v3143
      %v3537 = vpop.f32.mrf.mxu0
      %v3538 = vadd.f32 0.0, %v3537
      %3539 = vdwg.mxu0
      %v3540 = vmul.f32 %v3493, %v3081
      %v3541 = vmul.f32 %v3496, %v3082
      %v3542 = vmul.f32 %v3499, %v3083
      %v3543 = vmul.f32 %v3502, %v3084
      %v3544 = vmul.f32 %v3505, %v3085
      %v3545 = vmul.f32 %v3508, %v3086
      %v3546 = vmul.f32 %v3511, %v3087
      %v3547 = vmul.f32 %v3514, %v3088
      %v3548 = vmul.f32 %v3517, %v3089
      %v3549 = vmul.f32 %v3520, %v3090
      %v3550 = vmul.f32 %v3523, %v3091
      %v3551 = vmul.f32 %v3526, %v3092
      %v3552 = vmul.f32 %v3529, %v3093
      %v3553 = vmul.f32 %v3532, %v3094
      %v3554 = vmul.f32 %v3535, %v3095
      %v3555 = vmul.f32 %v3538, %v3096
      %3556 = vmatpush.msra.mxu0 %v3555
      %3557 = vmatpush.msra.mxu0 %v3554
      %3558 = vmatpush.msra.mxu0 %v3553
      %3559 = vmatpush.msra.mxu0 %v3552
      %3560 = vmatpush.msra.mxu0 %v3551
      %3561 = vmatpush.msra.mxu0 %v3550
      %3562 = vmatpush.msra.mxu0 %v3549
      %3563 = vmatpush.msra.mxu0 %v3548
      %3564 = vmatpush.msra.mxu0 %v3547
      %3565 = vmatpush.msra.mxu0 %v3546
      %3566 = vmatpush.msra.mxu0 %v3545
      %3567 = vmatpush.msra.mxu0 %v3544
      %3568 = vmatpush.msra.mxu0 %v3543
      %3569 = vmatpush.msra.mxu0 %v3542
      %3570 = vmatpush.msra.mxu0 %v3541
      %3571 = vmatpush.msra.mxu0 %v3540
      %3572 = vmatmul.f32.gmra.mxu0 %v3061
      %v3573 = vpop.f32.mrf.mxu0
      %v3574 = vadd.f32 0.0, %v3573
      %3575 = vmatmul.f32.gmra.mxu0 %v3062
      %v3576 = vpop.f32.mrf.mxu0
      %v3577 = vadd.f32 0.0, %v3576
      %3578 = vmatmul.f32.gmra.mxu0 %v3063
      %v3579 = vpop.f32.mrf.mxu0
      %v3580 = vadd.f32 0.0, %v3579
      %3581 = vmatmul.f32.gmra.mxu0 %v3064
      %v3582 = vpop.f32.mrf.mxu0
      %v3583 = vadd.f32 0.0, %v3582
      %3584 = vdwg.mxu0
      %3585 = vmatpush.msra.mxu0 0.0
      %3586 = vmatpush.msra.mxu0 0.0
      %3587 = vmatpush.msra.mxu0 0.0
      %3588 = vmatpush.msra.mxu0 0.0
      %3589 = vmatpush.msra.mxu0 0.0
      %3590 = vmatpush.msra.mxu0 0.0
      %3591 = vmatpush.msra.mxu0 0.0
      %3592 = vmatpush.msra.mxu0 0.0
      %3593 = vmatpush.msra.mxu0 0.0
      %3594 = vmatpush.msra.mxu0 0.0
      %3595 = vmatpush.msra.mxu0 0.0
      %3596 = vmatpush.msra.mxu0 0.0
      %3597 = vmatpush.msra.mxu0 %v1421
      %3598 = vmatpush.msra.mxu0 %v1418
      %3599 = vmatpush.msra.mxu0 %v1415
      %3600 = vmatpush.msra.mxu0 %v1412
      %3601 = vmatmul.f32.gmra.mxu0 %v3098
      %v3602 = vpop.f32.mrf.mxu0
      %v3603 = vadd.f32 0.0, %v3602
      %3604 = vmatmul.f32.gmra.mxu0 %v3101
      %v3605 = vpop.f32.mrf.mxu0
      %v3606 = vadd.f32 0.0, %v3605
      %3607 = vmatmul.f32.gmra.mxu0 %v3104
      %v3608 = vpop.f32.mrf.mxu0
      %v3609 = vadd.f32 0.0, %v3608
      %3610 = vmatmul.f32.gmra.mxu0 %v3107
      %v3611 = vpop.f32.mrf.mxu0
      %v3612 = vadd.f32 0.0, %v3611
      %3613 = vmatmul.f32.gmra.mxu0 %v3110
      %v3614 = vpop.f32.mrf.mxu0
      %v3615 = vadd.f32 0.0, %v3614
      %3616 = vmatmul.f32.gmra.mxu0 %v3113
      %v3617 = vpop.f32.mrf.mxu0
      %v3618 = vadd.f32 0.0, %v3617
      %3619 = vmatmul.f32.gmra.mxu0 %v3116
      %v3620 = vpop.f32.mrf.mxu0
      %v3621 = vadd.f32 0.0, %v3620
      %3622 = vmatmul.f32.gmra.mxu0 %v3119
      %v3623 = vpop.f32.mrf.mxu0
      %v3624 = vadd.f32 0.0, %v3623
      %3625 = vmatmul.f32.gmra.mxu0 %v3122
      %v3626 = vpop.f32.mrf.mxu0
      %v3627 = vadd.f32 0.0, %v3626
      %3628 = vmatmul.f32.gmra.mxu0 %v3125
      %v3629 = vpop.f32.mrf.mxu0
      %v3630 = vadd.f32 0.0, %v3629
      %3631 = vmatmul.f32.gmra.mxu0 %v3128
      %v3632 = vpop.f32.mrf.mxu0
      %v3633 = vadd.f32 0.0, %v3632
      %3634 = vmatmul.f32.gmra.mxu0 %v3131
      %v3635 = vpop.f32.mrf.mxu0
      %v3636 = vadd.f32 0.0, %v3635
      %3637 = vmatmul.f32.gmra.mxu0 %v3134
      %v3638 = vpop.f32.mrf.mxu0
      %v3639 = vadd.f32 0.0, %v3638
      %3640 = vmatmul.f32.gmra.mxu0 %v3137
      %v3641 = vpop.f32.mrf.mxu0
      %v3642 = vadd.f32 0.0, %v3641
      %3643 = vmatmul.f32.gmra.mxu0 %v3140
      %v3644 = vpop.f32.mrf.mxu0
      %v3645 = vadd.f32 0.0, %v3644
      %3646 = vmatmul.f32.gmra.mxu0 %v3143
      %v3647 = vpop.f32.mrf.mxu0
      %v3648 = vadd.f32 0.0, %v3647
      %3649 = vdwg.mxu0
      %v3650 = vmul.f32 %v3603, %v3081
      %v3651 = vmul.f32 %v3606, %v3082
      %v3652 = vmul.f32 %v3609, %v3083
      %v3653 = vmul.f32 %v3612, %v3084
      %v3654 = vmul.f32 %v3615, %v3085
      %v3655 = vmul.f32 %v3618, %v3086
      %v3656 = vmul.f32 %v3621, %v3087
      %v3657 = vmul.f32 %v3624, %v3088
      %v3658 = vmul.f32 %v3627, %v3089
      %v3659 = vmul.f32 %v3630, %v3090
      %v3660 = vmul.f32 %v3633, %v3091
      %v3661 = vmul.f32 %v3636, %v3092
      %v3662 = vmul.f32 %v3639, %v3093
      %v3663 = vmul.f32 %v3642, %v3094
      %v3664 = vmul.f32 %v3645, %v3095
      %v3665 = vmul.f32 %v3648, %v3096
      %3666 = vmatpush.msra.mxu0 %v3665
      %3667 = vmatpush.msra.mxu0 %v3664
      %3668 = vmatpush.msra.mxu0 %v3663
      %3669 = vmatpush.msra.mxu0 %v3662
      %3670 = vmatpush.msra.mxu0 %v3661
      %3671 = vmatpush.msra.mxu0 %v3660
      %3672 = vmatpush.msra.mxu0 %v3659
      %3673 = vmatpush.msra.mxu0 %v3658
      %3674 = vmatpush.msra.mxu0 %v3657
      %3675 = vmatpush.msra.mxu0 %v3656
      %3676 = vmatpush.msra.mxu0 %v3655
      %3677 = vmatpush.msra.mxu0 %v3654
      %3678 = vmatpush.msra.mxu0 %v3653
      %3679 = vmatpush.msra.mxu0 %v3652
      %3680 = vmatpush.msra.mxu0 %v3651
      %3681 = vmatpush.msra.mxu0 %v3650
      %3682 = vmatmul.f32.gmra.mxu0 %v3065
      %v3683 = vpop.f32.mrf.mxu0
      %v3684 = vadd.f32 0.0, %v3683
      %3685 = vmatmul.f32.gmra.mxu0 %v3066
      %v3686 = vpop.f32.mrf.mxu0
      %v3687 = vadd.f32 0.0, %v3686
      %3688 = vmatmul.f32.gmra.mxu0 %v3067
      %v3689 = vpop.f32.mrf.mxu0
      %v3690 = vadd.f32 0.0, %v3689
      %3691 = vmatmul.f32.gmra.mxu0 %v3068
      %v3692 = vpop.f32.mrf.mxu0
      %v3693 = vadd.f32 0.0, %v3692
      %3694 = vdwg.mxu0
      %3695 = vmatpush.msra.mxu0 0.0
      %3696 = vmatpush.msra.mxu0 0.0
      %3697 = vmatpush.msra.mxu0 0.0
      %3698 = vmatpush.msra.mxu0 0.0
      %3699 = vmatpush.msra.mxu0 0.0
      %3700 = vmatpush.msra.mxu0 0.0
      %3701 = vmatpush.msra.mxu0 0.0
      %3702 = vmatpush.msra.mxu0 0.0
      %3703 = vmatpush.msra.mxu0 0.0
      %3704 = vmatpush.msra.mxu0 0.0
      %3705 = vmatpush.msra.mxu0 0.0
      %3706 = vmatpush.msra.mxu0 0.0
      %3707 = vmatpush.msra.mxu0 %v1433
      %3708 = vmatpush.msra.mxu0 %v1430
      %3709 = vmatpush.msra.mxu0 %v1427
      %3710 = vmatpush.msra.mxu0 %v1424
      %3711 = vmatmul.f32.gmra.mxu0 %v3098
      %v3712 = vpop.f32.mrf.mxu0
      %v3713 = vadd.f32 0.0, %v3712
      %3714 = vmatmul.f32.gmra.mxu0 %v3101
      %v3715 = vpop.f32.mrf.mxu0
      %v3716 = vadd.f32 0.0, %v3715
      %3717 = vmatmul.f32.gmra.mxu0 %v3104
      %v3718 = vpop.f32.mrf.mxu0
      %v3719 = vadd.f32 0.0, %v3718
      %3720 = vmatmul.f32.gmra.mxu0 %v3107
      %v3721 = vpop.f32.mrf.mxu0
      %v3722 = vadd.f32 0.0, %v3721
      %3723 = vmatmul.f32.gmra.mxu0 %v3110
      %v3724 = vpop.f32.mrf.mxu0
      %v3725 = vadd.f32 0.0, %v3724
      %3726 = vmatmul.f32.gmra.mxu0 %v3113
      %v3727 = vpop.f32.mrf.mxu0
      %v3728 = vadd.f32 0.0, %v3727
      %3729 = vmatmul.f32.gmra.mxu0 %v3116
      %v3730 = vpop.f32.mrf.mxu0
      %v3731 = vadd.f32 0.0, %v3730
      %3732 = vmatmul.f32.gmra.mxu0 %v3119
      %v3733 = vpop.f32.mrf.mxu0
      %v3734 = vadd.f32 0.0, %v3733
      %3735 = vmatmul.f32.gmra.mxu0 %v3122
      %v3736 = vpop.f32.mrf.mxu0
      %v3737 = vadd.f32 0.0, %v3736
      %3738 = vmatmul.f32.gmra.mxu0 %v3125
      %v3739 = vpop.f32.mrf.mxu0
      %v3740 = vadd.f32 0.0, %v3739
      %3741 = vmatmul.f32.gmra.mxu0 %v3128
      %v3742 = vpop.f32.mrf.mxu0
      %v3743 = vadd.f32 0.0, %v3742
      %3744 = vmatmul.f32.gmra.mxu0 %v3131
      %v3745 = vpop.f32.mrf.mxu0
      %v3746 = vadd.f32 0.0, %v3745
      %3747 = vmatmul.f32.gmra.mxu0 %v3134
      %v3748 = vpop.f32.mrf.mxu0
      %v3749 = vadd.f32 0.0, %v3748
      %3750 = vmatmul.f32.gmra.mxu0 %v3137
      %v3751 = vpop.f32.mrf.mxu0
      %v3752 = vadd.f32 0.0, %v3751
      %3753 = vmatmul.f32.gmra.mxu0 %v3140
      %v3754 = vpop.f32.mrf.mxu0
      %v3755 = vadd.f32 0.0, %v3754
      %3756 = vmatmul.f32.gmra.mxu0 %v3143
      %v3757 = vpop.f32.mrf.mxu0
      %v3758 = vadd.f32 0.0, %v3757
      %3759 = vdwg.mxu0
      %v3760 = vmul.f32 %v3713, %v3081
      %v3761 = vmul.f32 %v3716, %v3082
      %v3762 = vmul.f32 %v3719, %v3083
      %v3763 = vmul.f32 %v3722, %v3084
      %v3764 = vmul.f32 %v3725, %v3085
      %v3765 = vmul.f32 %v3728, %v3086
      %v3766 = vmul.f32 %v3731, %v3087
      %v3767 = vmul.f32 %v3734, %v3088
      %v3768 = vmul.f32 %v3737, %v3089
      %v3769 = vmul.f32 %v3740, %v3090
      %v3770 = vmul.f32 %v3743, %v3091
      %v3771 = vmul.f32 %v3746, %v3092
      %v3772 = vmul.f32 %v3749, %v3093
      %v3773 = vmul.f32 %v3752, %v3094
      %v3774 = vmul.f32 %v3755, %v3095
      %v3775 = vmul.f32 %v3758, %v3096
      %3776 = vmatpush.msra.mxu0 %v3775
      %3777 = vmatpush.msra.mxu0 %v3774
      %3778 = vmatpush.msra.mxu0 %v3773
      %3779 = vmatpush.msra.mxu0 %v3772
      %3780 = vmatpush.msra.mxu0 %v3771
      %3781 = vmatpush.msra.mxu0 %v3770
      %3782 = vmatpush.msra.mxu0 %v3769
      %3783 = vmatpush.msra.mxu0 %v3768
      %3784 = vmatpush.msra.mxu0 %v3767
      %3785 = vmatpush.msra.mxu0 %v3766
      %3786 = vmatpush.msra.mxu0 %v3765
      %3787 = vmatpush.msra.mxu0 %v3764
      %3788 = vmatpush.msra.mxu0 %v3763
      %3789 = vmatpush.msra.mxu0 %v3762
      %3790 = vmatpush.msra.mxu0 %v3761
      %3791 = vmatpush.msra.mxu0 %v3760
      %3792 = vmatmul.f32.gmra.mxu0 %v3069
      %v3793 = vpop.f32.mrf.mxu0
      %v3794 = vadd.f32 0.0, %v3793
      %3795 = vmatmul.f32.gmra.mxu0 %v3070
      %v3796 = vpop.f32.mrf.mxu0
      %v3797 = vadd.f32 0.0, %v3796
      %3798 = vmatmul.f32.gmra.mxu0 %v3071
      %v3799 = vpop.f32.mrf.mxu0
      %v3800 = vadd.f32 0.0, %v3799
      %3801 = vmatmul.f32.gmra.mxu0 %v3072
      %v3802 = vpop.f32.mrf.mxu0
      %v3803 = vadd.f32 0.0, %v3802
      %3804 = vdwg.mxu0
      %3805 = vmatpush.msra.mxu0 0.0
      %3806 = vmatpush.msra.mxu0 0.0
      %3807 = vmatpush.msra.mxu0 0.0
      %3808 = vmatpush.msra.mxu0 0.0
      %3809 = vmatpush.msra.mxu0 0.0
      %3810 = vmatpush.msra.mxu0 0.0
      %3811 = vmatpush.msra.mxu0 0.0
      %3812 = vmatpush.msra.mxu0 0.0
      %3813 = vmatpush.msra.mxu0 0.0
      %3814 = vmatpush.msra.mxu0 0.0
      %3815 = vmatpush.msra.mxu0 0.0
      %3816 = vmatpush.msra.mxu0 0.0
      %3817 = vmatpush.msra.mxu0 %v1445
      %3818 = vmatpush.msra.mxu0 %v1442
      %3819 = vmatpush.msra.mxu0 %v1439
      %3820 = vmatpush.msra.mxu0 %v1436
      %3821 = vmatmul.f32.gmra.mxu0 %v3098
      %v3822 = vpop.f32.mrf.mxu0
      %v3823 = vadd.f32 0.0, %v3822
      %3824 = vmatmul.f32.gmra.mxu0 %v3101
      %v3825 = vpop.f32.mrf.mxu0
      %v3826 = vadd.f32 0.0, %v3825
      %3827 = vmatmul.f32.gmra.mxu0 %v3104
      %v3828 = vpop.f32.mrf.mxu0
      %v3829 = vadd.f32 0.0, %v3828
      %3830 = vmatmul.f32.gmra.mxu0 %v3107
      %v3831 = vpop.f32.mrf.mxu0
      %v3832 = vadd.f32 0.0, %v3831
      %3833 = vmatmul.f32.gmra.mxu0 %v3110
      %v3834 = vpop.f32.mrf.mxu0
      %v3835 = vadd.f32 0.0, %v3834
      %3836 = vmatmul.f32.gmra.mxu0 %v3113
      %v3837 = vpop.f32.mrf.mxu0
      %v3838 = vadd.f32 0.0, %v3837
      %3839 = vmatmul.f32.gmra.mxu0 %v3116
      %v3840 = vpop.f32.mrf.mxu0
      %v3841 = vadd.f32 0.0, %v3840
      %3842 = vmatmul.f32.gmra.mxu0 %v3119
      %v3843 = vpop.f32.mrf.mxu0
      %v3844 = vadd.f32 0.0, %v3843
      %3845 = vmatmul.f32.gmra.mxu0 %v3122
      %v3846 = vpop.f32.mrf.mxu0
      %v3847 = vadd.f32 0.0, %v3846
      %3848 = vmatmul.f32.gmra.mxu0 %v3125
      %v3849 = vpop.f32.mrf.mxu0
      %v3850 = vadd.f32 0.0, %v3849
      %3851 = vmatmul.f32.gmra.mxu0 %v3128
      %v3852 = vpop.f32.mrf.mxu0
      %v3853 = vadd.f32 0.0, %v3852
      %3854 = vmatmul.f32.gmra.mxu0 %v3131
      %v3855 = vpop.f32.mrf.mxu0
      %v3856 = vadd.f32 0.0, %v3855
      %3857 = vmatmul.f32.gmra.mxu0 %v3134
      %v3858 = vpop.f32.mrf.mxu0
      %v3859 = vadd.f32 0.0, %v3858
      %3860 = vmatmul.f32.gmra.mxu0 %v3137
      %v3861 = vpop.f32.mrf.mxu0
      %v3862 = vadd.f32 0.0, %v3861
      %3863 = vmatmul.f32.gmra.mxu0 %v3140
      %v3864 = vpop.f32.mrf.mxu0
      %v3865 = vadd.f32 0.0, %v3864
      %3866 = vmatmul.f32.gmra.mxu0 %v3143
      %v3867 = vpop.f32.mrf.mxu0
      %v3868 = vadd.f32 0.0, %v3867
      %3869 = vdwg.mxu0
      %v3870 = vmul.f32 %v3823, %v3081
      %v3871 = vmul.f32 %v3826, %v3082
      %v3872 = vmul.f32 %v3829, %v3083
      %v3873 = vmul.f32 %v3832, %v3084
      %v3874 = vmul.f32 %v3835, %v3085
      %v3875 = vmul.f32 %v3838, %v3086
      %v3876 = vmul.f32 %v3841, %v3087
      %v3877 = vmul.f32 %v3844, %v3088
      %v3878 = vmul.f32 %v3847, %v3089
      %v3879 = vmul.f32 %v3850, %v3090
      %v3880 = vmul.f32 %v3853, %v3091
      %v3881 = vmul.f32 %v3856, %v3092
      %v3882 = vmul.f32 %v3859, %v3093
      %v3883 = vmul.f32 %v3862, %v3094
      %v3884 = vmul.f32 %v3865, %v3095
      %v3885 = vmul.f32 %v3868, %v3096
      %3886 = vmatpush.msra.mxu0 %v3885
      %3887 = vmatpush.msra.mxu0 %v3884
      %3888 = vmatpush.msra.mxu0 %v3883
      %3889 = vmatpush.msra.mxu0 %v3882
      %3890 = vmatpush.msra.mxu0 %v3881
      %3891 = vmatpush.msra.mxu0 %v3880
      %3892 = vmatpush.msra.mxu0 %v3879
      %3893 = vmatpush.msra.mxu0 %v3878
      %3894 = vmatpush.msra.mxu0 %v3877
      %3895 = vmatpush.msra.mxu0 %v3876
      %3896 = vmatpush.msra.mxu0 %v3875
      %3897 = vmatpush.msra.mxu0 %v3874
      %3898 = vmatpush.msra.mxu0 %v3873
      %3899 = vmatpush.msra.mxu0 %v3872
      %3900 = vmatpush.msra.mxu0 %v3871
      %3901 = vmatpush.msra.mxu0 %v3870
      %3902 = vmatmul.f32.gmra.mxu0 %v3073
      %v3903 = vpop.f32.mrf.mxu0
      %v3904 = vadd.f32 0.0, %v3903
      %3905 = vmatmul.f32.gmra.mxu0 %v3074
      %v3906 = vpop.f32.mrf.mxu0
      %v3907 = vadd.f32 0.0, %v3906
      %3908 = vmatmul.f32.gmra.mxu0 %v3075
      %v3909 = vpop.f32.mrf.mxu0
      %v3910 = vadd.f32 0.0, %v3909
      %3911 = vmatmul.f32.gmra.mxu0 %v3076
      %v3912 = vpop.f32.mrf.mxu0
      %v3913 = vadd.f32 0.0, %v3912
      %3914 = vdwg.mxu0
      %3915 = vmatpush.msra.mxu0 0.0
      %3916 = vmatpush.msra.mxu0 0.0
      %3917 = vmatpush.msra.mxu0 0.0
      %3918 = vmatpush.msra.mxu0 0.0
      %3919 = vmatpush.msra.mxu0 0.0
      %3920 = vmatpush.msra.mxu0 0.0
      %3921 = vmatpush.msra.mxu0 0.0
      %3922 = vmatpush.msra.mxu0 0.0
      %3923 = vmatpush.msra.mxu0 0.0
      %3924 = vmatpush.msra.mxu0 0.0
      %3925 = vmatpush.msra.mxu0 0.0
      %3926 = vmatpush.msra.mxu0 0.0
      %3927 = vmatpush.msra.mxu0 %v1457
      %3928 = vmatpush.msra.mxu0 %v1454
      %3929 = vmatpush.msra.mxu0 %v1451
      %3930 = vmatpush.msra.mxu0 %v1448
      %3931 = vmatmul.f32.gmra.mxu0 %v3098
      %v3932 = vpop.f32.mrf.mxu0
      %v3933 = vadd.f32 0.0, %v3932
      %3934 = vmatmul.f32.gmra.mxu0 %v3101
      %v3935 = vpop.f32.mrf.mxu0
      %v3936 = vadd.f32 0.0, %v3935
      %3937 = vmatmul.f32.gmra.mxu0 %v3104
      %v3938 = vpop.f32.mrf.mxu0
      %v3939 = vadd.f32 0.0, %v3938
      %3940 = vmatmul.f32.gmra.mxu0 %v3107
      %v3941 = vpop.f32.mrf.mxu0
      %v3942 = vadd.f32 0.0, %v3941
      %3943 = vmatmul.f32.gmra.mxu0 %v3110
      %v3944 = vpop.f32.mrf.mxu0
      %v3945 = vadd.f32 0.0, %v3944
      %3946 = vmatmul.f32.gmra.mxu0 %v3113
      %v3947 = vpop.f32.mrf.mxu0
      %v3948 = vadd.f32 0.0, %v3947
      %3949 = vmatmul.f32.gmra.mxu0 %v3116
      %v3950 = vpop.f32.mrf.mxu0
      %v3951 = vadd.f32 0.0, %v3950
      %3952 = vmatmul.f32.gmra.mxu0 %v3119
      %v3953 = vpop.f32.mrf.mxu0
      %v3954 = vadd.f32 0.0, %v3953
      %3955 = vmatmul.f32.gmra.mxu0 %v3122
      %v3956 = vpop.f32.mrf.mxu0
      %v3957 = vadd.f32 0.0, %v3956
      %3958 = vmatmul.f32.gmra.mxu0 %v3125
      %v3959 = vpop.f32.mrf.mxu0
      %v3960 = vadd.f32 0.0, %v3959
      %3961 = vmatmul.f32.gmra.mxu0 %v3128
      %v3962 = vpop.f32.mrf.mxu0
      %v3963 = vadd.f32 0.0, %v3962
      %3964 = vmatmul.f32.gmra.mxu0 %v3131
      %v3965 = vpop.f32.mrf.mxu0
      %v3966 = vadd.f32 0.0, %v3965
      %3967 = vmatmul.f32.gmra.mxu0 %v3134
      %v3968 = vpop.f32.mrf.mxu0
      %v3969 = vadd.f32 0.0, %v3968
      %3970 = vmatmul.f32.gmra.mxu0 %v3137
      %v3971 = vpop.f32.mrf.mxu0
      %v3972 = vadd.f32 0.0, %v3971
      %3973 = vmatmul.f32.gmra.mxu0 %v3140
      %v3974 = vpop.f32.mrf.mxu0
      %v3975 = vadd.f32 0.0, %v3974
      %3976 = vmatmul.f32.gmra.mxu0 %v3143
      %v3977 = vpop.f32.mrf.mxu0
      %v3978 = vadd.f32 0.0, %v3977
      %3979 = vdwg.mxu0
      %v3980 = vmul.f32 %v3933, %v3081
      %v3981 = vmul.f32 %v3936, %v3082
      %v3982 = vmul.f32 %v3939, %v3083
      %v3983 = vmul.f32 %v3942, %v3084
      %v3984 = vmul.f32 %v3945, %v3085
      %v3985 = vmul.f32 %v3948, %v3086
      %v3986 = vmul.f32 %v3951, %v3087
      %v3987 = vmul.f32 %v3954, %v3088
      %v3988 = vmul.f32 %v3957, %v3089
      %v3989 = vmul.f32 %v3960, %v3090
      %v3990 = vmul.f32 %v3963, %v3091
      %v3991 = vmul.f32 %v3966, %v3092
      %v3992 = vmul.f32 %v3969, %v3093
      %v3993 = vmul.f32 %v3972, %v3094
      %v3994 = vmul.f32 %v3975, %v3095
      %v3995 = vmul.f32 %v3978, %v3096
      %3996 = vmatpush.msra.mxu0 %v3995
      %3997 = vmatpush.msra.mxu0 %v3994
      %3998 = vmatpush.msra.mxu0 %v3993
      %3999 = vmatpush.msra.mxu0 %v3992
      %4000 = vmatpush.msra.mxu0 %v3991
      %4001 = vmatpush.msra.mxu0 %v3990
      %4002 = vmatpush.msra.mxu0 %v3989
      %4003 = vmatpush.msra.mxu0 %v3988
      %4004 = vmatpush.msra.mxu0 %v3987
      %4005 = vmatpush.msra.mxu0 %v3986
      %4006 = vmatpush.msra.mxu0 %v3985
      %4007 = vmatpush.msra.mxu0 %v3984
      %4008 = vmatpush.msra.mxu0 %v3983
      %4009 = vmatpush.msra.mxu0 %v3982
      %4010 = vmatpush.msra.mxu0 %v3981
      %4011 = vmatpush.msra.mxu0 %v3980
      %4012 = vmatmul.f32.gmra.mxu0 %v3077
      %v4013 = vpop.f32.mrf.mxu0
      %v4014 = vadd.f32 0.0, %v4013
      %4015 = vmatmul.f32.gmra.mxu0 %v3078
      %v4016 = vpop.f32.mrf.mxu0
      %v4017 = vadd.f32 0.0, %v4016
      %4018 = vmatmul.f32.gmra.mxu0 %v3079
      %v4019 = vpop.f32.mrf.mxu0
      %v4020 = vadd.f32 0.0, %v4019
      %4021 = vmatmul.f32.gmra.mxu0 %v3080
      %v4022 = vpop.f32.mrf.mxu0
      %v4023 = vadd.f32 0.0, %v4022
      %4024 = vdwg.mxu0
      %v4025 = vld [vmem:[%s3] sm:$0xff]
      %v4026 = vld [vmem:[%s3 + $0x8] sm:$0xff]
      %v4027 = vld [vmem:[%s3 + $0x10] sm:$0xff]
      %v4028 = vld [vmem:[%s3 + $0x18] sm:$0xff]
      %v4030 = vsel %vm467, %v3244, 0
      %v4033 = vsel %vm467, %v3247, 0
      %v4036 = vsel %vm467, %v3250, 0
      %v4039 = vsel %vm467, %v3253, 0
      %v4042 = vsel %vm467, %v3354, 0
      %v4045 = vsel %vm467, %v3357, 0
      %v4048 = vsel %vm467, %v3360, 0
      %v4051 = vsel %vm467, %v3363, 0
      %v4054 = vsel %vm467, %v3464, 0
      %v4057 = vsel %vm467, %v3467, 0
      %v4060 = vsel %vm467, %v3470, 0
      %v4063 = vsel %vm467, %v3473, 0
      %v4066 = vsel %vm467, %v3574, 0
      %v4069 = vsel %vm467, %v3577, 0
      %v4072 = vsel %vm467, %v3580, 0
      %v4075 = vsel %vm467, %v3583, 0
      %v4078 = vsel %vm467, %v3684, 0
      %v4081 = vsel %vm467, %v3687, 0
      %v4084 = vsel %vm467, %v3690, 0
      %v4087 = vsel %vm467, %v3693, 0
      %v4090 = vsel %vm467, %v3794, 0
      %v4093 = vsel %vm467, %v3797, 0
      %v4096 = vsel %vm467, %v3800, 0
      %v4099 = vsel %vm467, %v3803, 0
      %v4102 = vsel %vm467, %v3904, 0
      %v4105 = vsel %vm467, %v3907, 0
      %v4108 = vsel %vm467, %v3910, 0
      %v4111 = vsel %vm467, %v3913, 0
      %v4114 = vsel %vm467, %v4014, 0
      %v4117 = vsel %vm467, %v4017, 0
      %v4120 = vsel %vm467, %v4020, 0
      %v4123 = vsel %vm467, %v4023, 0
      %4125 = vmatpush.msra.mxu0 0.0
      %4126 = vmatpush.msra.mxu0 0.0
      %4127 = vmatpush.msra.mxu0 0.0
      %4128 = vmatpush.msra.mxu0 0.0
      %4129 = vmatpush.msra.mxu0 0.0
      %4130 = vmatpush.msra.mxu0 0.0
      %4131 = vmatpush.msra.mxu0 0.0
      %4132 = vmatpush.msra.mxu0 0.0
      %4133 = vmatpush.msra.mxu0 0.0
      %4134 = vmatpush.msra.mxu0 0.0
      %4135 = vmatpush.msra.mxu0 0.0
      %4136 = vmatpush.msra.mxu0 0.0
      %4137 = vmatpush.msra.mxu0 %v4028
      %4138 = vmatpush.msra.mxu0 %v4027
      %4139 = vmatpush.msra.mxu0 %v4026
      %4140 = vmatpush.msra.mxu0 %v4025
      %4141 = vmatmul.f32.gmra.mxu0 %v4030
      %v4142 = vpop.f32.mrf.mxu0
      %v4143 = vadd.f32 0.0, %v4142
      %4144 = vmatmul.f32.gmra.mxu0 %v4033
      %v4145 = vpop.f32.mrf.mxu0
      %v4146 = vadd.f32 0.0, %v4145
      %4147 = vmatmul.f32.gmra.mxu0 %v4036
      %v4148 = vpop.f32.mrf.mxu0
      %v4149 = vadd.f32 0.0, %v4148
      %4150 = vmatmul.f32.gmra.mxu0 %v4039
      %v4151 = vpop.f32.mrf.mxu0
      %v4152 = vadd.f32 0.0, %v4151
      %4153 = vmatmul.f32.gmra.mxu0 %v4042
      %v4154 = vpop.f32.mrf.mxu0
      %v4155 = vadd.f32 0.0, %v4154
      %4156 = vmatmul.f32.gmra.mxu0 %v4045
      %v4157 = vpop.f32.mrf.mxu0
      %v4158 = vadd.f32 0.0, %v4157
      %4159 = vmatmul.f32.gmra.mxu0 %v4048
      %v4160 = vpop.f32.mrf.mxu0
      %v4161 = vadd.f32 0.0, %v4160
      %4162 = vmatmul.f32.gmra.mxu0 %v4051
      %v4163 = vpop.f32.mrf.mxu0
      %v4164 = vadd.f32 0.0, %v4163
      %4165 = vmatmul.f32.gmra.mxu0 %v4054
      %v4166 = vpop.f32.mrf.mxu0
      %v4167 = vadd.f32 0.0, %v4166
      %4168 = vmatmul.f32.gmra.mxu0 %v4057
      %v4169 = vpop.f32.mrf.mxu0
      %v4170 = vadd.f32 0.0, %v4169
      %4171 = vmatmul.f32.gmra.mxu0 %v4060
      %v4172 = vpop.f32.mrf.mxu0
      %v4173 = vadd.f32 0.0, %v4172
      %4174 = vmatmul.f32.gmra.mxu0 %v4063
      %v4175 = vpop.f32.mrf.mxu0
      %v4176 = vadd.f32 0.0, %v4175
      %4177 = vmatmul.f32.gmra.mxu0 %v4066
      %v4178 = vpop.f32.mrf.mxu0
      %v4179 = vadd.f32 0.0, %v4178
      %4180 = vmatmul.f32.gmra.mxu0 %v4069
      %v4181 = vpop.f32.mrf.mxu0
      %v4182 = vadd.f32 0.0, %v4181
      %4183 = vmatmul.f32.gmra.mxu0 %v4072
      %v4184 = vpop.f32.mrf.mxu0
      %v4185 = vadd.f32 0.0, %v4184
      %4186 = vmatmul.f32.gmra.mxu0 %v4075
      %v4187 = vpop.f32.mrf.mxu0
      %v4188 = vadd.f32 0.0, %v4187
      %4189 = vmatmul.f32.gmra.mxu0 %v4078
      %v4190 = vpop.f32.mrf.mxu0
      %v4191 = vadd.f32 0.0, %v4190
      %4192 = vmatmul.f32.gmra.mxu0 %v4081
      %v4193 = vpop.f32.mrf.mxu0
      %v4194 = vadd.f32 0.0, %v4193
      %4195 = vmatmul.f32.gmra.mxu0 %v4084
      %v4196 = vpop.f32.mrf.mxu0
      %v4197 = vadd.f32 0.0, %v4196
      %4198 = vmatmul.f32.gmra.mxu0 %v4087
      %v4199 = vpop.f32.mrf.mxu0
      %v4200 = vadd.f32 0.0, %v4199
      %4201 = vmatmul.f32.gmra.mxu0 %v4090
      %v4202 = vpop.f32.mrf.mxu0
      %v4203 = vadd.f32 0.0, %v4202
      %4204 = vmatmul.f32.gmra.mxu0 %v4093
      %v4205 = vpop.f32.mrf.mxu0
      %v4206 = vadd.f32 0.0, %v4205
      %4207 = vmatmul.f32.gmra.mxu0 %v4096
      %v4208 = vpop.f32.mrf.mxu0
      %v4209 = vadd.f32 0.0, %v4208
      %4210 = vmatmul.f32.gmra.mxu0 %v4099
      %v4211 = vpop.f32.mrf.mxu0
      %v4212 = vadd.f32 0.0, %v4211
      %4213 = vmatmul.f32.gmra.mxu0 %v4102
      %v4214 = vpop.f32.mrf.mxu0
      %v4215 = vadd.f32 0.0, %v4214
      %4216 = vmatmul.f32.gmra.mxu0 %v4105
      %v4217 = vpop.f32.mrf.mxu0
      %v4218 = vadd.f32 0.0, %v4217
      %4219 = vmatmul.f32.gmra.mxu0 %v4108
      %v4220 = vpop.f32.mrf.mxu0
      %v4221 = vadd.f32 0.0, %v4220
      %4222 = vmatmul.f32.gmra.mxu0 %v4111
      %v4223 = vpop.f32.mrf.mxu0
      %v4224 = vadd.f32 0.0, %v4223
      %4225 = vmatmul.f32.gmra.mxu0 %v4114
      %v4226 = vpop.f32.mrf.mxu0
      %v4227 = vadd.f32 0.0, %v4226
      %4228 = vmatmul.f32.gmra.mxu0 %v4117
      %v4229 = vpop.f32.mrf.mxu0
      %v4230 = vadd.f32 0.0, %v4229
      %4231 = vmatmul.f32.gmra.mxu0 %v4120
      %v4232 = vpop.f32.mrf.mxu0
      %v4233 = vadd.f32 0.0, %v4232
      %4234 = vmatmul.f32.gmra.mxu0 %v4123
      %v4235 = vpop.f32.mrf.mxu0
      %v4236 = vadd.f32 0.0, %v4235
      %4237 = vdwg.mxu0
      %4270 = vrot.lane.b32.xlu0 %v4143, 32
      %v4271 = vpop.permute.xlu0 %4270
      %4272 = vrot.lane.b32.xlu0 %v4146, 32
      %v4273 = vpop.permute.xlu0 %4272
      %4274 = vrot.lane.b32.xlu0 %v4149, 32
      %v4275 = vpop.permute.xlu0 %4274
      %4276 = vrot.lane.b32.xlu0 %v4152, 32
      %v4277 = vpop.permute.xlu0 %4276
      %4278 = vrot.lane.b32.xlu0 %v4155, 32
      %v4279 = vpop.permute.xlu0 %4278
      %4280 = vrot.lane.b32.xlu0 %v4158, 32
      %v4281 = vpop.permute.xlu0 %4280
      %4282 = vrot.lane.b32.xlu0 %v4161, 32
      %v4283 = vpop.permute.xlu0 %4282
      %4284 = vrot.lane.b32.xlu0 %v4164, 32
      %v4285 = vpop.permute.xlu0 %4284
      %4286 = vrot.lane.b32.xlu0 %v4167, 32
      %v4287 = vpop.permute.xlu0 %4286
      %4288 = vrot.lane.b32.xlu0 %v4170, 32
      %v4289 = vpop.permute.xlu0 %4288
      %4290 = vrot.lane.b32.xlu0 %v4173, 32
      %v4291 = vpop.permute.xlu0 %4290
      %4292 = vrot.lane.b32.xlu0 %v4176, 32
      %v4293 = vpop.permute.xlu0 %4292
      %4294 = vrot.lane.b32.xlu0 %v4179, 32
      %v4295 = vpop.permute.xlu0 %4294
      %4296 = vrot.lane.b32.xlu0 %v4182, 32
      %v4297 = vpop.permute.xlu0 %4296
      %4298 = vrot.lane.b32.xlu0 %v4185, 32
      %v4299 = vpop.permute.xlu0 %4298
      %4300 = vrot.lane.b32.xlu0 %v4188, 32
      %v4301 = vpop.permute.xlu0 %4300
      %4302 = vrot.lane.b32.xlu0 %v4191, 32
      %v4303 = vpop.permute.xlu0 %4302
      %4304 = vrot.lane.b32.xlu0 %v4194, 32
      %v4305 = vpop.permute.xlu0 %4304
      %4306 = vrot.lane.b32.xlu0 %v4197, 32
      %v4307 = vpop.permute.xlu0 %4306
      %4308 = vrot.lane.b32.xlu0 %v4200, 32
      %v4309 = vpop.permute.xlu0 %4308
      %4310 = vrot.lane.b32.xlu0 %v4203, 32
      %v4311 = vpop.permute.xlu0 %4310
      %4312 = vrot.lane.b32.xlu0 %v4206, 32
      %v4313 = vpop.permute.xlu0 %4312
      %4314 = vrot.lane.b32.xlu0 %v4209, 32
      %v4315 = vpop.permute.xlu0 %4314
      %4316 = vrot.lane.b32.xlu0 %v4212, 32
      %v4317 = vpop.permute.xlu0 %4316
      %4318 = vrot.lane.b32.xlu0 %v4215, 32
      %v4319 = vpop.permute.xlu0 %4318
      %4320 = vrot.lane.b32.xlu0 %v4218, 32
      %v4321 = vpop.permute.xlu0 %4320
      %4322 = vrot.lane.b32.xlu0 %v4221, 32
      %v4323 = vpop.permute.xlu0 %4322
      %4324 = vrot.lane.b32.xlu0 %v4224, 32
      %v4325 = vpop.permute.xlu0 %4324
      %4326 = vrot.lane.b32.xlu0 %v4227, 32
      %v4327 = vpop.permute.xlu0 %4326
      %4328 = vrot.lane.b32.xlu0 %v4230, 32
      %v4329 = vpop.permute.xlu0 %4328
      %4330 = vrot.lane.b32.xlu0 %v4233, 32
      %v4331 = vpop.permute.xlu0 %4330
      %4332 = vrot.lane.b32.xlu0 %v4236, 32
      %v4333 = vpop.permute.xlu0 %4332
      %v4366 = vadd.f32 %v1364, %v4271
      %v4367 = vadd.f32 %v1367, %v4273
      %v4368 = vadd.f32 %v1370, %v4275
      %v4369 = vadd.f32 %v1373, %v4277
      %v4370 = vadd.f32 %v1376, %v4279
      %v4371 = vadd.f32 %v1379, %v4281
      %v4372 = vadd.f32 %v1382, %v4283
      %v4373 = vadd.f32 %v1385, %v4285
      %v4374 = vadd.f32 %v1388, %v4287
      %v4375 = vadd.f32 %v1391, %v4289
      %v4376 = vadd.f32 %v1394, %v4291
      %v4377 = vadd.f32 %v1397, %v4293
      %v4378 = vadd.f32 %v1400, %v4295
      %v4379 = vadd.f32 %v1403, %v4297
      %v4380 = vadd.f32 %v1406, %v4299
      %v4381 = vadd.f32 %v1409, %v4301
      %v4382 = vadd.f32 %v1412, %v4303
      %v4383 = vadd.f32 %v1415, %v4305
      %v4384 = vadd.f32 %v1418, %v4307
      %v4385 = vadd.f32 %v1421, %v4309
      %v4386 = vadd.f32 %v1424, %v4311
      %v4387 = vadd.f32 %v1427, %v4313
      %v4388 = vadd.f32 %v1430, %v4315
      %v4389 = vadd.f32 %v1433, %v4317
      %v4390 = vadd.f32 %v1436, %v4319
      %v4391 = vadd.f32 %v1439, %v4321
      %v4392 = vadd.f32 %v1442, %v4323
      %v4393 = vadd.f32 %v1445, %v4325
      %v4394 = vadd.f32 %v1448, %v4327
      %v4395 = vadd.f32 %v1451, %v4329
      %v4396 = vadd.f32 %v1454, %v4331
      %v4397 = vadd.f32 %v1457, %v4333
      %v4398 = vmul.f32 %v4366, %v4366
      %v4399 = vmul.f32 %v4367, %v4367
      %v4400 = vmul.f32 %v4368, %v4368
      %v4401 = vmul.f32 %v4369, %v4369
      %v4402 = vmul.f32 %v4370, %v4370
      %v4403 = vmul.f32 %v4371, %v4371
      %v4404 = vmul.f32 %v4372, %v4372
      %v4405 = vmul.f32 %v4373, %v4373
      %v4406 = vmul.f32 %v4374, %v4374
      %v4407 = vmul.f32 %v4375, %v4375
      %v4408 = vmul.f32 %v4376, %v4376
      %v4409 = vmul.f32 %v4377, %v4377
      %v4410 = vmul.f32 %v4378, %v4378
      %v4411 = vmul.f32 %v4379, %v4379
      %v4412 = vmul.f32 %v4380, %v4380
      %v4413 = vmul.f32 %v4381, %v4381
      %v4414 = vmul.f32 %v4382, %v4382
      %v4415 = vmul.f32 %v4383, %v4383
      %v4416 = vmul.f32 %v4384, %v4384
      %v4417 = vmul.f32 %v4385, %v4385
      %v4418 = vmul.f32 %v4386, %v4386
      %v4419 = vmul.f32 %v4387, %v4387
      %v4420 = vmul.f32 %v4388, %v4388
      %v4421 = vmul.f32 %v4389, %v4389
      %v4422 = vmul.f32 %v4390, %v4390
      %v4423 = vmul.f32 %v4391, %v4391
      %v4424 = vmul.f32 %v4392, %v4392
      %v4425 = vmul.f32 %v4393, %v4393
      %v4426 = vmul.f32 %v4394, %v4394
      %v4427 = vmul.f32 %v4395, %v4395
      %v4428 = vmul.f32 %v4396, %v4396
      %v4429 = vmul.f32 %v4397, %v4397
      %v4430 = vmul.f32 %v4366, %v4398
      %v4431 = vmul.f32 %v4367, %v4399
      %v4432 = vmul.f32 %v4368, %v4400
      %v4433 = vmul.f32 %v4369, %v4401
      %v4434 = vmul.f32 %v4370, %v4402
      %v4435 = vmul.f32 %v4371, %v4403
      %v4436 = vmul.f32 %v4372, %v4404
      %v4437 = vmul.f32 %v4373, %v4405
      %v4438 = vmul.f32 %v4374, %v4406
      %v4439 = vmul.f32 %v4375, %v4407
      %v4440 = vmul.f32 %v4376, %v4408
      %v4441 = vmul.f32 %v4377, %v4409
      %v4442 = vmul.f32 %v4378, %v4410
      %v4443 = vmul.f32 %v4379, %v4411
      %v4444 = vmul.f32 %v4380, %v4412
      %v4445 = vmul.f32 %v4381, %v4413
      %v4446 = vmul.f32 %v4382, %v4414
      %v4447 = vmul.f32 %v4383, %v4415
      %v4448 = vmul.f32 %v4384, %v4416
      %v4449 = vmul.f32 %v4385, %v4417
      %v4450 = vmul.f32 %v4386, %v4418
      %v4451 = vmul.f32 %v4387, %v4419
      %v4452 = vmul.f32 %v4388, %v4420
      %v4453 = vmul.f32 %v4389, %v4421
      %v4454 = vmul.f32 %v4390, %v4422
      %v4455 = vmul.f32 %v4391, %v4423
      %v4456 = vmul.f32 %v4392, %v4424
      %v4457 = vmul.f32 %v4393, %v4425
      %v4458 = vmul.f32 %v4394, %v4426
      %v4459 = vmul.f32 %v4395, %v4427
      %v4460 = vmul.f32 %v4396, %v4428
      %v4461 = vmul.f32 %v4397, %v4429
      %v4462 = vmul.f32 %v4430, 0.044715
      %v4463 = vmul.f32 %v4431, 0.044715
      %v4464 = vmul.f32 %v4432, 0.044715
      %v4465 = vmul.f32 %v4433, 0.044715
      %v4466 = vmul.f32 %v4434, 0.044715
      %v4467 = vmul.f32 %v4435, 0.044715
      %v4468 = vmul.f32 %v4436, 0.044715
      %v4469 = vmul.f32 %v4437, 0.044715
      %v4470 = vmul.f32 %v4438, 0.044715
      %v4471 = vmul.f32 %v4439, 0.044715
      %v4472 = vmul.f32 %v4440, 0.044715
      %v4473 = vmul.f32 %v4441, 0.044715
      %v4474 = vmul.f32 %v4442, 0.044715
      %v4475 = vmul.f32 %v4443, 0.044715
      %v4476 = vmul.f32 %v4444, 0.044715
      %v4477 = vmul.f32 %v4445, 0.044715
      %v4478 = vmul.f32 %v4446, 0.044715
      %v4479 = vmul.f32 %v4447, 0.044715
      %v4480 = vmul.f32 %v4448, 0.044715
      %v4481 = vmul.f32 %v4449, 0.044715
      %v4482 = vmul.f32 %v4450, 0.044715
      %v4483 = vmul.f32 %v4451, 0.044715
      %v4484 = vmul.f32 %v4452, 0.044715
      %v4485 = vmul.f32 %v4453, 0.044715
      %v4486 = vmul.f32 %v4454, 0.044715
      %v4487 = vmul.f32 %v4455, 0.044715
      %v4488 = vmul.f32 %v4456, 0.044715
      %v4489 = vmul.f32 %v4457, 0.044715
      %v4490 = vmul.f32 %v4458, 0.044715
      %v4491 = vmul.f32 %v4459, 0.044715
      %v4492 = vmul.f32 %v4460, 0.044715
      %v4493 = vmul.f32 %v4461, 0.044715
      %v4494 = vadd.f32 %v4366, %v4462
      %v4495 = vadd.f32 %v4367, %v4463
      %v4496 = vadd.f32 %v4368, %v4464
      %v4497 = vadd.f32 %v4369, %v4465
      %v4498 = vadd.f32 %v4370, %v4466
      %v4499 = vadd.f32 %v4371, %v4467
      %v4500 = vadd.f32 %v4372, %v4468
      %v4501 = vadd.f32 %v4373, %v4469
      %v4502 = vadd.f32 %v4374, %v4470
      %v4503 = vadd.f32 %v4375, %v4471
      %v4504 = vadd.f32 %v4376, %v4472
      %v4505 = vadd.f32 %v4377, %v4473
      %v4506 = vadd.f32 %v4378, %v4474
      %v4507 = vadd.f32 %v4379, %v4475
      %v4508 = vadd.f32 %v4380, %v4476
      %v4509 = vadd.f32 %v4381, %v4477
      %v4510 = vadd.f32 %v4382, %v4478
      %v4511 = vadd.f32 %v4383, %v4479
      %v4512 = vadd.f32 %v4384, %v4480
      %v4513 = vadd.f32 %v4385, %v4481
      %v4514 = vadd.f32 %v4386, %v4482
      %v4515 = vadd.f32 %v4387, %v4483
      %v4516 = vadd.f32 %v4388, %v4484
      %v4517 = vadd.f32 %v4389, %v4485
      %v4518 = vadd.f32 %v4390, %v4486
      %v4519 = vadd.f32 %v4391, %v4487
      %v4520 = vadd.f32 %v4392, %v4488
      %v4521 = vadd.f32 %v4393, %v4489
      %v4522 = vadd.f32 %v4394, %v4490
      %v4523 = vadd.f32 %v4395, %v4491
      %v4524 = vadd.f32 %v4396, %v4492
      %v4525 = vadd.f32 %v4397, %v4493
      %v4526 = vmul.f32 %v4494, 0.7978846
      %v4527 = vmul.f32 %v4495, 0.7978846
      %v4528 = vmul.f32 %v4496, 0.7978846
      %v4529 = vmul.f32 %v4497, 0.7978846
      %v4530 = vmul.f32 %v4498, 0.7978846
      %v4531 = vmul.f32 %v4499, 0.7978846
      %v4532 = vmul.f32 %v4500, 0.7978846
      %v4533 = vmul.f32 %v4501, 0.7978846
      %v4534 = vmul.f32 %v4502, 0.7978846
      %v4535 = vmul.f32 %v4503, 0.7978846
      %v4536 = vmul.f32 %v4504, 0.7978846
      %v4537 = vmul.f32 %v4505, 0.7978846
      %v4538 = vmul.f32 %v4506, 0.7978846
      %v4539 = vmul.f32 %v4507, 0.7978846
      %v4540 = vmul.f32 %v4508, 0.7978846
      %v4541 = vmul.f32 %v4509, 0.7978846
      %v4542 = vmul.f32 %v4510, 0.7978846
      %v4543 = vmul.f32 %v4511, 0.7978846
      %v4544 = vmul.f32 %v4512, 0.7978846
      %v4545 = vmul.f32 %v4513, 0.7978846
      %v4546 = vmul.f32 %v4514, 0.7978846
      %v4547 = vmul.f32 %v4515, 0.7978846
      %v4548 = vmul.f32 %v4516, 0.7978846
      %v4549 = vmul.f32 %v4517, 0.7978846
      %v4550 = vmul.f32 %v4518, 0.7978846
      %v4551 = vmul.f32 %v4519, 0.7978846
      %v4552 = vmul.f32 %v4520, 0.7978846
      %v4553 = vmul.f32 %v4521, 0.7978846
      %v4554 = vmul.f32 %v4522, 0.7978846
      %v4555 = vmul.f32 %v4523, 0.7978846
      %v4556 = vmul.f32 %v4524, 0.7978846
      %v4557 = vmul.f32 %v4525, 0.7978846
      %v4558 = vtanh.pop %v4526
      %v4559 = vtanh.pop %v4527
      %v4560 = vtanh.pop %v4528
      %v4561 = vtanh.pop %v4529
      %v4562 = vtanh.pop %v4530
      %v4563 = vtanh.pop %v4531
      %v4564 = vtanh.pop %v4532
      %v4565 = vtanh.pop %v4533
      %v4566 = vtanh.pop %v4534
      %v4567 = vtanh.pop %v4535
      %v4568 = vtanh.pop %v4536
      %v4569 = vtanh.pop %v4537
      %v4570 = vtanh.pop %v4538
      %v4571 = vtanh.pop %v4539
      %v4572 = vtanh.pop %v4540
      %v4573 = vtanh.pop %v4541
      %v4574 = vtanh.pop %v4542
      %v4575 = vtanh.pop %v4543
      %v4576 = vtanh.pop %v4544
      %v4577 = vtanh.pop %v4545
      %v4578 = vtanh.pop %v4546
      %v4579 = vtanh.pop %v4547
      %v4580 = vtanh.pop %v4548
      %v4581 = vtanh.pop %v4549
      %v4582 = vtanh.pop %v4550
      %v4583 = vtanh.pop %v4551
      %v4584 = vtanh.pop %v4552
      %v4585 = vtanh.pop %v4553
      %v4586 = vtanh.pop %v4554
      %v4587 = vtanh.pop %v4555
      %v4588 = vtanh.pop %v4556
      %v4589 = vtanh.pop %v4557
      %v4590 = vadd.f32 %v4558, 1.0
      %v4591 = vadd.f32 %v4559, 1.0
      %v4592 = vadd.f32 %v4560, 1.0
      %v4593 = vadd.f32 %v4561, 1.0
      %v4594 = vadd.f32 %v4562, 1.0
      %v4595 = vadd.f32 %v4563, 1.0
      %v4596 = vadd.f32 %v4564, 1.0
      %v4597 = vadd.f32 %v4565, 1.0
      %v4598 = vadd.f32 %v4566, 1.0
      %v4599 = vadd.f32 %v4567, 1.0
      %v4600 = vadd.f32 %v4568, 1.0
      %v4601 = vadd.f32 %v4569, 1.0
      %v4602 = vadd.f32 %v4570, 1.0
      %v4603 = vadd.f32 %v4571, 1.0
      %v4604 = vadd.f32 %v4572, 1.0
      %v4605 = vadd.f32 %v4573, 1.0
      %v4606 = vadd.f32 %v4574, 1.0
      %v4607 = vadd.f32 %v4575, 1.0
      %v4608 = vadd.f32 %v4576, 1.0
      %v4609 = vadd.f32 %v4577, 1.0
      %v4610 = vadd.f32 %v4578, 1.0
      %v4611 = vadd.f32 %v4579, 1.0
      %v4612 = vadd.f32 %v4580, 1.0
      %v4613 = vadd.f32 %v4581, 1.0
      %v4614 = vadd.f32 %v4582, 1.0
      %v4615 = vadd.f32 %v4583, 1.0
      %v4616 = vadd.f32 %v4584, 1.0
      %v4617 = vadd.f32 %v4585, 1.0
      %v4618 = vadd.f32 %v4586, 1.0
      %v4619 = vadd.f32 %v4587, 1.0
      %v4620 = vadd.f32 %v4588, 1.0
      %v4621 = vadd.f32 %v4589, 1.0
      %v4622 = vmul.f32 %v4590, 0.5
      %v4623 = vmul.f32 %v4591, 0.5
      %v4624 = vmul.f32 %v4592, 0.5
      %v4625 = vmul.f32 %v4593, 0.5
      %v4626 = vmul.f32 %v4594, 0.5
      %v4627 = vmul.f32 %v4595, 0.5
      %v4628 = vmul.f32 %v4596, 0.5
      %v4629 = vmul.f32 %v4597, 0.5
      %v4630 = vmul.f32 %v4598, 0.5
      %v4631 = vmul.f32 %v4599, 0.5
      %v4632 = vmul.f32 %v4600, 0.5
      %v4633 = vmul.f32 %v4601, 0.5
      %v4634 = vmul.f32 %v4602, 0.5
      %v4635 = vmul.f32 %v4603, 0.5
      %v4636 = vmul.f32 %v4604, 0.5
      %v4637 = vmul.f32 %v4605, 0.5
      %v4638 = vmul.f32 %v4606, 0.5
      %v4639 = vmul.f32 %v4607, 0.5
      %v4640 = vmul.f32 %v4608, 0.5
      %v4641 = vmul.f32 %v4609, 0.5
      %v4642 = vmul.f32 %v4610, 0.5
      %v4643 = vmul.f32 %v4611, 0.5
      %v4644 = vmul.f32 %v4612, 0.5
      %v4645 = vmul.f32 %v4613, 0.5
      %v4646 = vmul.f32 %v4614, 0.5
      %v4647 = vmul.f32 %v4615, 0.5
      %v4648 = vmul.f32 %v4616, 0.5
      %v4649 = vmul.f32 %v4617, 0.5
      %v4650 = vmul.f32 %v4618, 0.5
      %v4651 = vmul.f32 %v4619, 0.5
      %v4652 = vmul.f32 %v4620, 0.5
      %v4653 = vmul.f32 %v4621, 0.5
      %v4654 = vmul.f32 %v4366, %v4622
      %v4655 = vmul.f32 %v4367, %v4623
      %v4656 = vmul.f32 %v4368, %v4624
      %v4657 = vmul.f32 %v4369, %v4625
      %v4658 = vmul.f32 %v4370, %v4626
      %v4659 = vmul.f32 %v4371, %v4627
      %v4660 = vmul.f32 %v4372, %v4628
      %v4661 = vmul.f32 %v4373, %v4629
      %v4662 = vmul.f32 %v4374, %v4630
      %v4663 = vmul.f32 %v4375, %v4631
      %v4664 = vmul.f32 %v4376, %v4632
      %v4665 = vmul.f32 %v4377, %v4633
      %v4666 = vmul.f32 %v4378, %v4634
      %v4667 = vmul.f32 %v4379, %v4635
      %v4668 = vmul.f32 %v4380, %v4636
      %v4669 = vmul.f32 %v4381, %v4637
      %v4670 = vmul.f32 %v4382, %v4638
      %v4671 = vmul.f32 %v4383, %v4639
      %v4672 = vmul.f32 %v4384, %v4640
      %v4673 = vmul.f32 %v4385, %v4641
      %v4674 = vmul.f32 %v4386, %v4642
      %v4675 = vmul.f32 %v4387, %v4643
      %v4676 = vmul.f32 %v4388, %v4644
      %v4677 = vmul.f32 %v4389, %v4645
      %v4678 = vmul.f32 %v4390, %v4646
      %v4679 = vmul.f32 %v4391, %v4647
      %v4680 = vmul.f32 %v4392, %v4648
      %v4681 = vmul.f32 %v4393, %v4649
      %v4682 = vmul.f32 %v4394, %v4650
      %v4683 = vmul.f32 %v4395, %v4651
      %v4684 = vmul.f32 %v4396, %v4652
      %v4685 = vmul.f32 %v4397, %v4653
      %v4686 = vld [vmem:[%s4] sm:$0xff]
      %v4687 = vld [vmem:[%s4 + $0x8] sm:$0xff]
      %v4688 = vld [vmem:[%s4 + $0x10] sm:$0xff]
      %v4689 = vld [vmem:[%s4 + $0x18] sm:$0xff]
      %v4690 = vld [vmem:[%s4 + $0x20] sm:$0xff]
      %v4691 = vld [vmem:[%s4 + $0x28] sm:$0xff]
      %v4692 = vld [vmem:[%s4 + $0x30] sm:$0xff]
      %v4693 = vld [vmem:[%s4 + $0x38] sm:$0xff]
      %v4694 = vperm.slane %v466, 3
      %4727 = vrot.lane.b32.xlu0 %v4654, 96
      %v4728 = vpop.permute.xlu0 %4727
      %4729 = vrot.lane.b32.xlu0 %v4655, 96
      %v4730 = vpop.permute.xlu0 %4729
      %4731 = vrot.lane.b32.xlu0 %v4656, 96
      %v4732 = vpop.permute.xlu0 %4731
      %4733 = vrot.lane.b32.xlu0 %v4657, 96
      %v4734 = vpop.permute.xlu0 %4733
      %4735 = vrot.lane.b32.xlu0 %v4658, 96
      %v4736 = vpop.permute.xlu0 %4735
      %4737 = vrot.lane.b32.xlu0 %v4659, 96
      %v4738 = vpop.permute.xlu0 %4737
      %4739 = vrot.lane.b32.xlu0 %v4660, 96
      %v4740 = vpop.permute.xlu0 %4739
      %4741 = vrot.lane.b32.xlu0 %v4661, 96
      %v4742 = vpop.permute.xlu0 %4741
      %4743 = vrot.lane.b32.xlu0 %v4662, 96
      %v4744 = vpop.permute.xlu0 %4743
      %4745 = vrot.lane.b32.xlu0 %v4663, 96
      %v4746 = vpop.permute.xlu0 %4745
      %4747 = vrot.lane.b32.xlu0 %v4664, 96
      %v4748 = vpop.permute.xlu0 %4747
      %4749 = vrot.lane.b32.xlu0 %v4665, 96
      %v4750 = vpop.permute.xlu0 %4749
      %4751 = vrot.lane.b32.xlu0 %v4666, 96
      %v4752 = vpop.permute.xlu0 %4751
      %4753 = vrot.lane.b32.xlu0 %v4667, 96
      %v4754 = vpop.permute.xlu0 %4753
      %4755 = vrot.lane.b32.xlu0 %v4668, 96
      %v4756 = vpop.permute.xlu0 %4755
      %4757 = vrot.lane.b32.xlu0 %v4669, 96
      %v4758 = vpop.permute.xlu0 %4757
      %4759 = vrot.lane.b32.xlu0 %v4670, 96
      %v4760 = vpop.permute.xlu0 %4759
      %4761 = vrot.lane.b32.xlu0 %v4671, 96
      %v4762 = vpop.permute.xlu0 %4761
      %4763 = vrot.lane.b32.xlu0 %v4672, 96
      %v4764 = vpop.permute.xlu0 %4763
      %4765 = vrot.lane.b32.xlu0 %v4673, 96
      %v4766 = vpop.permute.xlu0 %4765
      %4767 = vrot.lane.b32.xlu0 %v4674, 96
      %v4768 = vpop.permute.xlu0 %4767
      %4769 = vrot.lane.b32.xlu0 %v4675, 96
      %v4770 = vpop.permute.xlu0 %4769
      %4771 = vrot.lane.b32.xlu0 %v4676, 96
      %v4772 = vpop.permute.xlu0 %4771
      %4773 = vrot.lane.b32.xlu0 %v4677, 96
      %v4774 = vpop.permute.xlu0 %4773
      %4775 = vrot.lane.b32.xlu0 %v4678, 96
      %v4776 = vpop.permute.xlu0 %4775
      %4777 = vrot.lane.b32.xlu0 %v4679, 96
      %v4778 = vpop.permute.xlu0 %4777
      %4779 = vrot.lane.b32.xlu0 %v4680, 96
      %v4780 = vpop.permute.xlu0 %4779
      %4781 = vrot.lane.b32.xlu0 %v4681, 96
      %v4782 = vpop.permute.xlu0 %4781
      %4783 = vrot.lane.b32.xlu0 %v4682, 96
      %v4784 = vpop.permute.xlu0 %4783
      %4785 = vrot.lane.b32.xlu0 %v4683, 96
      %v4786 = vpop.permute.xlu0 %4785
      %4787 = vrot.lane.b32.xlu0 %v4684, 96
      %v4788 = vpop.permute.xlu0 %4787
      %4789 = vrot.lane.b32.xlu0 %v4685, 96
      %v4790 = vpop.permute.xlu0 %4789
      %vm4791 = vcmask 523264
      %v4792 = vsel %vm4791, %v4728, 0
      %v4794 = vsel %vm4791, %v4730, 0
      %v4796 = vsel %vm4791, %v4732, 0
      %v4798 = vsel %vm4791, %v4734, 0
      %v4800 = vsel %vm4791, %v4736, 0
      %v4802 = vsel %vm4791, %v4738, 0
      %v4804 = vsel %vm4791, %v4740, 0
      %v4806 = vsel %vm4791, %v4742, 0
      %v4808 = vsel %vm4791, %v4744, 0
      %v4810 = vsel %vm4791, %v4746, 0
      %v4812 = vsel %vm4791, %v4748, 0
      %v4814 = vsel %vm4791, %v4750, 0
      %v4816 = vsel %vm4791, %v4752, 0
      %v4818 = vsel %vm4791, %v4754, 0
      %v4820 = vsel %vm4791, %v4756, 0
      %v4822 = vsel %vm4791, %v4758, 0
      %v4824 = vsel %vm4791, %v4760, 0
      %v4826 = vsel %vm4791, %v4762, 0
      %v4828 = vsel %vm4791, %v4764, 0
      %v4830 = vsel %vm4791, %v4766, 0
      %v4832 = vsel %vm4791, %v4768, 0
      %v4834 = vsel %vm4791, %v4770, 0
      %v4836 = vsel %vm4791, %v4772, 0
      %v4838 = vsel %vm4791, %v4774, 0
      %v4840 = vsel %vm4791, %v4776, 0
      %v4842 = vsel %vm4791, %v4778, 0
      %v4844 = vsel %vm4791, %v4780, 0
      %v4846 = vsel %vm4791, %v4782, 0
      %v4848 = vsel %vm4791, %v4784, 0
      %v4850 = vsel %vm4791, %v4786, 0
      %v4852 = vsel %vm4791, %v4788, 0
      %v4854 = vsel %vm4791, %v4790, 0
      %4856 = vmatpush.msra.mxu0 0.0
      %4857 = vmatpush.msra.mxu0 0.0
      %4858 = vmatpush.msra.mxu0 0.0
      %4859 = vmatpush.msra.mxu0 0.0
      %4860 = vmatpush.msra.mxu0 0.0
      %4861 = vmatpush.msra.mxu0 0.0
      %4862 = vmatpush.msra.mxu0 0.0
      %4863 = vmatpush.msra.mxu0 0.0
      %4864 = vmatpush.msra.mxu0 %v4693
      %4865 = vmatpush.msra.mxu0 %v4692
      %4866 = vmatpush.msra.mxu0 %v4691
      %4867 = vmatpush.msra.mxu0 %v4690
      %4868 = vmatpush.msra.mxu0 %v4689
      %4869 = vmatpush.msra.mxu0 %v4688
      %4870 = vmatpush.msra.mxu0 %v4687
      %4871 = vmatpush.msra.mxu0 %v4686
      %4872 = vmatmul.f32.gmra.mxu0 %v4792
      %v4873 = vpop.f32.mrf.mxu0
      %v4874 = vadd.f32 %v4694, %v4873
      %4875 = vmatmul.f32.gmra.mxu0 %v4794
      %v4876 = vpop.f32.mrf.mxu0
      %v4877 = vadd.f32 %v4694, %v4876
      %4878 = vmatmul.f32.gmra.mxu0 %v4796
      %v4879 = vpop.f32.mrf.mxu0
      %v4880 = vadd.f32 %v4694, %v4879
      %4881 = vmatmul.f32.gmra.mxu0 %v4798
      %v4882 = vpop.f32.mrf.mxu0
      %v4883 = vadd.f32 %v4694, %v4882
      %4884 = vmatmul.f32.gmra.mxu0 %v4800
      %v4885 = vpop.f32.mrf.mxu0
      %v4886 = vadd.f32 %v4694, %v4885
      %4887 = vmatmul.f32.gmra.mxu0 %v4802
      %v4888 = vpop.f32.mrf.mxu0
      %v4889 = vadd.f32 %v4694, %v4888
      %4890 = vmatmul.f32.gmra.mxu0 %v4804
      %v4891 = vpop.f32.mrf.mxu0
      %v4892 = vadd.f32 %v4694, %v4891
      %4893 = vmatmul.f32.gmra.mxu0 %v4806
      %v4894 = vpop.f32.mrf.mxu0
      %v4895 = vadd.f32 %v4694, %v4894
      %4896 = vmatmul.f32.gmra.mxu0 %v4808
      %v4897 = vpop.f32.mrf.mxu0
      %v4898 = vadd.f32 %v4694, %v4897
      %4899 = vmatmul.f32.gmra.mxu0 %v4810
      %v4900 = vpop.f32.mrf.mxu0
      %v4901 = vadd.f32 %v4694, %v4900
      %4902 = vmatmul.f32.gmra.mxu0 %v4812
      %v4903 = vpop.f32.mrf.mxu0
      %v4904 = vadd.f32 %v4694, %v4903
      %4905 = vmatmul.f32.gmra.mxu0 %v4814
      %v4906 = vpop.f32.mrf.mxu0
      %v4907 = vadd.f32 %v4694, %v4906
      %4908 = vmatmul.f32.gmra.mxu0 %v4816
      %v4909 = vpop.f32.mrf.mxu0
      %v4910 = vadd.f32 %v4694, %v4909
      %4911 = vmatmul.f32.gmra.mxu0 %v4818
      %v4912 = vpop.f32.mrf.mxu0
      %v4913 = vadd.f32 %v4694, %v4912
      %4914 = vmatmul.f32.gmra.mxu0 %v4820
      %v4915 = vpop.f32.mrf.mxu0
      %v4916 = vadd.f32 %v4694, %v4915
      %4917 = vmatmul.f32.gmra.mxu0 %v4822
      %v4918 = vpop.f32.mrf.mxu0
      %v4919 = vadd.f32 %v4694, %v4918
      %4920 = vmatmul.f32.gmra.mxu0 %v4824
      %v4921 = vpop.f32.mrf.mxu0
      %v4922 = vadd.f32 %v4694, %v4921
      %4923 = vmatmul.f32.gmra.mxu0 %v4826
      %v4924 = vpop.f32.mrf.mxu0
      %v4925 = vadd.f32 %v4694, %v4924
      %4926 = vmatmul.f32.gmra.mxu0 %v4828
      %v4927 = vpop.f32.mrf.mxu0
      %v4928 = vadd.f32 %v4694, %v4927
      %4929 = vmatmul.f32.gmra.mxu0 %v4830
      %v4930 = vpop.f32.mrf.mxu0
      %v4931 = vadd.f32 %v4694, %v4930
      %4932 = vmatmul.f32.gmra.mxu0 %v4832
      %v4933 = vpop.f32.mrf.mxu0
      %v4934 = vadd.f32 %v4694, %v4933
      %4935 = vmatmul.f32.gmra.mxu0 %v4834
      %v4936 = vpop.f32.mrf.mxu0
      %v4937 = vadd.f32 %v4694, %v4936
      %4938 = vmatmul.f32.gmra.mxu0 %v4836
      %v4939 = vpop.f32.mrf.mxu0
      %v4940 = vadd.f32 %v4694, %v4939
      %4941 = vmatmul.f32.gmra.mxu0 %v4838
      %v4942 = vpop.f32.mrf.mxu0
      %v4943 = vadd.f32 %v4694, %v4942
      %4944 = vmatmul.f32.gmra.mxu0 %v4840
      %v4945 = vpop.f32.mrf.mxu0
      %v4946 = vadd.f32 %v4694, %v4945
      %4947 = vmatmul.f32.gmra.mxu0 %v4842
      %v4948 = vpop.f32.mrf.mxu0
      %v4949 = vadd.f32 %v4694, %v4948
      %4950 = vmatmul.f32.gmra.mxu0 %v4844
      %v4951 = vpop.f32.mrf.mxu0
      %v4952 = vadd.f32 %v4694, %v4951
      %4953 = vmatmul.f32.gmra.mxu0 %v4846
      %v4954 = vpop.f32.mrf.mxu0
      %v4955 = vadd.f32 %v4694, %v4954
      %4956 = vmatmul.f32.gmra.mxu0 %v4848
      %v4957 = vpop.f32.mrf.mxu0
      %v4958 = vadd.f32 %v4694, %v4957
      %4959 = vmatmul.f32.gmra.mxu0 %v4850
      %v4960 = vpop.f32.mrf.mxu0
      %v4961 = vadd.f32 %v4694, %v4960
      %4962 = vmatmul.f32.gmra.mxu0 %v4852
      %v4963 = vpop.f32.mrf.mxu0
      %v4964 = vadd.f32 %v4694, %v4963
      %4965 = vmatmul.f32.gmra.mxu0 %v4854
      %v4966 = vpop.f32.mrf.mxu0
      %v4967 = vadd.f32 %v4694, %v4966
      %4968 = vdwg.mxu0
      %v4969 = vadd.f32 %v434, %v4874
      %v4970 = vadd.f32 %v435, %v4877
      %v4971 = vadd.f32 %v436, %v4880
      %v4972 = vadd.f32 %v437, %v4883
      %v4973 = vadd.f32 %v438, %v4886
      %v4974 = vadd.f32 %v439, %v4889
      %v4975 = vadd.f32 %v440, %v4892
      %v4976 = vadd.f32 %v441, %v4895
      %v4977 = vadd.f32 %v442, %v4898
      %v4978 = vadd.f32 %v443, %v4901
      %v4979 = vadd.f32 %v444, %v4904
      %v4980 = vadd.f32 %v445, %v4907
      %v4981 = vadd.f32 %v446, %v4910
      %v4982 = vadd.f32 %v447, %v4913
      %v4983 = vadd.f32 %v448, %v4916
      %v4984 = vadd.f32 %v449, %v4919
      %v4985 = vadd.f32 %v450, %v4922
      %v4986 = vadd.f32 %v451, %v4925
      %v4987 = vadd.f32 %v452, %v4928
      %v4988 = vadd.f32 %v453, %v4931
      %v4989 = vadd.f32 %v454, %v4934
      %v4990 = vadd.f32 %v455, %v4937
      %v4991 = vadd.f32 %v456, %v4940
      %v4992 = vadd.f32 %v457, %v4943
      %v4993 = vadd.f32 %v458, %v4946
      %v4994 = vadd.f32 %v459, %v4949
      %v4995 = vadd.f32 %v460, %v4952
      %v4996 = vadd.f32 %v461, %v4955
      %v4997 = vadd.f32 %v462, %v4958
      %v4998 = vadd.f32 %v463, %v4961
      %v4999 = vadd.f32 %v464, %v4964
      %v5000 = vadd.f32 %v465, %v4967
      %5001 = vst.msk [vmem:[%s433] sm:$0xff] %vm467, %v4969
      %5002 = vst.msk [vmem:[%s433 + $0x8] sm:$0xff] %vm467, %v4970
      %5003 = vst.msk [vmem:[%s433 + $0x10] sm:$0xff] %vm467, %v4971
      %5004 = vst.msk [vmem:[%s433 + $0x18] sm:$0xff] %vm467, %v4972
      %5005 = vst.msk [vmem:[%s433 + $0x20] sm:$0xff] %vm467, %v4973
      %5006 = vst.msk [vmem:[%s433 + $0x28] sm:$0xff] %vm467, %v4974
      %5007 = vst.msk [vmem:[%s433 + $0x30] sm:$0xff] %vm467, %v4975
      %5008 = vst.msk [vmem:[%s433 + $0x38] sm:$0xff] %vm467, %v4976
      %5009 = vst.msk [vmem:[%s433 + $0x40] sm:$0xff] %vm467, %v4977
      %5010 = vst.msk [vmem:[%s433 + $0x48] sm:$0xff] %vm467, %v4978
      %5011 = vst.msk [vmem:[%s433 + $0x50] sm:$0xff] %vm467, %v4979
      %5012 = vst.msk [vmem:[%s433 + $0x58] sm:$0xff] %vm467, %v4980
      %5013 = vst.msk [vmem:[%s433 + $0x60] sm:$0xff] %vm467, %v4981
      %5014 = vst.msk [vmem:[%s433 + $0x68] sm:$0xff] %vm467, %v4982
      %5015 = vst.msk [vmem:[%s433 + $0x70] sm:$0xff] %vm467, %v4983
      %5016 = vst.msk [vmem:[%s433 + $0x78] sm:$0xff] %vm467, %v4984
      %5017 = vst.msk [vmem:[%s433 + $0x80] sm:$0xff] %vm467, %v4985
      %5018 = vst.msk [vmem:[%s433 + $0x88] sm:$0xff] %vm467, %v4986
      %5019 = vst.msk [vmem:[%s433 + $0x90] sm:$0xff] %vm467, %v4987
      %5020 = vst.msk [vmem:[%s433 + $0x98] sm:$0xff] %vm467, %v4988
      %5021 = vst.msk [vmem:[%s433 + $0xa0] sm:$0xff] %vm467, %v4989
      %5022 = vst.msk [vmem:[%s433 + $0xa8] sm:$0xff] %vm467, %v4990
      %5023 = vst.msk [vmem:[%s433 + $0xb0] sm:$0xff] %vm467, %v4991
      %5024 = vst.msk [vmem:[%s433 + $0xb8] sm:$0xff] %vm467, %v4992
      %5025 = vst.msk [vmem:[%s433 + $0xc0] sm:$0xff] %vm467, %v4993
      %5026 = vst.msk [vmem:[%s433 + $0xc8] sm:$0xff] %vm467, %v4994
      %5027 = vst.msk [vmem:[%s433 + $0xd0] sm:$0xff] %vm467, %v4995
      %5028 = vst.msk [vmem:[%s433 + $0xd8] sm:$0xff] %vm467, %v4996
      %5029 = vst.msk [vmem:[%s433 + $0xe0] sm:$0xff] %vm467, %v4997
      %5030 = vst.msk [vmem:[%s433 + $0xe8] sm:$0xff] %vm467, %v4998
      %5031 = vst.msk [vmem:[%s433 + $0xf0] sm:$0xff] %vm467, %v4999
      %5032 = vst.msk [vmem:[%s433 + $0xf8] sm:$0xff] %vm467, %v5000
      %p5033 = scmp.lt.s32.totalorder %s23, 1
      %s5034 = scalar_select %p5033, %s23, 1
      %s5035 = smul.addr %s5034, 32
      %s5036 = smul.addr %s5035, 8
      %s5037 = scalar_lea.vmem %s12, %s5036
      // Predicated region
      $region69: #{tpu_custom_call.1} parent=67 // pred_check
        %p5038 = pneg %p303
      $region70: #{tpu_custom_call.1} parent=67 // pred_check_branch
        %5040 = sbr.rel (%p5038) target = $region72
      $region71: #{tpu_custom_call.1} parent=67 // pred_region
        _
      $region72: #{tpu_custom_call.1} parent=67 // pred_fallthru
        _
    $region68: #{tpu_custom_call.1} parent=5 // pred_fallthru
      _
    %p5041 = scmp.le.s32.totalorder 2, %s18
    // Predicated region
    $region73: #{tpu_custom_call.1} parent=5 // pred_check
      %p5042 = pneg %p5041
    $region74: #{tpu_custom_call.1} parent=5 // pred_check_branch
      %5044 = sbr.rel (%p5042) target = $region76
    $region75: #{tpu_custom_call.1} parent=5 // pred_region
      %s5045 = ssub.s32 %s18, 2
      // Predicated region
      $region77: #{tpu_custom_call.1} parent=75 // pred_check
        %p5046 = pneg %p309
      $region78: #{tpu_custom_call.1} parent=75 // pred_check_branch
        %5048 = sbr.rel (%p5046) target = $region80
      $region79: #{tpu_custom_call.1} parent=75 // pred_region
        %p5049 = scmp.lt.s32.totalorder %s24, 1
        %s5050 = scalar_select %p5049, %s24, 1
        %s5051 = smul.addr %s5050, 32
        %s5052 = smul.addr %s5051, 8
        %s5053 = scalar_lea.vmem %s12, %s5052
      $region80: #{tpu_custom_call.1} parent=75 // pred_fallthru
        _
    $region76: #{tpu_custom_call.1} parent=5 // pred_fallthru
      _
  $region6: #{tpu_custom_call.1} parent=0 // loop_footer
    %s22 = sadd.s32 1, %s18
  $region7: #{tpu_custom_call.1} parent=0 // loop_footer_branch
    %17 = sbr.rel target = $region3
  $region8: #{tpu_custom_call.1} parent=0 // loop_exit
    _

</llo_original>
